<compile_context>
chip_gen: v6e
topology: v6e:2x2x1
jax: 0.10.0
libtpu: 0.0.40
codegen_flags: <defaults>
</compile_context>

<pallas_src>
import jax
import jax.numpy as jnp
from jax import lax
from jax.experimental import pallas as pl
from jax.experimental.pallas import tpu as pltpu

NEG = -1e30   # finite stand-in for -inf (avoids inf-inf NaNs in logsumexp)
NB = 8        # samples per grid step (= f32 sublane count)


def _ctc_kernel(logits_ref,    # (T, NB, C)   VMEM
                ext_ref,       # (NB, Lpad)   VMEM, extended label sequence
                in_len_ref,    # (NB, 1)      VMEM, input lengths
                tgt_len_ref,   # (NB, 1)      VMEM, target lengths
                out_ref,       # (NB, 1)      VMEM, per-sample loss
                logp_ext_ref): # (T, NB, Lpad) scratch
    T, Nb, C = logits_ref.shape
    Lpad = ext_ref.shape[1]

    # ---- log_softmax over classes (last dim), all T x NB rows at once ----
    x = logits_ref[...].astype(jnp.float32)                     # (T, NB, C)
    m = jnp.max(x, axis=-1, keepdims=True)
    lse = m + jnp.log(jnp.sum(jnp.exp(x - m), axis=-1, keepdims=True))
    logp = x - lse                                              # (T, NB, C)

    ext = ext_ref[...]                                          # (NB, Lpad) i32

    # ---- gather per-extended-label emissions (VPU compare/select gather) ----
    # logp_ext[t, b, l] = logp[t, b, ext[b, l]]
    acc = jnp.zeros((T, Nb, Lpad), jnp.float32)
    for c in range(C):                                          # static, C small
        sel = (ext == c).astype(jnp.float32)[None]              # (1, NB, Lpad)
        acc = acc + sel * logp[:, :, c:c + 1]                   # lane-broadcast
    logp_ext_ref[...] = acc

    # ---- loop-invariant masks / per-sample lengths (hoisted) ----
    lane = lax.broadcasted_iota(jnp.int32, (Nb, Lpad), 1)       # (NB, Lpad)
    ext_m2 = pltpu.roll(ext, shift=2, axis=1)
    # skip (l-2 -> l) allowed when ext[l] != blank and ext[l] != ext[l-2]
    skip_ok = (ext != 0) & (ext != ext_m2) & (lane >= 2)
    mask1 = lane >= 1

    in_len = in_len_ref[...]                                    # (NB, 1) i32
    tgt_len = tgt_len_ref[...]                                  # (NB, 1) i32

    # ---- alpha recursion (forward DP), vectorized over the NB samples ----
    emit0 = logp_ext_ref[0]                                     # (NB, Lpad)
    alpha0 = jnp.where(lane <= 1, emit0, NEG)

    def body(t, alpha):
        a0 = alpha
        a1 = jnp.where(mask1, pltpu.roll(alpha, shift=1, axis=1), NEG)
        a2 = jnp.where(skip_ok, pltpu.roll(alpha, shift=2, axis=1), NEG)
        mx = jnp.maximum(jnp.maximum(a0, a1), a2)
        s = jnp.exp(a0 - mx) + jnp.exp(a1 - mx) + jnp.exp(a2 - mx)
        emit = logp_ext_ref[t]                                  # (NB, Lpad)
        new_alpha = emit + mx + jnp.log(s)
        # freeze alpha once a sample's input length is exhausted
        return jnp.where(t < in_len, new_alpha, alpha)

    alpha = lax.fori_loop(1, T, body, alpha0, unroll=True)

    # ---- readout: -logsumexp(alpha[L-1], alpha[L-2]),  L = 2*target_len+1 ----
    L = 2 * tgt_len + 1                                         # (NB, 1)
    read_mask = (lane == (L - 1)) | (lane == (L - 2))           # (NB, Lpad)
    vals = jnp.where(read_mask, alpha, NEG)
    mx = jnp.max(vals, axis=1, keepdims=True)                   # (NB, 1)
    nll = -(mx + jnp.log(jnp.sum(jnp.exp(vals - mx), axis=1, keepdims=True)))

    # zero_infinity=True: infinite loss -> 0; 'mean' reduction divides by tl
    tl_f = jnp.maximum(tgt_len, 1).astype(jnp.float32)
    loss = jnp.where(nll > 1e29, 0.0, nll) / tl_f
    out_ref[...] = loss                                         # (NB, 1)


@jax.jit
def _ctc_per_sample(logits_tnc, ext, in_len, tgt_len):
    T, N_pad, C = logits_tnc.shape
    Lpad = ext.shape[1]
    grid = (N_pad // NB,)
    return pl.pallas_call(
        _ctc_kernel,
        out_shape=jax.ShapeDtypeStruct((N_pad, 1), jnp.float32),
        grid=grid,
        in_specs=[
            pl.BlockSpec((T, NB, C), lambda g: (0, g, 0)),   # no HBM transpose
            pl.BlockSpec((NB, Lpad), lambda g: (g, 0)),
            pl.BlockSpec((NB, 1), lambda g: (g, 0)),
            pl.BlockSpec((NB, 1), lambda g: (g, 0)),
        ],
        out_specs=pl.BlockSpec((NB, 1), lambda g: (g, 0)),
        scratch_shapes=[pltpu.VMEM((T, NB, Lpad), jnp.float32)],
        compiler_params=pltpu.CompilerParams(
            dimension_semantics=("parallel",)),   # batch axis is independent
    )(logits_tnc, ext, in_len, tgt_len)


def recognition_loss(gt, pred):
    """Mirrors RecognitionLoss.forward:
       gt = (targets (N, S) int, target_lengths (N,) int)
       pred = (logits (T, N, C) float, input_lengths (N,) int)"""
    targets, target_lengths = gt
    logits_tnc, input_lengths = pred

    T, N, C = logits_tnc.shape
    S = targets.shape[1]
    L_ext = 2 * S + 1
    Lpad = ((L_ext + 127) // 128) * 128
    N_pad = ((N + NB - 1) // NB) * NB

    # pad batch to a multiple of NB (padded samples: zero logits, blank
    # labels, zero lengths; they are sliced off before the mean)
    logits_p = jnp.pad(logits_tnc, ((0, 0), (0, N_pad - N), (0, 0)))

    # extended label sequence: blank, t0, blank, t1, ..., blank (pad w/ blank)
    ext = jnp.zeros((N_pad, Lpad), jnp.int32)
    ext = ext.at[:N, 1:2 * S:2].set(targets.astype(jnp.int32))

    in_len = jnp.zeros((N_pad, 1), jnp.int32).at[:N, 0].set(
        input_lengths.astype(jnp.int32))
    tgt_len = jnp.zeros((N_pad, 1), jnp.int32).at[:N, 0].set(
        target_lengths.astype(jnp.int32))

    per_sample = _ctc_per_sample(logits_p, ext, in_len, tgt_len)  # (N_pad, 1)
    loss = jnp.mean(per_sample[:N, 0])
    return loss


if __name__ == "__main__":
    key = jax.random.PRNGKey(0)
    k1, k2 = jax.random.split(key)

    T, N, C, S = 16, 2, 32, 5   # seq len, batch, classes (incl. blank=0), max target len
    logits = jax.random.normal(k1, (T, N, C), dtype=jnp.float32)
    targets = jax.random.randint(k2, (N, S), 1, C, dtype=jnp.int32)  # labels in [1, C-1]
    target_lengths = jnp.array([5, 3], dtype=jnp.int32)
    input_lengths = jnp.array([16, 14], dtype=jnp.int32)

    loss = recognition_loss((targets, target_lengths), (logits, input_lengths))
    loss = jax.block_until_ready(loss)

    if bool(jnp.isnan(loss)):
        raise RuntimeError()
    print("KERNEL_OK")
</pallas_src>

<mosaic_0001>
module attributes {stable_mosaic.version = 11 : i64} {
  func.func @_ctc_kernel(%arg0: i32, %arg1: memref<16x8x32xf32, #tpu.memory_space<vmem>>, %arg2: memref<8x128xi32, #tpu.memory_space<vmem>>, %arg3: memref<8x1xi32, #tpu.memory_space<vmem>>, %arg4: memref<8x1xi32, #tpu.memory_space<vmem>>, %arg5: memref<8x1xf32, #tpu.memory_space<vmem>>, %arg6: memref<16x8x128xf32, #tpu.memory_space<vmem>>) attributes {dimension_semantics = [#tpu.dimension_semantics<parallel>], iteration_bounds = array<i64: 1>, scalar_prefetch = 0 : i64, scratch_operands = 1 : i64, tpu.core_type = #tpu.core_type<tc>, window_params = [{transform_indices = @transform_0, window_bounds = array<i64: 16, 8, 32>}, {transform_indices = @transform_1, window_bounds = array<i64: 8, 128>}, {transform_indices = @transform_2, window_bounds = array<i64: 8, 1>}, {transform_indices = @transform_3, window_bounds = array<i64: 8, 1>}, {transform_indices = @transform_4, window_bounds = array<i64: 8, 1>}]} {
    %c0 = arith.constant 0 : index
    %c0_0 = arith.constant 0 : index
    %c0_1 = arith.constant 0 : index
    %0 = vector.load %arg1[%c0, %c0_0, %c0_1] : memref<16x8x32xf32, #tpu.memory_space<vmem>>, vector<16x8x32xf32>
    %cst = arith.constant dense<0xFF800000> : vector<16x8xf32>
    %1 = vector.multi_reduction <maximumf>, %0, %cst [2] : vector<16x8x32xf32> to vector<16x8xf32>
    %2 = vector.shape_cast %1 : vector<16x8xf32> to vector<16x8x1xf32>
    %3 = vector.broadcast %2 : vector<16x8x1xf32> to vector<16x8x32xf32>
    %4 = arith.subf %0, %3 : vector<16x8x32xf32>
    %5 = math.exp %4 : vector<16x8x32xf32>
    %cst_2 = arith.constant dense<0.000000e+00> : vector<16x8xf32>
    %6 = vector.multi_reduction <add>, %5, %cst_2 [2] : vector<16x8x32xf32> to vector<16x8xf32>
    %7 = vector.shape_cast %6 : vector<16x8xf32> to vector<16x8x1xf32>
    %8 = math.log %7 : vector<16x8x1xf32>
    %9 = arith.addf %2, %8 : vector<16x8x1xf32>
    %10 = vector.broadcast %9 : vector<16x8x1xf32> to vector<16x8x32xf32>
    %11 = arith.subf %0, %10 : vector<16x8x32xf32>
    %c0_3 = arith.constant 0 : index
    %c0_4 = arith.constant 0 : index
    %12 = vector.load %arg2[%c0_3, %c0_4] : memref<8x128xi32, #tpu.memory_space<vmem>>, vector<8x128xi32>
    %cst_5 = arith.constant 0.000000e+00 : f32
    %13 = vector.broadcast %cst_5 : f32 to vector<16x8x128xf32>
    %c0_i32 = arith.constant 0 : i32
    %14 = vector.broadcast %c0_i32 : i32 to vector<8x128xi32>
    %15 = arith.cmpi eq, %12, %14 : vector<8x128xi32>
    %16 = arith.extui %15 : vector<8x128xi1> to vector<8x128xi32>
    %17 = arith.sitofp %16 : vector<8x128xi32> to vector<8x128xf32>
    %18 = vector.shape_cast %17 : vector<8x128xf32> to vector<1x8x128xf32>
    %19 = vector.extract_strided_slice %11 {offsets = [0, 0, 0], sizes = [16, 8, 1], strides = [1, 1, 1]} : vector<16x8x32xf32> to vector<16x8x1xf32>
    %20 = vector.broadcast %18 : vector<1x8x128xf32> to vector<16x8x128xf32>
    %21 = vector.broadcast %19 : vector<16x8x1xf32> to vector<16x8x128xf32>
    %22 = arith.mulf %20, %21 : vector<16x8x128xf32>
    %23 = arith.addf %13, %22 : vector<16x8x128xf32>
    %c1_i32 = arith.constant 1 : i32
    %24 = vector.broadcast %c1_i32 : i32 to vector<8x128xi32>
    %25 = arith.cmpi eq, %12, %24 : vector<8x128xi32>
    %26 = arith.extui %25 : vector<8x128xi1> to vector<8x128xi32>
    %27 = arith.sitofp %26 : vector<8x128xi32> to vector<8x128xf32>
    %28 = vector.shape_cast %27 : vector<8x128xf32> to vector<1x8x128xf32>
    %29 = vector.extract_strided_slice %11 {offsets = [0, 0, 1], sizes = [16, 8, 1], strides = [1, 1, 1]} : vector<16x8x32xf32> to vector<16x8x1xf32>
    %30 = vector.broadcast %28 : vector<1x8x128xf32> to vector<16x8x128xf32>
    %31 = vector.broadcast %29 : vector<16x8x1xf32> to vector<16x8x128xf32>
    %32 = arith.mulf %30, %31 : vector<16x8x128xf32>
    %33 = arith.addf %23, %32 : vector<16x8x128xf32>
    %c2_i32 = arith.constant 2 : i32
    %34 = vector.broadcast %c2_i32 : i32 to vector<8x128xi32>
    %35 = arith.cmpi eq, %12, %34 : vector<8x128xi32>
    %36 = arith.extui %35 : vector<8x128xi1> to vector<8x128xi32>
    %37 = arith.sitofp %36 : vector<8x128xi32> to vector<8x128xf32>
    %38 = vector.shape_cast %37 : vector<8x128xf32> to vector<1x8x128xf32>
    %39 = vector.extract_strided_slice %11 {offsets = [0, 0, 2], sizes = [16, 8, 1], strides = [1, 1, 1]} : vector<16x8x32xf32> to vector<16x8x1xf32>
    %40 = vector.broadcast %38 : vector<1x8x128xf32> to vector<16x8x128xf32>
    %41 = vector.broadcast %39 : vector<16x8x1xf32> to vector<16x8x128xf32>
    %42 = arith.mulf %40, %41 : vector<16x8x128xf32>
    %43 = arith.addf %33, %42 : vector<16x8x128xf32>
    %c3_i32 = arith.constant 3 : i32
    %44 = vector.broadcast %c3_i32 : i32 to vector<8x128xi32>
    %45 = arith.cmpi eq, %12, %44 : vector<8x128xi32>
    %46 = arith.extui %45 : vector<8x128xi1> to vector<8x128xi32>
    %47 = arith.sitofp %46 : vector<8x128xi32> to vector<8x128xf32>
    %48 = vector.shape_cast %47 : vector<8x128xf32> to vector<1x8x128xf32>
    %49 = vector.extract_strided_slice %11 {offsets = [0, 0, 3], sizes = [16, 8, 1], strides = [1, 1, 1]} : vector<16x8x32xf32> to vector<16x8x1xf32>
    %50 = vector.broadcast %48 : vector<1x8x128xf32> to vector<16x8x128xf32>
    %51 = vector.broadcast %49 : vector<16x8x1xf32> to vector<16x8x128xf32>
    %52 = arith.mulf %50, %51 : vector<16x8x128xf32>
    %53 = arith.addf %43, %52 : vector<16x8x128xf32>
    %c4_i32 = arith.constant 4 : i32
    %54 = vector.broadcast %c4_i32 : i32 to vector<8x128xi32>
    %55 = arith.cmpi eq, %12, %54 : vector<8x128xi32>
    %56 = arith.extui %55 : vector<8x128xi1> to vector<8x128xi32>
    %57 = arith.sitofp %56 : vector<8x128xi32> to vector<8x128xf32>
    %58 = vector.shape_cast %57 : vector<8x128xf32> to vector<1x8x128xf32>
    %59 = vector.extract_strided_slice %11 {offsets = [0, 0, 4], sizes = [16, 8, 1], strides = [1, 1, 1]} : vector<16x8x32xf32> to vector<16x8x1xf32>
    %60 = vector.broadcast %58 : vector<1x8x128xf32> to vector<16x8x128xf32>
    %61 = vector.broadcast %59 : vector<16x8x1xf32> to vector<16x8x128xf32>
    %62 = arith.mulf %60, %61 : vector<16x8x128xf32>
    %63 = arith.addf %53, %62 : vector<16x8x128xf32>
    %c5_i32 = arith.constant 5 : i32
    %64 = vector.broadcast %c5_i32 : i32 to vector<8x128xi32>
    %65 = arith.cmpi eq, %12, %64 : vector<8x128xi32>
    %66 = arith.extui %65 : vector<8x128xi1> to vector<8x128xi32>
    %67 = arith.sitofp %66 : vector<8x128xi32> to vector<8x128xf32>
    %68 = vector.shape_cast %67 : vector<8x128xf32> to vector<1x8x128xf32>
    %69 = vector.extract_strided_slice %11 {offsets = [0, 0, 5], sizes = [16, 8, 1], strides = [1, 1, 1]} : vector<16x8x32xf32> to vector<16x8x1xf32>
    %70 = vector.broadcast %68 : vector<1x8x128xf32> to vector<16x8x128xf32>
    %71 = vector.broadcast %69 : vector<16x8x1xf32> to vector<16x8x128xf32>
    %72 = arith.mulf %70, %71 : vector<16x8x128xf32>
    %73 = arith.addf %63, %72 : vector<16x8x128xf32>
    %c6_i32 = arith.constant 6 : i32
    %74 = vector.broadcast %c6_i32 : i32 to vector<8x128xi32>
    %75 = arith.cmpi eq, %12, %74 : vector<8x128xi32>
    %76 = arith.extui %75 : vector<8x128xi1> to vector<8x128xi32>
    %77 = arith.sitofp %76 : vector<8x128xi32> to vector<8x128xf32>
    %78 = vector.shape_cast %77 : vector<8x128xf32> to vector<1x8x128xf32>
    %79 = vector.extract_strided_slice %11 {offsets = [0, 0, 6], sizes = [16, 8, 1], strides = [1, 1, 1]} : vector<16x8x32xf32> to vector<16x8x1xf32>
    %80 = vector.broadcast %78 : vector<1x8x128xf32> to vector<16x8x128xf32>
    %81 = vector.broadcast %79 : vector<16x8x1xf32> to vector<16x8x128xf32>
    %82 = arith.mulf %80, %81 : vector<16x8x128xf32>
    %83 = arith.addf %73, %82 : vector<16x8x128xf32>
    %c7_i32 = arith.constant 7 : i32
    %84 = vector.broadcast %c7_i32 : i32 to vector<8x128xi32>
    %85 = arith.cmpi eq, %12, %84 : vector<8x128xi32>
    %86 = arith.extui %85 : vector<8x128xi1> to vector<8x128xi32>
    %87 = arith.sitofp %86 : vector<8x128xi32> to vector<8x128xf32>
    %88 = vector.shape_cast %87 : vector<8x128xf32> to vector<1x8x128xf32>
    %89 = vector.extract_strided_slice %11 {offsets = [0, 0, 7], sizes = [16, 8, 1], strides = [1, 1, 1]} : vector<16x8x32xf32> to vector<16x8x1xf32>
    %90 = vector.broadcast %88 : vector<1x8x128xf32> to vector<16x8x128xf32>
    %91 = vector.broadcast %89 : vector<16x8x1xf32> to vector<16x8x128xf32>
    %92 = arith.mulf %90, %91 : vector<16x8x128xf32>
    %93 = arith.addf %83, %92 : vector<16x8x128xf32>
    %c8_i32 = arith.constant 8 : i32
    %94 = vector.broadcast %c8_i32 : i32 to vector<8x128xi32>
    %95 = arith.cmpi eq, %12, %94 : vector<8x128xi32>
    %96 = arith.extui %95 : vector<8x128xi1> to vector<8x128xi32>
    %97 = arith.sitofp %96 : vector<8x128xi32> to vector<8x128xf32>
    %98 = vector.shape_cast %97 : vector<8x128xf32> to vector<1x8x128xf32>
    %99 = vector.extract_strided_slice %11 {offsets = [0, 0, 8], sizes = [16, 8, 1], strides = [1, 1, 1]} : vector<16x8x32xf32> to vector<16x8x1xf32>
    %100 = vector.broadcast %98 : vector<1x8x128xf32> to vector<16x8x128xf32>
    %101 = vector.broadcast %99 : vector<16x8x1xf32> to vector<16x8x128xf32>
    %102 = arith.mulf %100, %101 : vector<16x8x128xf32>
    %103 = arith.addf %93, %102 : vector<16x8x128xf32>
    %c9_i32 = arith.constant 9 : i32
    %104 = vector.broadcast %c9_i32 : i32 to vector<8x128xi32>
    %105 = arith.cmpi eq, %12, %104 : vector<8x128xi32>
    %106 = arith.extui %105 : vector<8x128xi1> to vector<8x128xi32>
    %107 = arith.sitofp %106 : vector<8x128xi32> to vector<8x128xf32>
    %108 = vector.shape_cast %107 : vector<8x128xf32> to vector<1x8x128xf32>
    %109 = vector.extract_strided_slice %11 {offsets = [0, 0, 9], sizes = [16, 8, 1], strides = [1, 1, 1]} : vector<16x8x32xf32> to vector<16x8x1xf32>
    %110 = vector.broadcast %108 : vector<1x8x128xf32> to vector<16x8x128xf32>
    %111 = vector.broadcast %109 : vector<16x8x1xf32> to vector<16x8x128xf32>
    %112 = arith.mulf %110, %111 : vector<16x8x128xf32>
    %113 = arith.addf %103, %112 : vector<16x8x128xf32>
    %c10_i32 = arith.constant 10 : i32
    %114 = vector.broadcast %c10_i32 : i32 to vector<8x128xi32>
    %115 = arith.cmpi eq, %12, %114 : vector<8x128xi32>
    %116 = arith.extui %115 : vector<8x128xi1> to vector<8x128xi32>
    %117 = arith.sitofp %116 : vector<8x128xi32> to vector<8x128xf32>
    %118 = vector.shape_cast %117 : vector<8x128xf32> to vector<1x8x128xf32>
    %119 = vector.extract_strided_slice %11 {offsets = [0, 0, 10], sizes = [16, 8, 1], strides = [1, 1, 1]} : vector<16x8x32xf32> to vector<16x8x1xf32>
    %120 = vector.broadcast %118 : vector<1x8x128xf32> to vector<16x8x128xf32>
    %121 = vector.broadcast %119 : vector<16x8x1xf32> to vector<16x8x128xf32>
    %122 = arith.mulf %120, %121 : vector<16x8x128xf32>
    %123 = arith.addf %113, %122 : vector<16x8x128xf32>
    %c11_i32 = arith.constant 11 : i32
    %124 = vector.broadcast %c11_i32 : i32 to vector<8x128xi32>
    %125 = arith.cmpi eq, %12, %124 : vector<8x128xi32>
    %126 = arith.extui %125 : vector<8x128xi1> to vector<8x128xi32>
    %127 = arith.sitofp %126 : vector<8x128xi32> to vector<8x128xf32>
    %128 = vector.shape_cast %127 : vector<8x128xf32> to vector<1x8x128xf32>
    %129 = vector.extract_strided_slice %11 {offsets = [0, 0, 11], sizes = [16, 8, 1], strides = [1, 1, 1]} : vector<16x8x32xf32> to vector<16x8x1xf32>
    %130 = vector.broadcast %128 : vector<1x8x128xf32> to vector<16x8x128xf32>
    %131 = vector.broadcast %129 : vector<16x8x1xf32> to vector<16x8x128xf32>
    %132 = arith.mulf %130, %131 : vector<16x8x128xf32>
    %133 = arith.addf %123, %132 : vector<16x8x128xf32>
    %c12_i32 = arith.constant 12 : i32
    %134 = vector.broadcast %c12_i32 : i32 to vector<8x128xi32>
    %135 = arith.cmpi eq, %12, %134 : vector<8x128xi32>
    %136 = arith.extui %135 : vector<8x128xi1> to vector<8x128xi32>
    %137 = arith.sitofp %136 : vector<8x128xi32> to vector<8x128xf32>
    %138 = vector.shape_cast %137 : vector<8x128xf32> to vector<1x8x128xf32>
    %139 = vector.extract_strided_slice %11 {offsets = [0, 0, 12], sizes = [16, 8, 1], strides = [1, 1, 1]} : vector<16x8x32xf32> to vector<16x8x1xf32>
    %140 = vector.broadcast %138 : vector<1x8x128xf32> to vector<16x8x128xf32>
    %141 = vector.broadcast %139 : vector<16x8x1xf32> to vector<16x8x128xf32>
    %142 = arith.mulf %140, %141 : vector<16x8x128xf32>
    %143 = arith.addf %133, %142 : vector<16x8x128xf32>
    %c13_i32 = arith.constant 13 : i32
    %144 = vector.broadcast %c13_i32 : i32 to vector<8x128xi32>
    %145 = arith.cmpi eq, %12, %144 : vector<8x128xi32>
    %146 = arith.extui %145 : vector<8x128xi1> to vector<8x128xi32>
    %147 = arith.sitofp %146 : vector<8x128xi32> to vector<8x128xf32>
    %148 = vector.shape_cast %147 : vector<8x128xf32> to vector<1x8x128xf32>
    %149 = vector.extract_strided_slice %11 {offsets = [0, 0, 13], sizes = [16, 8, 1], strides = [1, 1, 1]} : vector<16x8x32xf32> to vector<16x8x1xf32>
    %150 = vector.broadcast %148 : vector<1x8x128xf32> to vector<16x8x128xf32>
    %151 = vector.broadcast %149 : vector<16x8x1xf32> to vector<16x8x128xf32>
    %152 = arith.mulf %150, %151 : vector<16x8x128xf32>
    %153 = arith.addf %143, %152 : vector<16x8x128xf32>
    %c14_i32 = arith.constant 14 : i32
    %154 = vector.broadcast %c14_i32 : i32 to vector<8x128xi32>
    %155 = arith.cmpi eq, %12, %154 : vector<8x128xi32>
    %156 = arith.extui %155 : vector<8x128xi1> to vector<8x128xi32>
    %157 = arith.sitofp %156 : vector<8x128xi32> to vector<8x128xf32>
    %158 = vector.shape_cast %157 : vector<8x128xf32> to vector<1x8x128xf32>
    %159 = vector.extract_strided_slice %11 {offsets = [0, 0, 14], sizes = [16, 8, 1], strides = [1, 1, 1]} : vector<16x8x32xf32> to vector<16x8x1xf32>
    %160 = vector.broadcast %158 : vector<1x8x128xf32> to vector<16x8x128xf32>
    %161 = vector.broadcast %159 : vector<16x8x1xf32> to vector<16x8x128xf32>
    %162 = arith.mulf %160, %161 : vector<16x8x128xf32>
    %163 = arith.addf %153, %162 : vector<16x8x128xf32>
    %c15_i32 = arith.constant 15 : i32
    %164 = vector.broadcast %c15_i32 : i32 to vector<8x128xi32>
    %165 = arith.cmpi eq, %12, %164 : vector<8x128xi32>
    %166 = arith.extui %165 : vector<8x128xi1> to vector<8x128xi32>
    %167 = arith.sitofp %166 : vector<8x128xi32> to vector<8x128xf32>
    %168 = vector.shape_cast %167 : vector<8x128xf32> to vector<1x8x128xf32>
    %169 = vector.extract_strided_slice %11 {offsets = [0, 0, 15], sizes = [16, 8, 1], strides = [1, 1, 1]} : vector<16x8x32xf32> to vector<16x8x1xf32>
    %170 = vector.broadcast %168 : vector<1x8x128xf32> to vector<16x8x128xf32>
    %171 = vector.broadcast %169 : vector<16x8x1xf32> to vector<16x8x128xf32>
    %172 = arith.mulf %170, %171 : vector<16x8x128xf32>
    %173 = arith.addf %163, %172 : vector<16x8x128xf32>
    %c16_i32 = arith.constant 16 : i32
    %174 = vector.broadcast %c16_i32 : i32 to vector<8x128xi32>
    %175 = arith.cmpi eq, %12, %174 : vector<8x128xi32>
    %176 = arith.extui %175 : vector<8x128xi1> to vector<8x128xi32>
    %177 = arith.sitofp %176 : vector<8x128xi32> to vector<8x128xf32>
    %178 = vector.shape_cast %177 : vector<8x128xf32> to vector<1x8x128xf32>
    %179 = vector.extract_strided_slice %11 {offsets = [0, 0, 16], sizes = [16, 8, 1], strides = [1, 1, 1]} : vector<16x8x32xf32> to vector<16x8x1xf32>
    %180 = vector.broadcast %178 : vector<1x8x128xf32> to vector<16x8x128xf32>
    %181 = vector.broadcast %179 : vector<16x8x1xf32> to vector<16x8x128xf32>
    %182 = arith.mulf %180, %181 : vector<16x8x128xf32>
    %183 = arith.addf %173, %182 : vector<16x8x128xf32>
    %c17_i32 = arith.constant 17 : i32
    %184 = vector.broadcast %c17_i32 : i32 to vector<8x128xi32>
    %185 = arith.cmpi eq, %12, %184 : vector<8x128xi32>
    %186 = arith.extui %185 : vector<8x128xi1> to vector<8x128xi32>
    %187 = arith.sitofp %186 : vector<8x128xi32> to vector<8x128xf32>
    %188 = vector.shape_cast %187 : vector<8x128xf32> to vector<1x8x128xf32>
    %189 = vector.extract_strided_slice %11 {offsets = [0, 0, 17], sizes = [16, 8, 1], strides = [1, 1, 1]} : vector<16x8x32xf32> to vector<16x8x1xf32>
    %190 = vector.broadcast %188 : vector<1x8x128xf32> to vector<16x8x128xf32>
    %191 = vector.broadcast %189 : vector<16x8x1xf32> to vector<16x8x128xf32>
    %192 = arith.mulf %190, %191 : vector<16x8x128xf32>
    %193 = arith.addf %183, %192 : vector<16x8x128xf32>
    %c18_i32 = arith.constant 18 : i32
    %194 = vector.broadcast %c18_i32 : i32 to vector<8x128xi32>
    %195 = arith.cmpi eq, %12, %194 : vector<8x128xi32>
    %196 = arith.extui %195 : vector<8x128xi1> to vector<8x128xi32>
    %197 = arith.sitofp %196 : vector<8x128xi32> to vector<8x128xf32>
    %198 = vector.shape_cast %197 : vector<8x128xf32> to vector<1x8x128xf32>
    %199 = vector.extract_strided_slice %11 {offsets = [0, 0, 18], sizes = [16, 8, 1], strides = [1, 1, 1]} : vector<16x8x32xf32> to vector<16x8x1xf32>
    %200 = vector.broadcast %198 : vector<1x8x128xf32> to vector<16x8x128xf32>
    %201 = vector.broadcast %199 : vector<16x8x1xf32> to vector<16x8x128xf32>
    %202 = arith.mulf %200, %201 : vector<16x8x128xf32>
    %203 = arith.addf %193, %202 : vector<16x8x128xf32>
    %c19_i32 = arith.constant 19 : i32
    %204 = vector.broadcast %c19_i32 : i32 to vector<8x128xi32>
    %205 = arith.cmpi eq, %12, %204 : vector<8x128xi32>
    %206 = arith.extui %205 : vector<8x128xi1> to vector<8x128xi32>
    %207 = arith.sitofp %206 : vector<8x128xi32> to vector<8x128xf32>
    %208 = vector.shape_cast %207 : vector<8x128xf32> to vector<1x8x128xf32>
    %209 = vector.extract_strided_slice %11 {offsets = [0, 0, 19], sizes = [16, 8, 1], strides = [1, 1, 1]} : vector<16x8x32xf32> to vector<16x8x1xf32>
    %210 = vector.broadcast %208 : vector<1x8x128xf32> to vector<16x8x128xf32>
    %211 = vector.broadcast %209 : vector<16x8x1xf32> to vector<16x8x128xf32>
    %212 = arith.mulf %210, %211 : vector<16x8x128xf32>
    %213 = arith.addf %203, %212 : vector<16x8x128xf32>
    %c20_i32 = arith.constant 20 : i32
    %214 = vector.broadcast %c20_i32 : i32 to vector<8x128xi32>
    %215 = arith.cmpi eq, %12, %214 : vector<8x128xi32>
    %216 = arith.extui %215 : vector<8x128xi1> to vector<8x128xi32>
    %217 = arith.sitofp %216 : vector<8x128xi32> to vector<8x128xf32>
    %218 = vector.shape_cast %217 : vector<8x128xf32> to vector<1x8x128xf32>
    %219 = vector.extract_strided_slice %11 {offsets = [0, 0, 20], sizes = [16, 8, 1], strides = [1, 1, 1]} : vector<16x8x32xf32> to vector<16x8x1xf32>
    %220 = vector.broadcast %218 : vector<1x8x128xf32> to vector<16x8x128xf32>
    %221 = vector.broadcast %219 : vector<16x8x1xf32> to vector<16x8x128xf32>
    %222 = arith.mulf %220, %221 : vector<16x8x128xf32>
    %223 = arith.addf %213, %222 : vector<16x8x128xf32>
    %c21_i32 = arith.constant 21 : i32
    %224 = vector.broadcast %c21_i32 : i32 to vector<8x128xi32>
    %225 = arith.cmpi eq, %12, %224 : vector<8x128xi32>
    %226 = arith.extui %225 : vector<8x128xi1> to vector<8x128xi32>
    %227 = arith.sitofp %226 : vector<8x128xi32> to vector<8x128xf32>
    %228 = vector.shape_cast %227 : vector<8x128xf32> to vector<1x8x128xf32>
    %229 = vector.extract_strided_slice %11 {offsets = [0, 0, 21], sizes = [16, 8, 1], strides = [1, 1, 1]} : vector<16x8x32xf32> to vector<16x8x1xf32>
    %230 = vector.broadcast %228 : vector<1x8x128xf32> to vector<16x8x128xf32>
    %231 = vector.broadcast %229 : vector<16x8x1xf32> to vector<16x8x128xf32>
    %232 = arith.mulf %230, %231 : vector<16x8x128xf32>
    %233 = arith.addf %223, %232 : vector<16x8x128xf32>
    %c22_i32 = arith.constant 22 : i32
    %234 = vector.broadcast %c22_i32 : i32 to vector<8x128xi32>
    %235 = arith.cmpi eq, %12, %234 : vector<8x128xi32>
    %236 = arith.extui %235 : vector<8x128xi1> to vector<8x128xi32>
    %237 = arith.sitofp %236 : vector<8x128xi32> to vector<8x128xf32>
    %238 = vector.shape_cast %237 : vector<8x128xf32> to vector<1x8x128xf32>
    %239 = vector.extract_strided_slice %11 {offsets = [0, 0, 22], sizes = [16, 8, 1], strides = [1, 1, 1]} : vector<16x8x32xf32> to vector<16x8x1xf32>
    %240 = vector.broadcast %238 : vector<1x8x128xf32> to vector<16x8x128xf32>
    %241 = vector.broadcast %239 : vector<16x8x1xf32> to vector<16x8x128xf32>
    %242 = arith.mulf %240, %241 : vector<16x8x128xf32>
    %243 = arith.addf %233, %242 : vector<16x8x128xf32>
    %c23_i32 = arith.constant 23 : i32
    %244 = vector.broadcast %c23_i32 : i32 to vector<8x128xi32>
    %245 = arith.cmpi eq, %12, %244 : vector<8x128xi32>
    %246 = arith.extui %245 : vector<8x128xi1> to vector<8x128xi32>
    %247 = arith.sitofp %246 : vector<8x128xi32> to vector<8x128xf32>
    %248 = vector.shape_cast %247 : vector<8x128xf32> to vector<1x8x128xf32>
    %249 = vector.extract_strided_slice %11 {offsets = [0, 0, 23], sizes = [16, 8, 1], strides = [1, 1, 1]} : vector<16x8x32xf32> to vector<16x8x1xf32>
    %250 = vector.broadcast %248 : vector<1x8x128xf32> to vector<16x8x128xf32>
    %251 = vector.broadcast %249 : vector<16x8x1xf32> to vector<16x8x128xf32>
    %252 = arith.mulf %250, %251 : vector<16x8x128xf32>
    %253 = arith.addf %243, %252 : vector<16x8x128xf32>
    %c24_i32 = arith.constant 24 : i32
    %254 = vector.broadcast %c24_i32 : i32 to vector<8x128xi32>
    %255 = arith.cmpi eq, %12, %254 : vector<8x128xi32>
    %256 = arith.extui %255 : vector<8x128xi1> to vector<8x128xi32>
    %257 = arith.sitofp %256 : vector<8x128xi32> to vector<8x128xf32>
    %258 = vector.shape_cast %257 : vector<8x128xf32> to vector<1x8x128xf32>
    %259 = vector.extract_strided_slice %11 {offsets = [0, 0, 24], sizes = [16, 8, 1], strides = [1, 1, 1]} : vector<16x8x32xf32> to vector<16x8x1xf32>
    %260 = vector.broadcast %258 : vector<1x8x128xf32> to vector<16x8x128xf32>
    %261 = vector.broadcast %259 : vector<16x8x1xf32> to vector<16x8x128xf32>
    %262 = arith.mulf %260, %261 : vector<16x8x128xf32>
    %263 = arith.addf %253, %262 : vector<16x8x128xf32>
    %c25_i32 = arith.constant 25 : i32
    %264 = vector.broadcast %c25_i32 : i32 to vector<8x128xi32>
    %265 = arith.cmpi eq, %12, %264 : vector<8x128xi32>
    %266 = arith.extui %265 : vector<8x128xi1> to vector<8x128xi32>
    %267 = arith.sitofp %266 : vector<8x128xi32> to vector<8x128xf32>
    %268 = vector.shape_cast %267 : vector<8x128xf32> to vector<1x8x128xf32>
    %269 = vector.extract_strided_slice %11 {offsets = [0, 0, 25], sizes = [16, 8, 1], strides = [1, 1, 1]} : vector<16x8x32xf32> to vector<16x8x1xf32>
    %270 = vector.broadcast %268 : vector<1x8x128xf32> to vector<16x8x128xf32>
    %271 = vector.broadcast %269 : vector<16x8x1xf32> to vector<16x8x128xf32>
    %272 = arith.mulf %270, %271 : vector<16x8x128xf32>
    %273 = arith.addf %263, %272 : vector<16x8x128xf32>
    %c26_i32 = arith.constant 26 : i32
    %274 = vector.broadcast %c26_i32 : i32 to vector<8x128xi32>
    %275 = arith.cmpi eq, %12, %274 : vector<8x128xi32>
    %276 = arith.extui %275 : vector<8x128xi1> to vector<8x128xi32>
    %277 = arith.sitofp %276 : vector<8x128xi32> to vector<8x128xf32>
    %278 = vector.shape_cast %277 : vector<8x128xf32> to vector<1x8x128xf32>
    %279 = vector.extract_strided_slice %11 {offsets = [0, 0, 26], sizes = [16, 8, 1], strides = [1, 1, 1]} : vector<16x8x32xf32> to vector<16x8x1xf32>
    %280 = vector.broadcast %278 : vector<1x8x128xf32> to vector<16x8x128xf32>
    %281 = vector.broadcast %279 : vector<16x8x1xf32> to vector<16x8x128xf32>
    %282 = arith.mulf %280, %281 : vector<16x8x128xf32>
    %283 = arith.addf %273, %282 : vector<16x8x128xf32>
    %c27_i32 = arith.constant 27 : i32
    %284 = vector.broadcast %c27_i32 : i32 to vector<8x128xi32>
    %285 = arith.cmpi eq, %12, %284 : vector<8x128xi32>
    %286 = arith.extui %285 : vector<8x128xi1> to vector<8x128xi32>
    %287 = arith.sitofp %286 : vector<8x128xi32> to vector<8x128xf32>
    %288 = vector.shape_cast %287 : vector<8x128xf32> to vector<1x8x128xf32>
    %289 = vector.extract_strided_slice %11 {offsets = [0, 0, 27], sizes = [16, 8, 1], strides = [1, 1, 1]} : vector<16x8x32xf32> to vector<16x8x1xf32>
    %290 = vector.broadcast %288 : vector<1x8x128xf32> to vector<16x8x128xf32>
    %291 = vector.broadcast %289 : vector<16x8x1xf32> to vector<16x8x128xf32>
    %292 = arith.mulf %290, %291 : vector<16x8x128xf32>
    %293 = arith.addf %283, %292 : vector<16x8x128xf32>
    %c28_i32 = arith.constant 28 : i32
    %294 = vector.broadcast %c28_i32 : i32 to vector<8x128xi32>
    %295 = arith.cmpi eq, %12, %294 : vector<8x128xi32>
    %296 = arith.extui %295 : vector<8x128xi1> to vector<8x128xi32>
    %297 = arith.sitofp %296 : vector<8x128xi32> to vector<8x128xf32>
    %298 = vector.shape_cast %297 : vector<8x128xf32> to vector<1x8x128xf32>
    %299 = vector.extract_strided_slice %11 {offsets = [0, 0, 28], sizes = [16, 8, 1], strides = [1, 1, 1]} : vector<16x8x32xf32> to vector<16x8x1xf32>
    %300 = vector.broadcast %298 : vector<1x8x128xf32> to vector<16x8x128xf32>
    %301 = vector.broadcast %299 : vector<16x8x1xf32> to vector<16x8x128xf32>
    %302 = arith.mulf %300, %301 : vector<16x8x128xf32>
    %303 = arith.addf %293, %302 : vector<16x8x128xf32>
    %c29_i32 = arith.constant 29 : i32
    %304 = vector.broadcast %c29_i32 : i32 to vector<8x128xi32>
    %305 = arith.cmpi eq, %12, %304 : vector<8x128xi32>
    %306 = arith.extui %305 : vector<8x128xi1> to vector<8x128xi32>
    %307 = arith.sitofp %306 : vector<8x128xi32> to vector<8x128xf32>
    %308 = vector.shape_cast %307 : vector<8x128xf32> to vector<1x8x128xf32>
    %309 = vector.extract_strided_slice %11 {offsets = [0, 0, 29], sizes = [16, 8, 1], strides = [1, 1, 1]} : vector<16x8x32xf32> to vector<16x8x1xf32>
    %310 = vector.broadcast %308 : vector<1x8x128xf32> to vector<16x8x128xf32>
    %311 = vector.broadcast %309 : vector<16x8x1xf32> to vector<16x8x128xf32>
    %312 = arith.mulf %310, %311 : vector<16x8x128xf32>
    %313 = arith.addf %303, %312 : vector<16x8x128xf32>
    %c30_i32 = arith.constant 30 : i32
    %314 = vector.broadcast %c30_i32 : i32 to vector<8x128xi32>
    %315 = arith.cmpi eq, %12, %314 : vector<8x128xi32>
    %316 = arith.extui %315 : vector<8x128xi1> to vector<8x128xi32>
    %317 = arith.sitofp %316 : vector<8x128xi32> to vector<8x128xf32>
    %318 = vector.shape_cast %317 : vector<8x128xf32> to vector<1x8x128xf32>
    %319 = vector.extract_strided_slice %11 {offsets = [0, 0, 30], sizes = [16, 8, 1], strides = [1, 1, 1]} : vector<16x8x32xf32> to vector<16x8x1xf32>
    %320 = vector.broadcast %318 : vector<1x8x128xf32> to vector<16x8x128xf32>
    %321 = vector.broadcast %319 : vector<16x8x1xf32> to vector<16x8x128xf32>
    %322 = arith.mulf %320, %321 : vector<16x8x128xf32>
    %323 = arith.addf %313, %322 : vector<16x8x128xf32>
    %c31_i32 = arith.constant 31 : i32
    %324 = vector.broadcast %c31_i32 : i32 to vector<8x128xi32>
    %325 = arith.cmpi eq, %12, %324 : vector<8x128xi32>
    %326 = arith.extui %325 : vector<8x128xi1> to vector<8x128xi32>
    %327 = arith.sitofp %326 : vector<8x128xi32> to vector<8x128xf32>
    %328 = vector.shape_cast %327 : vector<8x128xf32> to vector<1x8x128xf32>
    %329 = vector.extract_strided_slice %11 {offsets = [0, 0, 31], sizes = [16, 8, 1], strides = [1, 1, 1]} : vector<16x8x32xf32> to vector<16x8x1xf32>
    %330 = vector.broadcast %328 : vector<1x8x128xf32> to vector<16x8x128xf32>
    %331 = vector.broadcast %329 : vector<16x8x1xf32> to vector<16x8x128xf32>
    %332 = arith.mulf %330, %331 : vector<16x8x128xf32>
    %333 = arith.addf %323, %332 : vector<16x8x128xf32>
    %c0_6 = arith.constant 0 : index
    %c0_7 = arith.constant 0 : index
    %c0_8 = arith.constant 0 : index
    %334 = vector.load %arg6[%c0_6, %c0_7, %c0_8] : memref<16x8x128xf32, #tpu.memory_space<vmem>>, vector<16x8x128xf32>
    tpu.vector_store %arg6[%c0_6, %c0_7, %c0_8], %333 {strides = array<i32>} : memref<16x8x128xf32, #tpu.memory_space<vmem>>, vector<16x8x128xf32>,
    %335 = tpu.iota {dimensions = array<i32: 1>} : vector<8x128xi32>
    %c2_i32_9 = arith.constant 2 : i32
    %336 = tpu.dynamic_rotate %12 by %c2_i32_9 dim 1 : vector<8x128xi32>, i32 -> vector<8x128xi32>
    %c0_i32_10 = arith.constant 0 : i32
    %337 = vector.broadcast %c0_i32_10 : i32 to vector<8x128xi32>
    %338 = arith.cmpi ne, %12, %337 : vector<8x128xi32>
    %339 = arith.cmpi ne, %12, %336 : vector<8x128xi32>
    %340 = arith.andi %338, %339 : vector<8x128xi1>
    %c2_i32_11 = arith.constant 2 : i32
    %341 = vector.broadcast %c2_i32_11 : i32 to vector<8x128xi32>
    %342 = arith.cmpi sge, %335, %341 : vector<8x128xi32>
    %343 = arith.andi %340, %342 : vector<8x128xi1>
    %c1_i32_12 = arith.constant 1 : i32
    %344 = vector.broadcast %c1_i32_12 : i32 to vector<8x128xi32>
    %345 = arith.cmpi sge, %335, %344 : vector<8x128xi32>
    %c0_13 = arith.constant 0 : index
    %c0_14 = arith.constant 0 : index
    %346 = vector.load %arg3[%c0_13, %c0_14] : memref<8x1xi32, #tpu.memory_space<vmem>>, vector<8x1xi32>
    %c0_15 = arith.constant 0 : index
    %c0_16 = arith.constant 0 : index
    %347 = vector.load %arg4[%c0_15, %c0_16] : memref<8x1xi32, #tpu.memory_space<vmem>>, vector<8x1xi32>
    %c0_17 = arith.constant 0 : index
    %c0_18 = arith.constant 0 : index
    %c0_19 = arith.constant 0 : index
    %348 = vector.load %arg6[%c0_17, %c0_18, %c0_19] : memref<16x8x128xf32, #tpu.memory_space<vmem>>, vector<1x8x128xf32>
    %349 = vector.shape_cast %348 : vector<1x8x128xf32> to vector<8x128xf32>
    %c1_i32_20 = arith.constant 1 : i32
    %350 = vector.broadcast %c1_i32_20 : i32 to vector<8x128xi32>
    %351 = arith.cmpi sle, %335, %350 : vector<8x128xi32>
    %cst_21 = arith.constant -1.000000e+30 : f32
    %352 = vector.broadcast %cst_21 : f32 to vector<8x128xf32>
    %353 = arith.select %351, %349, %352 : vector<8x128xi1>, vector<8x128xf32>
    %c1_i32_22 = arith.constant 1 : i32
    %c1_i32_23 = arith.constant 1 : i32
    %354 = tpu.dynamic_rotate %353 by %c1_i32_23 dim 1 : vector<8x128xf32>, i32 -> vector<8x128xf32>
    %cst_24 = arith.constant -1.000000e+30 : f32
    %355 = vector.broadcast %cst_24 : f32 to vector<8x128xf32>
    %356 = arith.select %345, %354, %355 : vector<8x128xi1>, vector<8x128xf32>
    %c2_i32_25 = arith.constant 2 : i32
    %357 = tpu.dynamic_rotate %353 by %c2_i32_25 dim 1 : vector<8x128xf32>, i32 -> vector<8x128xf32>
    %cst_26 = arith.constant -1.000000e+30 : f32
    %358 = vector.broadcast %cst_26 : f32 to vector<8x128xf32>
    %359 = arith.select %343, %357, %358 : vector<8x128xi1>, vector<8x128xf32>
    %360 = arith.maximumf %353, %356 : vector<8x128xf32>
    %361 = arith.maximumf %360, %359 : vector<8x128xf32>
    %362 = arith.subf %353, %361 : vector<8x128xf32>
    %363 = math.exp %362 : vector<8x128xf32>
    %364 = arith.subf %356, %361 : vector<8x128xf32>
    %365 = math.exp %364 : vector<8x128xf32>
    %366 = arith.addf %363, %365 : vector<8x128xf32>
    %367 = arith.subf %359, %361 : vector<8x128xf32>
    %368 = math.exp %367 : vector<8x128xf32>
    %369 = arith.addf %366, %368 : vector<8x128xf32>
    %370 = arith.index_cast %c1_i32_22 : i32 to index
    %c0_27 = arith.constant 0 : index
    %c0_28 = arith.constant 0 : index
    %371 = vector.load %arg6[%370, %c0_27, %c0_28] : memref<16x8x128xf32, #tpu.memory_space<vmem>>, vector<1x8x128xf32>
    %372 = vector.shape_cast %371 : vector<1x8x128xf32> to vector<8x128xf32>
    %373 = arith.addf %372, %361 : vector<8x128xf32>
    %374 = math.log %369 : vector<8x128xf32>
    %375 = arith.addf %373, %374 : vector<8x128xf32>
    %376 = vector.broadcast %c1_i32_22 : i32 to vector<8x1xi32>
    %377 = arith.cmpi slt, %376, %346 : vector<8x1xi32>
    %378 = vector.shape_cast %377 : vector<8x1xi1> to vector<8x1xi1>
    %379 = vector.broadcast %378 : vector<8x1xi1> to vector<8x128xi1>
    %380 = arith.select %379, %375, %353 : vector<8x128xi1>, vector<8x128xf32>
    %c2_i32_29 = arith.constant 2 : i32
    %c1_i32_30 = arith.constant 1 : i32
    %381 = tpu.dynamic_rotate %380 by %c1_i32_30 dim 1 : vector<8x128xf32>, i32 -> vector<8x128xf32>
    %cst_31 = arith.constant -1.000000e+30 : f32
    %382 = vector.broadcast %cst_31 : f32 to vector<8x128xf32>
    %383 = arith.select %345, %381, %382 : vector<8x128xi1>, vector<8x128xf32>
    %c2_i32_32 = arith.constant 2 : i32
    %384 = tpu.dynamic_rotate %380 by %c2_i32_32 dim 1 : vector<8x128xf32>, i32 -> vector<8x128xf32>
    %cst_33 = arith.constant -1.000000e+30 : f32
    %385 = vector.broadcast %cst_33 : f32 to vector<8x128xf32>
    %386 = arith.select %343, %384, %385 : vector<8x128xi1>, vector<8x128xf32>
    %387 = arith.maximumf %380, %383 : vector<8x128xf32>
    %388 = arith.maximumf %387, %386 : vector<8x128xf32>
    %389 = arith.subf %380, %388 : vector<8x128xf32>
    %390 = math.exp %389 : vector<8x128xf32>
    %391 = arith.subf %383, %388 : vector<8x128xf32>
    %392 = math.exp %391 : vector<8x128xf32>
    %393 = arith.addf %390, %392 : vector<8x128xf32>
    %394 = arith.subf %386, %388 : vector<8x128xf32>
    %395 = math.exp %394 : vector<8x128xf32>
    %396 = arith.addf %393, %395 : vector<8x128xf32>
    %397 = arith.index_cast %c2_i32_29 : i32 to index
    %c0_34 = arith.constant 0 : index
    %c0_35 = arith.constant 0 : index
    %398 = vector.load %arg6[%397, %c0_34, %c0_35] : memref<16x8x128xf32, #tpu.memory_space<vmem>>, vector<1x8x128xf32>
    %399 = vector.shape_cast %398 : vector<1x8x128xf32> to vector<8x128xf32>
    %400 = arith.addf %399, %388 : vector<8x128xf32>
    %401 = math.log %396 : vector<8x128xf32>
    %402 = arith.addf %400, %401 : vector<8x128xf32>
    %403 = vector.broadcast %c2_i32_29 : i32 to vector<8x1xi32>
    %404 = arith.cmpi slt, %403, %346 : vector<8x1xi32>
    %405 = vector.shape_cast %404 : vector<8x1xi1> to vector<8x1xi1>
    %406 = vector.broadcast %405 : vector<8x1xi1> to vector<8x128xi1>
    %407 = arith.select %406, %402, %380 : vector<8x128xi1>, vector<8x128xf32>
    %c3_i32_36 = arith.constant 3 : i32
    %c1_i32_37 = arith.constant 1 : i32
    %408 = tpu.dynamic_rotate %407 by %c1_i32_37 dim 1 : vector<8x128xf32>, i32 -> vector<8x128xf32>
    %cst_38 = arith.constant -1.000000e+30 : f32
    %409 = vector.broadcast %cst_38 : f32 to vector<8x128xf32>
    %410 = arith.select %345, %408, %409 : vector<8x128xi1>, vector<8x128xf32>
    %c2_i32_39 = arith.constant 2 : i32
    %411 = tpu.dynamic_rotate %407 by %c2_i32_39 dim 1 : vector<8x128xf32>, i32 -> vector<8x128xf32>
    %cst_40 = arith.constant -1.000000e+30 : f32
    %412 = vector.broadcast %cst_40 : f32 to vector<8x128xf32>
    %413 = arith.select %343, %411, %412 : vector<8x128xi1>, vector<8x128xf32>
    %414 = arith.maximumf %407, %410 : vector<8x128xf32>
    %415 = arith.maximumf %414, %413 : vector<8x128xf32>
    %416 = arith.subf %407, %415 : vector<8x128xf32>
    %417 = math.exp %416 : vector<8x128xf32>
    %418 = arith.subf %410, %415 : vector<8x128xf32>
    %419 = math.exp %418 : vector<8x128xf32>
    %420 = arith.addf %417, %419 : vector<8x128xf32>
    %421 = arith.subf %413, %415 : vector<8x128xf32>
    %422 = math.exp %421 : vector<8x128xf32>
    %423 = arith.addf %420, %422 : vector<8x128xf32>
    %424 = arith.index_cast %c3_i32_36 : i32 to index
    %c0_41 = arith.constant 0 : index
    %c0_42 = arith.constant 0 : index
    %425 = vector.load %arg6[%424, %c0_41, %c0_42] : memref<16x8x128xf32, #tpu.memory_space<vmem>>, vector<1x8x128xf32>
    %426 = vector.shape_cast %425 : vector<1x8x128xf32> to vector<8x128xf32>
    %427 = arith.addf %426, %415 : vector<8x128xf32>
    %428 = math.log %423 : vector<8x128xf32>
    %429 = arith.addf %427, %428 : vector<8x128xf32>
    %430 = vector.broadcast %c3_i32_36 : i32 to vector<8x1xi32>
    %431 = arith.cmpi slt, %430, %346 : vector<8x1xi32>
    %432 = vector.shape_cast %431 : vector<8x1xi1> to vector<8x1xi1>
    %433 = vector.broadcast %432 : vector<8x1xi1> to vector<8x128xi1>
    %434 = arith.select %433, %429, %407 : vector<8x128xi1>, vector<8x128xf32>
    %c4_i32_43 = arith.constant 4 : i32
    %c1_i32_44 = arith.constant 1 : i32
    %435 = tpu.dynamic_rotate %434 by %c1_i32_44 dim 1 : vector<8x128xf32>, i32 -> vector<8x128xf32>
    %cst_45 = arith.constant -1.000000e+30 : f32
    %436 = vector.broadcast %cst_45 : f32 to vector<8x128xf32>
    %437 = arith.select %345, %435, %436 : vector<8x128xi1>, vector<8x128xf32>
    %c2_i32_46 = arith.constant 2 : i32
    %438 = tpu.dynamic_rotate %434 by %c2_i32_46 dim 1 : vector<8x128xf32>, i32 -> vector<8x128xf32>
    %cst_47 = arith.constant -1.000000e+30 : f32
    %439 = vector.broadcast %cst_47 : f32 to vector<8x128xf32>
    %440 = arith.select %343, %438, %439 : vector<8x128xi1>, vector<8x128xf32>
    %441 = arith.maximumf %434, %437 : vector<8x128xf32>
    %442 = arith.maximumf %441, %440 : vector<8x128xf32>
    %443 = arith.subf %434, %442 : vector<8x128xf32>
    %444 = math.exp %443 : vector<8x128xf32>
    %445 = arith.subf %437, %442 : vector<8x128xf32>
    %446 = math.exp %445 : vector<8x128xf32>
    %447 = arith.addf %444, %446 : vector<8x128xf32>
    %448 = arith.subf %440, %442 : vector<8x128xf32>
    %449 = math.exp %448 : vector<8x128xf32>
    %450 = arith.addf %447, %449 : vector<8x128xf32>
    %451 = arith.index_cast %c4_i32_43 : i32 to index
    %c0_48 = arith.constant 0 : index
    %c0_49 = arith.constant 0 : index
    %452 = vector.load %arg6[%451, %c0_48, %c0_49] : memref<16x8x128xf32, #tpu.memory_space<vmem>>, vector<1x8x128xf32>
    %453 = vector.shape_cast %452 : vector<1x8x128xf32> to vector<8x128xf32>
    %454 = arith.addf %453, %442 : vector<8x128xf32>
    %455 = math.log %450 : vector<8x128xf32>
    %456 = arith.addf %454, %455 : vector<8x128xf32>
    %457 = vector.broadcast %c4_i32_43 : i32 to vector<8x1xi32>
    %458 = arith.cmpi slt, %457, %346 : vector<8x1xi32>
    %459 = vector.shape_cast %458 : vector<8x1xi1> to vector<8x1xi1>
    %460 = vector.broadcast %459 : vector<8x1xi1> to vector<8x128xi1>
    %461 = arith.select %460, %456, %434 : vector<8x128xi1>, vector<8x128xf32>
    %c5_i32_50 = arith.constant 5 : i32
    %c1_i32_51 = arith.constant 1 : i32
    %462 = tpu.dynamic_rotate %461 by %c1_i32_51 dim 1 : vector<8x128xf32>, i32 -> vector<8x128xf32>
    %cst_52 = arith.constant -1.000000e+30 : f32
    %463 = vector.broadcast %cst_52 : f32 to vector<8x128xf32>
    %464 = arith.select %345, %462, %463 : vector<8x128xi1>, vector<8x128xf32>
    %c2_i32_53 = arith.constant 2 : i32
    %465 = tpu.dynamic_rotate %461 by %c2_i32_53 dim 1 : vector<8x128xf32>, i32 -> vector<8x128xf32>
    %cst_54 = arith.constant -1.000000e+30 : f32
    %466 = vector.broadcast %cst_54 : f32 to vector<8x128xf32>
    %467 = arith.select %343, %465, %466 : vector<8x128xi1>, vector<8x128xf32>
    %468 = arith.maximumf %461, %464 : vector<8x128xf32>
    %469 = arith.maximumf %468, %467 : vector<8x128xf32>
    %470 = arith.subf %461, %469 : vector<8x128xf32>
    %471 = math.exp %470 : vector<8x128xf32>
    %472 = arith.subf %464, %469 : vector<8x128xf32>
    %473 = math.exp %472 : vector<8x128xf32>
    %474 = arith.addf %471, %473 : vector<8x128xf32>
    %475 = arith.subf %467, %469 : vector<8x128xf32>
    %476 = math.exp %475 : vector<8x128xf32>
    %477 = arith.addf %474, %476 : vector<8x128xf32>
    %478 = arith.index_cast %c5_i32_50 : i32 to index
    %c0_55 = arith.constant 0 : index
    %c0_56 = arith.constant 0 : index
    %479 = vector.load %arg6[%478, %c0_55, %c0_56] : memref<16x8x128xf32, #tpu.memory_space<vmem>>, vector<1x8x128xf32>
    %480 = vector.shape_cast %479 : vector<1x8x128xf32> to vector<8x128xf32>
    %481 = arith.addf %480, %469 : vector<8x128xf32>
    %482 = math.log %477 : vector<8x128xf32>
    %483 = arith.addf %481, %482 : vector<8x128xf32>
    %484 = vector.broadcast %c5_i32_50 : i32 to vector<8x1xi32>
    %485 = arith.cmpi slt, %484, %346 : vector<8x1xi32>
    %486 = vector.shape_cast %485 : vector<8x1xi1> to vector<8x1xi1>
    %487 = vector.broadcast %486 : vector<8x1xi1> to vector<8x128xi1>
    %488 = arith.select %487, %483, %461 : vector<8x128xi1>, vector<8x128xf32>
    %c6_i32_57 = arith.constant 6 : i32
    %c1_i32_58 = arith.constant 1 : i32
    %489 = tpu.dynamic_rotate %488 by %c1_i32_58 dim 1 : vector<8x128xf32>, i32 -> vector<8x128xf32>
    %cst_59 = arith.constant -1.000000e+30 : f32
    %490 = vector.broadcast %cst_59 : f32 to vector<8x128xf32>
    %491 = arith.select %345, %489, %490 : vector<8x128xi1>, vector<8x128xf32>
    %c2_i32_60 = arith.constant 2 : i32
    %492 = tpu.dynamic_rotate %488 by %c2_i32_60 dim 1 : vector<8x128xf32>, i32 -> vector<8x128xf32>
    %cst_61 = arith.constant -1.000000e+30 : f32
    %493 = vector.broadcast %cst_61 : f32 to vector<8x128xf32>
    %494 = arith.select %343, %492, %493 : vector<8x128xi1>, vector<8x128xf32>
    %495 = arith.maximumf %488, %491 : vector<8x128xf32>
    %496 = arith.maximumf %495, %494 : vector<8x128xf32>
    %497 = arith.subf %488, %496 : vector<8x128xf32>
    %498 = math.exp %497 : vector<8x128xf32>
    %499 = arith.subf %491, %496 : vector<8x128xf32>
    %500 = math.exp %499 : vector<8x128xf32>
    %501 = arith.addf %498, %500 : vector<8x128xf32>
    %502 = arith.subf %494, %496 : vector<8x128xf32>
    %503 = math.exp %502 : vector<8x128xf32>
    %504 = arith.addf %501, %503 : vector<8x128xf32>
    %505 = arith.index_cast %c6_i32_57 : i32 to index
    %c0_62 = arith.constant 0 : index
    %c0_63 = arith.constant 0 : index
    %506 = vector.load %arg6[%505, %c0_62, %c0_63] : memref<16x8x128xf32, #tpu.memory_space<vmem>>, vector<1x8x128xf32>
    %507 = vector.shape_cast %506 : vector<1x8x128xf32> to vector<8x128xf32>
    %508 = arith.addf %507, %496 : vector<8x128xf32>
    %509 = math.log %504 : vector<8x128xf32>
    %510 = arith.addf %508, %509 : vector<8x128xf32>
    %511 = vector.broadcast %c6_i32_57 : i32 to vector<8x1xi32>
    %512 = arith.cmpi slt, %511, %346 : vector<8x1xi32>
    %513 = vector.shape_cast %512 : vector<8x1xi1> to vector<8x1xi1>
    %514 = vector.broadcast %513 : vector<8x1xi1> to vector<8x128xi1>
    %515 = arith.select %514, %510, %488 : vector<8x128xi1>, vector<8x128xf32>
    %c7_i32_64 = arith.constant 7 : i32
    %c1_i32_65 = arith.constant 1 : i32
    %516 = tpu.dynamic_rotate %515 by %c1_i32_65 dim 1 : vector<8x128xf32>, i32 -> vector<8x128xf32>
    %cst_66 = arith.constant -1.000000e+30 : f32
    %517 = vector.broadcast %cst_66 : f32 to vector<8x128xf32>
    %518 = arith.select %345, %516, %517 : vector<8x128xi1>, vector<8x128xf32>
    %c2_i32_67 = arith.constant 2 : i32
    %519 = tpu.dynamic_rotate %515 by %c2_i32_67 dim 1 : vector<8x128xf32>, i32 -> vector<8x128xf32>
    %cst_68 = arith.constant -1.000000e+30 : f32
    %520 = vector.broadcast %cst_68 : f32 to vector<8x128xf32>
    %521 = arith.select %343, %519, %520 : vector<8x128xi1>, vector<8x128xf32>
    %522 = arith.maximumf %515, %518 : vector<8x128xf32>
    %523 = arith.maximumf %522, %521 : vector<8x128xf32>
    %524 = arith.subf %515, %523 : vector<8x128xf32>
    %525 = math.exp %524 : vector<8x128xf32>
    %526 = arith.subf %518, %523 : vector<8x128xf32>
    %527 = math.exp %526 : vector<8x128xf32>
    %528 = arith.addf %525, %527 : vector<8x128xf32>
    %529 = arith.subf %521, %523 : vector<8x128xf32>
    %530 = math.exp %529 : vector<8x128xf32>
    %531 = arith.addf %528, %530 : vector<8x128xf32>
    %532 = arith.index_cast %c7_i32_64 : i32 to index
    %c0_69 = arith.constant 0 : index
    %c0_70 = arith.constant 0 : index
    %533 = vector.load %arg6[%532, %c0_69, %c0_70] : memref<16x8x128xf32, #tpu.memory_space<vmem>>, vector<1x8x128xf32>
    %534 = vector.shape_cast %533 : vector<1x8x128xf32> to vector<8x128xf32>
    %535 = arith.addf %534, %523 : vector<8x128xf32>
    %536 = math.log %531 : vector<8x128xf32>
    %537 = arith.addf %535, %536 : vector<8x128xf32>
    %538 = vector.broadcast %c7_i32_64 : i32 to vector<8x1xi32>
    %539 = arith.cmpi slt, %538, %346 : vector<8x1xi32>
    %540 = vector.shape_cast %539 : vector<8x1xi1> to vector<8x1xi1>
    %541 = vector.broadcast %540 : vector<8x1xi1> to vector<8x128xi1>
    %542 = arith.select %541, %537, %515 : vector<8x128xi1>, vector<8x128xf32>
    %c8_i32_71 = arith.constant 8 : i32
    %c1_i32_72 = arith.constant 1 : i32
    %543 = tpu.dynamic_rotate %542 by %c1_i32_72 dim 1 : vector<8x128xf32>, i32 -> vector<8x128xf32>
    %cst_73 = arith.constant -1.000000e+30 : f32
    %544 = vector.broadcast %cst_73 : f32 to vector<8x128xf32>
    %545 = arith.select %345, %543, %544 : vector<8x128xi1>, vector<8x128xf32>
    %c2_i32_74 = arith.constant 2 : i32
    %546 = tpu.dynamic_rotate %542 by %c2_i32_74 dim 1 : vector<8x128xf32>, i32 -> vector<8x128xf32>
    %cst_75 = arith.constant -1.000000e+30 : f32
    %547 = vector.broadcast %cst_75 : f32 to vector<8x128xf32>
    %548 = arith.select %343, %546, %547 : vector<8x128xi1>, vector<8x128xf32>
    %549 = arith.maximumf %542, %545 : vector<8x128xf32>
    %550 = arith.maximumf %549, %548 : vector<8x128xf32>
    %551 = arith.subf %542, %550 : vector<8x128xf32>
    %552 = math.exp %551 : vector<8x128xf32>
    %553 = arith.subf %545, %550 : vector<8x128xf32>
    %554 = math.exp %553 : vector<8x128xf32>
    %555 = arith.addf %552, %554 : vector<8x128xf32>
    %556 = arith.subf %548, %550 : vector<8x128xf32>
    %557 = math.exp %556 : vector<8x128xf32>
    %558 = arith.addf %555, %557 : vector<8x128xf32>
    %559 = arith.index_cast %c8_i32_71 : i32 to index
    %c0_76 = arith.constant 0 : index
    %c0_77 = arith.constant 0 : index
    %560 = vector.load %arg6[%559, %c0_76, %c0_77] : memref<16x8x128xf32, #tpu.memory_space<vmem>>, vector<1x8x128xf32>
    %561 = vector.shape_cast %560 : vector<1x8x128xf32> to vector<8x128xf32>
    %562 = arith.addf %561, %550 : vector<8x128xf32>
    %563 = math.log %558 : vector<8x128xf32>
    %564 = arith.addf %562, %563 : vector<8x128xf32>
    %565 = vector.broadcast %c8_i32_71 : i32 to vector<8x1xi32>
    %566 = arith.cmpi slt, %565, %346 : vector<8x1xi32>
    %567 = vector.shape_cast %566 : vector<8x1xi1> to vector<8x1xi1>
    %568 = vector.broadcast %567 : vector<8x1xi1> to vector<8x128xi1>
    %569 = arith.select %568, %564, %542 : vector<8x128xi1>, vector<8x128xf32>
    %c9_i32_78 = arith.constant 9 : i32
    %c1_i32_79 = arith.constant 1 : i32
    %570 = tpu.dynamic_rotate %569 by %c1_i32_79 dim 1 : vector<8x128xf32>, i32 -> vector<8x128xf32>
    %cst_80 = arith.constant -1.000000e+30 : f32
    %571 = vector.broadcast %cst_80 : f32 to vector<8x128xf32>
    %572 = arith.select %345, %570, %571 : vector<8x128xi1>, vector<8x128xf32>
    %c2_i32_81 = arith.constant 2 : i32
    %573 = tpu.dynamic_rotate %569 by %c2_i32_81 dim 1 : vector<8x128xf32>, i32 -> vector<8x128xf32>
    %cst_82 = arith.constant -1.000000e+30 : f32
    %574 = vector.broadcast %cst_82 : f32 to vector<8x128xf32>
    %575 = arith.select %343, %573, %574 : vector<8x128xi1>, vector<8x128xf32>
    %576 = arith.maximumf %569, %572 : vector<8x128xf32>
    %577 = arith.maximumf %576, %575 : vector<8x128xf32>
    %578 = arith.subf %569, %577 : vector<8x128xf32>
    %579 = math.exp %578 : vector<8x128xf32>
    %580 = arith.subf %572, %577 : vector<8x128xf32>
    %581 = math.exp %580 : vector<8x128xf32>
    %582 = arith.addf %579, %581 : vector<8x128xf32>
    %583 = arith.subf %575, %577 : vector<8x128xf32>
    %584 = math.exp %583 : vector<8x128xf32>
    %585 = arith.addf %582, %584 : vector<8x128xf32>
    %586 = arith.index_cast %c9_i32_78 : i32 to index
    %c0_83 = arith.constant 0 : index
    %c0_84 = arith.constant 0 : index
    %587 = vector.load %arg6[%586, %c0_83, %c0_84] : memref<16x8x128xf32, #tpu.memory_space<vmem>>, vector<1x8x128xf32>
    %588 = vector.shape_cast %587 : vector<1x8x128xf32> to vector<8x128xf32>
    %589 = arith.addf %588, %577 : vector<8x128xf32>
    %590 = math.log %585 : vector<8x128xf32>
    %591 = arith.addf %589, %590 : vector<8x128xf32>
    %592 = vector.broadcast %c9_i32_78 : i32 to vector<8x1xi32>
    %593 = arith.cmpi slt, %592, %346 : vector<8x1xi32>
    %594 = vector.shape_cast %593 : vector<8x1xi1> to vector<8x1xi1>
    %595 = vector.broadcast %594 : vector<8x1xi1> to vector<8x128xi1>
    %596 = arith.select %595, %591, %569 : vector<8x128xi1>, vector<8x128xf32>
    %c10_i32_85 = arith.constant 10 : i32
    %c1_i32_86 = arith.constant 1 : i32
    %597 = tpu.dynamic_rotate %596 by %c1_i32_86 dim 1 : vector<8x128xf32>, i32 -> vector<8x128xf32>
    %cst_87 = arith.constant -1.000000e+30 : f32
    %598 = vector.broadcast %cst_87 : f32 to vector<8x128xf32>
    %599 = arith.select %345, %597, %598 : vector<8x128xi1>, vector<8x128xf32>
    %c2_i32_88 = arith.constant 2 : i32
    %600 = tpu.dynamic_rotate %596 by %c2_i32_88 dim 1 : vector<8x128xf32>, i32 -> vector<8x128xf32>
    %cst_89 = arith.constant -1.000000e+30 : f32
    %601 = vector.broadcast %cst_89 : f32 to vector<8x128xf32>
    %602 = arith.select %343, %600, %601 : vector<8x128xi1>, vector<8x128xf32>
    %603 = arith.maximumf %596, %599 : vector<8x128xf32>
    %604 = arith.maximumf %603, %602 : vector<8x128xf32>
    %605 = arith.subf %596, %604 : vector<8x128xf32>
    %606 = math.exp %605 : vector<8x128xf32>
    %607 = arith.subf %599, %604 : vector<8x128xf32>
    %608 = math.exp %607 : vector<8x128xf32>
    %609 = arith.addf %606, %608 : vector<8x128xf32>
    %610 = arith.subf %602, %604 : vector<8x128xf32>
    %611 = math.exp %610 : vector<8x128xf32>
    %612 = arith.addf %609, %611 : vector<8x128xf32>
    %613 = arith.index_cast %c10_i32_85 : i32 to index
    %c0_90 = arith.constant 0 : index
    %c0_91 = arith.constant 0 : index
    %614 = vector.load %arg6[%613, %c0_90, %c0_91] : memref<16x8x128xf32, #tpu.memory_space<vmem>>, vector<1x8x128xf32>
    %615 = vector.shape_cast %614 : vector<1x8x128xf32> to vector<8x128xf32>
    %616 = arith.addf %615, %604 : vector<8x128xf32>
    %617 = math.log %612 : vector<8x128xf32>
    %618 = arith.addf %616, %617 : vector<8x128xf32>
    %619 = vector.broadcast %c10_i32_85 : i32 to vector<8x1xi32>
    %620 = arith.cmpi slt, %619, %346 : vector<8x1xi32>
    %621 = vector.shape_cast %620 : vector<8x1xi1> to vector<8x1xi1>
    %622 = vector.broadcast %621 : vector<8x1xi1> to vector<8x128xi1>
    %623 = arith.select %622, %618, %596 : vector<8x128xi1>, vector<8x128xf32>
    %c11_i32_92 = arith.constant 11 : i32
    %c1_i32_93 = arith.constant 1 : i32
    %624 = tpu.dynamic_rotate %623 by %c1_i32_93 dim 1 : vector<8x128xf32>, i32 -> vector<8x128xf32>
    %cst_94 = arith.constant -1.000000e+30 : f32
    %625 = vector.broadcast %cst_94 : f32 to vector<8x128xf32>
    %626 = arith.select %345, %624, %625 : vector<8x128xi1>, vector<8x128xf32>
    %c2_i32_95 = arith.constant 2 : i32
    %627 = tpu.dynamic_rotate %623 by %c2_i32_95 dim 1 : vector<8x128xf32>, i32 -> vector<8x128xf32>
    %cst_96 = arith.constant -1.000000e+30 : f32
    %628 = vector.broadcast %cst_96 : f32 to vector<8x128xf32>
    %629 = arith.select %343, %627, %628 : vector<8x128xi1>, vector<8x128xf32>
    %630 = arith.maximumf %623, %626 : vector<8x128xf32>
    %631 = arith.maximumf %630, %629 : vector<8x128xf32>
    %632 = arith.subf %623, %631 : vector<8x128xf32>
    %633 = math.exp %632 : vector<8x128xf32>
    %634 = arith.subf %626, %631 : vector<8x128xf32>
    %635 = math.exp %634 : vector<8x128xf32>
    %636 = arith.addf %633, %635 : vector<8x128xf32>
    %637 = arith.subf %629, %631 : vector<8x128xf32>
    %638 = math.exp %637 : vector<8x128xf32>
    %639 = arith.addf %636, %638 : vector<8x128xf32>
    %640 = arith.index_cast %c11_i32_92 : i32 to index
    %c0_97 = arith.constant 0 : index
    %c0_98 = arith.constant 0 : index
    %641 = vector.load %arg6[%640, %c0_97, %c0_98] : memref<16x8x128xf32, #tpu.memory_space<vmem>>, vector<1x8x128xf32>
    %642 = vector.shape_cast %641 : vector<1x8x128xf32> to vector<8x128xf32>
    %643 = arith.addf %642, %631 : vector<8x128xf32>
    %644 = math.log %639 : vector<8x128xf32>
    %645 = arith.addf %643, %644 : vector<8x128xf32>
    %646 = vector.broadcast %c11_i32_92 : i32 to vector<8x1xi32>
    %647 = arith.cmpi slt, %646, %346 : vector<8x1xi32>
    %648 = vector.shape_cast %647 : vector<8x1xi1> to vector<8x1xi1>
    %649 = vector.broadcast %648 : vector<8x1xi1> to vector<8x128xi1>
    %650 = arith.select %649, %645, %623 : vector<8x128xi1>, vector<8x128xf32>
    %c12_i32_99 = arith.constant 12 : i32
    %c1_i32_100 = arith.constant 1 : i32
    %651 = tpu.dynamic_rotate %650 by %c1_i32_100 dim 1 : vector<8x128xf32>, i32 -> vector<8x128xf32>
    %cst_101 = arith.constant -1.000000e+30 : f32
    %652 = vector.broadcast %cst_101 : f32 to vector<8x128xf32>
    %653 = arith.select %345, %651, %652 : vector<8x128xi1>, vector<8x128xf32>
    %c2_i32_102 = arith.constant 2 : i32
    %654 = tpu.dynamic_rotate %650 by %c2_i32_102 dim 1 : vector<8x128xf32>, i32 -> vector<8x128xf32>
    %cst_103 = arith.constant -1.000000e+30 : f32
    %655 = vector.broadcast %cst_103 : f32 to vector<8x128xf32>
    %656 = arith.select %343, %654, %655 : vector<8x128xi1>, vector<8x128xf32>
    %657 = arith.maximumf %650, %653 : vector<8x128xf32>
    %658 = arith.maximumf %657, %656 : vector<8x128xf32>
    %659 = arith.subf %650, %658 : vector<8x128xf32>
    %660 = math.exp %659 : vector<8x128xf32>
    %661 = arith.subf %653, %658 : vector<8x128xf32>
    %662 = math.exp %661 : vector<8x128xf32>
    %663 = arith.addf %660, %662 : vector<8x128xf32>
    %664 = arith.subf %656, %658 : vector<8x128xf32>
    %665 = math.exp %664 : vector<8x128xf32>
    %666 = arith.addf %663, %665 : vector<8x128xf32>
    %667 = arith.index_cast %c12_i32_99 : i32 to index
    %c0_104 = arith.constant 0 : index
    %c0_105 = arith.constant 0 : index
    %668 = vector.load %arg6[%667, %c0_104, %c0_105] : memref<16x8x128xf32, #tpu.memory_space<vmem>>, vector<1x8x128xf32>
    %669 = vector.shape_cast %668 : vector<1x8x128xf32> to vector<8x128xf32>
    %670 = arith.addf %669, %658 : vector<8x128xf32>
    %671 = math.log %666 : vector<8x128xf32>
    %672 = arith.addf %670, %671 : vector<8x128xf32>
    %673 = vector.broadcast %c12_i32_99 : i32 to vector<8x1xi32>
    %674 = arith.cmpi slt, %673, %346 : vector<8x1xi32>
    %675 = vector.shape_cast %674 : vector<8x1xi1> to vector<8x1xi1>
    %676 = vector.broadcast %675 : vector<8x1xi1> to vector<8x128xi1>
    %677 = arith.select %676, %672, %650 : vector<8x128xi1>, vector<8x128xf32>
    %c13_i32_106 = arith.constant 13 : i32
    %c1_i32_107 = arith.constant 1 : i32
    %678 = tpu.dynamic_rotate %677 by %c1_i32_107 dim 1 : vector<8x128xf32>, i32 -> vector<8x128xf32>
    %cst_108 = arith.constant -1.000000e+30 : f32
    %679 = vector.broadcast %cst_108 : f32 to vector<8x128xf32>
    %680 = arith.select %345, %678, %679 : vector<8x128xi1>, vector<8x128xf32>
    %c2_i32_109 = arith.constant 2 : i32
    %681 = tpu.dynamic_rotate %677 by %c2_i32_109 dim 1 : vector<8x128xf32>, i32 -> vector<8x128xf32>
    %cst_110 = arith.constant -1.000000e+30 : f32
    %682 = vector.broadcast %cst_110 : f32 to vector<8x128xf32>
    %683 = arith.select %343, %681, %682 : vector<8x128xi1>, vector<8x128xf32>
    %684 = arith.maximumf %677, %680 : vector<8x128xf32>
    %685 = arith.maximumf %684, %683 : vector<8x128xf32>
    %686 = arith.subf %677, %685 : vector<8x128xf32>
    %687 = math.exp %686 : vector<8x128xf32>
    %688 = arith.subf %680, %685 : vector<8x128xf32>
    %689 = math.exp %688 : vector<8x128xf32>
    %690 = arith.addf %687, %689 : vector<8x128xf32>
    %691 = arith.subf %683, %685 : vector<8x128xf32>
    %692 = math.exp %691 : vector<8x128xf32>
    %693 = arith.addf %690, %692 : vector<8x128xf32>
    %694 = arith.index_cast %c13_i32_106 : i32 to index
    %c0_111 = arith.constant 0 : index
    %c0_112 = arith.constant 0 : index
    %695 = vector.load %arg6[%694, %c0_111, %c0_112] : memref<16x8x128xf32, #tpu.memory_space<vmem>>, vector<1x8x128xf32>
    %696 = vector.shape_cast %695 : vector<1x8x128xf32> to vector<8x128xf32>
    %697 = arith.addf %696, %685 : vector<8x128xf32>
    %698 = math.log %693 : vector<8x128xf32>
    %699 = arith.addf %697, %698 : vector<8x128xf32>
    %700 = vector.broadcast %c13_i32_106 : i32 to vector<8x1xi32>
    %701 = arith.cmpi slt, %700, %346 : vector<8x1xi32>
    %702 = vector.shape_cast %701 : vector<8x1xi1> to vector<8x1xi1>
    %703 = vector.broadcast %702 : vector<8x1xi1> to vector<8x128xi1>
    %704 = arith.select %703, %699, %677 : vector<8x128xi1>, vector<8x128xf32>
    %c14_i32_113 = arith.constant 14 : i32
    %c1_i32_114 = arith.constant 1 : i32
    %705 = tpu.dynamic_rotate %704 by %c1_i32_114 dim 1 : vector<8x128xf32>, i32 -> vector<8x128xf32>
    %cst_115 = arith.constant -1.000000e+30 : f32
    %706 = vector.broadcast %cst_115 : f32 to vector<8x128xf32>
    %707 = arith.select %345, %705, %706 : vector<8x128xi1>, vector<8x128xf32>
    %c2_i32_116 = arith.constant 2 : i32
    %708 = tpu.dynamic_rotate %704 by %c2_i32_116 dim 1 : vector<8x128xf32>, i32 -> vector<8x128xf32>
    %cst_117 = arith.constant -1.000000e+30 : f32
    %709 = vector.broadcast %cst_117 : f32 to vector<8x128xf32>
    %710 = arith.select %343, %708, %709 : vector<8x128xi1>, vector<8x128xf32>
    %711 = arith.maximumf %704, %707 : vector<8x128xf32>
    %712 = arith.maximumf %711, %710 : vector<8x128xf32>
    %713 = arith.subf %704, %712 : vector<8x128xf32>
    %714 = math.exp %713 : vector<8x128xf32>
    %715 = arith.subf %707, %712 : vector<8x128xf32>
    %716 = math.exp %715 : vector<8x128xf32>
    %717 = arith.addf %714, %716 : vector<8x128xf32>
    %718 = arith.subf %710, %712 : vector<8x128xf32>
    %719 = math.exp %718 : vector<8x128xf32>
    %720 = arith.addf %717, %719 : vector<8x128xf32>
    %721 = arith.index_cast %c14_i32_113 : i32 to index
    %c0_118 = arith.constant 0 : index
    %c0_119 = arith.constant 0 : index
    %722 = vector.load %arg6[%721, %c0_118, %c0_119] : memref<16x8x128xf32, #tpu.memory_space<vmem>>, vector<1x8x128xf32>
    %723 = vector.shape_cast %722 : vector<1x8x128xf32> to vector<8x128xf32>
    %724 = arith.addf %723, %712 : vector<8x128xf32>
    %725 = math.log %720 : vector<8x128xf32>
    %726 = arith.addf %724, %725 : vector<8x128xf32>
    %727 = vector.broadcast %c14_i32_113 : i32 to vector<8x1xi32>
    %728 = arith.cmpi slt, %727, %346 : vector<8x1xi32>
    %729 = vector.shape_cast %728 : vector<8x1xi1> to vector<8x1xi1>
    %730 = vector.broadcast %729 : vector<8x1xi1> to vector<8x128xi1>
    %731 = arith.select %730, %726, %704 : vector<8x128xi1>, vector<8x128xf32>
    %c15_i32_120 = arith.constant 15 : i32
    %c1_i32_121 = arith.constant 1 : i32
    %732 = tpu.dynamic_rotate %731 by %c1_i32_121 dim 1 : vector<8x128xf32>, i32 -> vector<8x128xf32>
    %cst_122 = arith.constant -1.000000e+30 : f32
    %733 = vector.broadcast %cst_122 : f32 to vector<8x128xf32>
    %734 = arith.select %345, %732, %733 : vector<8x128xi1>, vector<8x128xf32>
    %c2_i32_123 = arith.constant 2 : i32
    %735 = tpu.dynamic_rotate %731 by %c2_i32_123 dim 1 : vector<8x128xf32>, i32 -> vector<8x128xf32>
    %cst_124 = arith.constant -1.000000e+30 : f32
    %736 = vector.broadcast %cst_124 : f32 to vector<8x128xf32>
    %737 = arith.select %343, %735, %736 : vector<8x128xi1>, vector<8x128xf32>
    %738 = arith.maximumf %731, %734 : vector<8x128xf32>
    %739 = arith.maximumf %738, %737 : vector<8x128xf32>
    %740 = arith.subf %731, %739 : vector<8x128xf32>
    %741 = math.exp %740 : vector<8x128xf32>
    %742 = arith.subf %734, %739 : vector<8x128xf32>
    %743 = math.exp %742 : vector<8x128xf32>
    %744 = arith.addf %741, %743 : vector<8x128xf32>
    %745 = arith.subf %737, %739 : vector<8x128xf32>
    %746 = math.exp %745 : vector<8x128xf32>
    %747 = arith.addf %744, %746 : vector<8x128xf32>
    %748 = arith.index_cast %c15_i32_120 : i32 to index
    %c0_125 = arith.constant 0 : index
    %c0_126 = arith.constant 0 : index
    %749 = vector.load %arg6[%748, %c0_125, %c0_126] : memref<16x8x128xf32, #tpu.memory_space<vmem>>, vector<1x8x128xf32>
    %750 = vector.shape_cast %749 : vector<1x8x128xf32> to vector<8x128xf32>
    %751 = arith.addf %750, %739 : vector<8x128xf32>
    %752 = math.log %747 : vector<8x128xf32>
    %753 = arith.addf %751, %752 : vector<8x128xf32>
    %754 = vector.broadcast %c15_i32_120 : i32 to vector<8x1xi32>
    %755 = arith.cmpi slt, %754, %346 : vector<8x1xi32>
    %756 = vector.shape_cast %755 : vector<8x1xi1> to vector<8x1xi1>
    %757 = vector.broadcast %756 : vector<8x1xi1> to vector<8x128xi1>
    %758 = arith.select %757, %753, %731 : vector<8x128xi1>, vector<8x128xf32>
    %c15_i32_127 = arith.constant 15 : i32
    %c2_i32_128 = arith.constant 2 : i32
    %759 = vector.broadcast %c2_i32_128 : i32 to vector<8x1xi32>
    %760 = arith.muli %759, %347 : vector<8x1xi32>
    %c1_i32_129 = arith.constant 1 : i32
    %761 = vector.broadcast %c1_i32_129 : i32 to vector<8x1xi32>
    %762 = arith.addi %760, %761 : vector<8x1xi32>
    %c1_i32_130 = arith.constant 1 : i32
    %763 = vector.broadcast %c1_i32_130 : i32 to vector<8x1xi32>
    %764 = arith.subi %762, %763 : vector<8x1xi32>
    %765 = vector.broadcast %764 : vector<8x1xi32> to vector<8x128xi32>
    %766 = arith.cmpi eq, %335, %765 : vector<8x128xi32>
    %c2_i32_131 = arith.constant 2 : i32
    %767 = vector.broadcast %c2_i32_131 : i32 to vector<8x1xi32>
    %768 = arith.subi %762, %767 : vector<8x1xi32>
    %769 = vector.broadcast %768 : vector<8x1xi32> to vector<8x128xi32>
    %770 = arith.cmpi eq, %335, %769 : vector<8x128xi32>
    %771 = arith.ori %766, %770 : vector<8x128xi1>
    %cst_132 = arith.constant -1.000000e+30 : f32
    %772 = vector.broadcast %cst_132 : f32 to vector<8x128xf32>
    %773 = arith.select %771, %758, %772 : vector<8x128xi1>, vector<8x128xf32>
    %cst_133 = arith.constant dense<0xFF800000> : vector<8xf32>
    %774 = vector.multi_reduction <maximumf>, %773, %cst_133 [1] : vector<8x128xf32> to vector<8xf32>
    %775 = vector.shape_cast %774 : vector<8xf32> to vector<8x1xf32>
    %776 = vector.broadcast %775 : vector<8x1xf32> to vector<8x128xf32>
    %777 = arith.subf %773, %776 : vector<8x128xf32>
    %778 = math.exp %777 : vector<8x128xf32>
    %cst_134 = arith.constant dense<0.000000e+00> : vector<8xf32>
    %779 = vector.multi_reduction <add>, %778, %cst_134 [1] : vector<8x128xf32> to vector<8xf32>
    %780 = vector.shape_cast %779 : vector<8xf32> to vector<8x1xf32>
    %781 = math.log %780 : vector<8x1xf32>
    %782 = arith.addf %775, %781 : vector<8x1xf32>
    %cst_135 = arith.constant 0.000000e+00 : f32
    %783 = vector.broadcast %cst_135 : f32 to vector<8x1xf32>
    %784 = arith.subf %783, %782 : vector<8x1xf32>
    %c1_i32_136 = arith.constant 1 : i32
    %785 = vector.broadcast %c1_i32_136 : i32 to vector<8x1xi32>
    %786 = arith.maxsi %347, %785 : vector<8x1xi32>
    %787 = arith.sitofp %786 : vector<8x1xi32> to vector<8x1xf32>
    %cst_137 = arith.constant 1.000000e+29 : f32
    %788 = vector.broadcast %cst_137 : f32 to vector<8x1xf32>
    %789 = arith.cmpf ogt, %784, %788 : vector<8x1xf32>
    %cst_138 = arith.constant 0.000000e+00 : f32
    %790 = vector.broadcast %cst_138 : f32 to vector<8x1xf32>
    %791 = arith.select %789, %790, %784 : vector<8x1xi1>, vector<8x1xf32>
    %792 = arith.divf %791, %787 : vector<8x1xf32>
    %c0_139 = arith.constant 0 : index
    %c0_140 = arith.constant 0 : index
    %793 = vector.load %arg5[%c0_139, %c0_140] : memref<8x1xf32, #tpu.memory_space<vmem>>, vector<8x1xf32>
    tpu.vector_store %arg5[%c0_139, %c0_140], %792 {strides = array<i32>} : memref<8x1xf32, #tpu.memory_space<vmem>>, vector<8x1xf32>,
    return
  }
  func.func @transform_0(%arg0: i32) -> (i32, i32, i32) {
    %c0_i32 = arith.constant 0 : i32
    %c0_i32_0 = arith.constant 0 : i32
    %c0_i32_1 = arith.constant 0 : i32
    return %c0_i32, %arg0, %c0_i32_0 : i32, i32, i32
  }
  func.func @transform_1(%arg0: i32) -> (i32, i32) {
    %c0_i32 = arith.constant 0 : i32
    %c0_i32_0 = arith.constant 0 : i32
    return %arg0, %c0_i32 : i32, i32
  }
  func.func @transform_2(%arg0: i32) -> (i32, i32) {
    %c0_i32 = arith.constant 0 : i32
    %c0_i32_0 = arith.constant 0 : i32
    return %arg0, %c0_i32 : i32, i32
  }
  func.func @transform_3(%arg0: i32) -> (i32, i32) {
    %c0_i32 = arith.constant 0 : i32
    %c0_i32_0 = arith.constant 0 : i32
    return %arg0, %c0_i32 : i32, i32
  }
  func.func @transform_4(%arg0: i32) -> (i32, i32) {
    %c0_i32 = arith.constant 0 : i32
    %c0_i32_0 = arith.constant 0 : i32
    return %arg0, %c0_i32 : i32, i32
  }
}

</mosaic_0001>

<llo_original>
// kernel: _ctc_per_sample.1
$region0: #{_ctc_per_sample.1}
  #allocation0 [shape = 'u32[]', space=smem, size = 0x4, offset = 0x4, fixed_abs, tag = 'smem constant byte address 0x4 - core index']
  #allocation1 [shape = 'u32[144,128]{1,0:T(1,128)}', space=vmem, size = 0x12000, scoped, tag = 'internal scratch']
  #allocation2 [shape = 'f32[16,8,128]{2,1,0:T(8,128)}', space=vmem, size = 0x10000, scoped, tag = 'scratch operand']
  %s0 = inlined_call_operand.hbm [shape: f32[16,8,32], index: 0, kind: input, shape index: {}]
  %s1 = inlined_call_operand.vmem [shape: s32[8,128], index: 1, kind: input, shape index: {}]
  %s2 = inlined_call_operand.vmem [shape: s32[8,1], index: 2, kind: input, shape index: {}]
  %s3 = inlined_call_operand.vmem [shape: s32[8,1], index: 3, kind: input, shape index: {}]
  %s4 = inlined_call_operand.vmem [shape: f32[8,1], index: 4, kind: output, shape index: {}]
  %s5 = sld [smem:[#allocation0]]
  $region30: #{_ctc_per_sample.1} parent=0
    _
  %s7 = ssub.s32 1, %s5
  %s8 = scalar_select 0, %s7, %s5
  $region1: #{_ctc_per_sample.1} parent=0
    #allocation3 [shape = 'u8[65536]{0}', space=vmem, size = 0x10000, scoped, tag = 'input window, operand 0, single buffered']
    #allocation4 [shape = 's32[1]{0}', space=sflag, size = 0x4, scoped, tag = 'scoped memory for _ctc_per_sample.1']
    %9 = vsyncpa [#allocation4], 0
    // Predicated region
    $region2: #{_ctc_per_sample.1} parent=1 // pred_check
      _
    $region3: #{_ctc_per_sample.1} parent=1 // pred_check_branch
      %11 = sbr.rel (0) target = $region5
    $region4: #{_ctc_per_sample.1} parent=1 // pred_region
      %s13 = ssub.s32 2048, 2048
      %14 = vsyncadd [#allocation4], %s13
      %s15 = sshll.u32 [#allocation3], 4
      %s16 = int_to_ptr.vmem [resolvable:$true] %s15
      %21 = dma.hbm_to_vmem [thread:$0]  %s0, 2048, %s16, [#allocation4], 128, 128, 8
    $region5: #{_ctc_per_sample.1} parent=1 // pred_fallthru
      _
    // Predicated region
    $region6: #{_ctc_per_sample.1} parent=1 // pred_check
      _
    $region7: #{_ctc_per_sample.1} parent=1 // pred_check_branch
      %23 = sbr.rel (0) target = $region9
    $region8: #{_ctc_per_sample.1} parent=1 // pred_region
      _
    $region9: #{_ctc_per_sample.1} parent=1 // pred_fallthru
      _
    // Predicated region
    $region10: #{_ctc_per_sample.1} parent=1 // pred_check
      _
    $region11: #{_ctc_per_sample.1} parent=1 // pred_check_branch
      %25 = sbr.rel (0) target = $region13
    $region12: #{_ctc_per_sample.1} parent=1 // pred_region
      _
    $region13: #{_ctc_per_sample.1} parent=1 // pred_fallthru
      _
    // Predicated region
    $region14: #{_ctc_per_sample.1} parent=1 // pred_check
      _
    $region15: #{_ctc_per_sample.1} parent=1 // pred_check_branch
      %27 = sbr.rel (0) target = $region17
    $region16: #{_ctc_per_sample.1} parent=1 // pred_region
      _
    $region17: #{_ctc_per_sample.1} parent=1 // pred_fallthru
      _
    // Predicated region
    $region18: #{_ctc_per_sample.1} parent=1 // pred_check
      _
    $region19: #{_ctc_per_sample.1} parent=1 // pred_check_branch
      %29 = sbr.rel (0) target = $region21
    $region20: #{_ctc_per_sample.1} parent=1 // pred_region
      %30 = dma.done [#allocation4], 2048
    $region21: #{_ctc_per_sample.1} parent=1 // pred_fallthru
      _
    %v31 = vld [vmem:[#allocation3] sm:$0xff]
    %v32 = vld [vmem:[#allocation3 + $0x8] sm:$0xff]
    %v33 = vld [vmem:[#allocation3 + $0x10] sm:$0xff]
    %v34 = vld [vmem:[#allocation3 + $0x18] sm:$0xff]
    %v35 = vld [vmem:[#allocation3 + $0x20] sm:$0xff]
    %v36 = vld [vmem:[#allocation3 + $0x28] sm:$0xff]
    %v37 = vld [vmem:[#allocation3 + $0x30] sm:$0xff]
    %v38 = vld [vmem:[#allocation3 + $0x38] sm:$0xff]
    %v39 = vld [vmem:[#allocation3 + $0x40] sm:$0xff]
    %v40 = vld [vmem:[#allocation3 + $0x48] sm:$0xff]
    %v41 = vld [vmem:[#allocation3 + $0x50] sm:$0xff]
    %v42 = vld [vmem:[#allocation3 + $0x58] sm:$0xff]
    %v43 = vld [vmem:[#allocation3 + $0x60] sm:$0xff]
    %v44 = vld [vmem:[#allocation3 + $0x68] sm:$0xff]
    %v45 = vld [vmem:[#allocation3 + $0x70] sm:$0xff]
    %v46 = vld [vmem:[#allocation3 + $0x78] sm:$0xff]
    %vm47 = vcmask 261120
    %v48 = vsel %vm47, %v31, -inf
    %49 = vmax.xlane.f32.xlu0 %v48
    %v50 = vpop.xlane.xlu0 %49
    %v51 = vsel %vm47, %v32, -inf
    %52 = vmax.xlane.f32.xlu0 %v51
    %v53 = vpop.xlane.xlu0 %52
    %v54 = vsel %vm47, %v33, -inf
    %55 = vmax.xlane.f32.xlu0 %v54
    %v56 = vpop.xlane.xlu0 %55
    %v57 = vsel %vm47, %v34, -inf
    %58 = vmax.xlane.f32.xlu0 %v57
    %v59 = vpop.xlane.xlu0 %58
    %v60 = vsel %vm47, %v35, -inf
    %61 = vmax.xlane.f32.xlu0 %v60
    %v62 = vpop.xlane.xlu0 %61
    %v63 = vsel %vm47, %v36, -inf
    %64 = vmax.xlane.f32.xlu0 %v63
    %v65 = vpop.xlane.xlu0 %64
    %v66 = vsel %vm47, %v37, -inf
    %67 = vmax.xlane.f32.xlu0 %v66
    %v68 = vpop.xlane.xlu0 %67
    %v69 = vsel %vm47, %v38, -inf
    %70 = vmax.xlane.f32.xlu0 %v69
    %v71 = vpop.xlane.xlu0 %70
    %v72 = vsel %vm47, %v39, -inf
    %73 = vmax.xlane.f32.xlu0 %v72
    %v74 = vpop.xlane.xlu0 %73
    %v75 = vsel %vm47, %v40, -inf
    %76 = vmax.xlane.f32.xlu0 %v75
    %v77 = vpop.xlane.xlu0 %76
    %v78 = vsel %vm47, %v41, -inf
    %79 = vmax.xlane.f32.xlu0 %v78
    %v80 = vpop.xlane.xlu0 %79
    %v81 = vsel %vm47, %v42, -inf
    %82 = vmax.xlane.f32.xlu0 %v81
    %v83 = vpop.xlane.xlu0 %82
    %v84 = vsel %vm47, %v43, -inf
    %85 = vmax.xlane.f32.xlu0 %v84
    %v86 = vpop.xlane.xlu0 %85
    %v87 = vsel %vm47, %v44, -inf
    %88 = vmax.xlane.f32.xlu0 %v87
    %v89 = vpop.xlane.xlu0 %88
    %v90 = vsel %vm47, %v45, -inf
    %91 = vmax.xlane.f32.xlu0 %v90
    %v92 = vpop.xlane.xlu0 %91
    %v93 = vsel %vm47, %v46, -inf
    %94 = vmax.xlane.f32.xlu0 %v93
    %v95 = vpop.xlane.xlu0 %94
    %v96 = vsub.f32 %v31, %v50
    %v97 = vsub.f32 %v32, %v53
    %v98 = vsub.f32 %v33, %v56
    %v99 = vsub.f32 %v34, %v59
    %v100 = vsub.f32 %v35, %v62
    %v101 = vsub.f32 %v36, %v65
    %v102 = vsub.f32 %v37, %v68
    %v103 = vsub.f32 %v38, %v71
    %v104 = vsub.f32 %v39, %v74
    %v105 = vsub.f32 %v40, %v77
    %v106 = vsub.f32 %v41, %v80
    %v107 = vsub.f32 %v42, %v83
    %v108 = vsub.f32 %v43, %v86
    %v109 = vsub.f32 %v44, %v89
    %v110 = vsub.f32 %v45, %v92
    %v111 = vsub.f32 %v46, %v95
    %v112 = vmul.f32 %v96, 1.442695
    %v113 = vpow.pop %v112
    %v114 = vmul.f32 %v97, 1.442695
    %v115 = vpow.pop %v114
    %v116 = vmul.f32 %v98, 1.442695
    %v117 = vpow.pop %v116
    %v118 = vmul.f32 %v99, 1.442695
    %v119 = vpow.pop %v118
    %v120 = vmul.f32 %v100, 1.442695
    %v121 = vpow.pop %v120
    %v122 = vmul.f32 %v101, 1.442695
    %v123 = vpow.pop %v122
    %v124 = vmul.f32 %v102, 1.442695
    %v125 = vpow.pop %v124
    %v126 = vmul.f32 %v103, 1.442695
    %v127 = vpow.pop %v126
    %v128 = vmul.f32 %v104, 1.442695
    %v129 = vpow.pop %v128
    %v130 = vmul.f32 %v105, 1.442695
    %v131 = vpow.pop %v130
    %v132 = vmul.f32 %v106, 1.442695
    %v133 = vpow.pop %v132
    %v134 = vmul.f32 %v107, 1.442695
    %v135 = vpow.pop %v134
    %v136 = vmul.f32 %v108, 1.442695
    %v137 = vpow.pop %v136
    %v138 = vmul.f32 %v109, 1.442695
    %v139 = vpow.pop %v138
    %v140 = vmul.f32 %v110, 1.442695
    %v141 = vpow.pop %v140
    %v142 = vmul.f32 %v111, 1.442695
    %v143 = vpow.pop %v142
    %v144 = vsel %vm47, %v113, 0.0
    %145 = vadd.xlane.f32.xlu0 %v144
    %v146 = vpop.xlane.xlu0 %145
    %v147 = vsel %vm47, %v115, 0.0
    %148 = vadd.xlane.f32.xlu0 %v147
    %v149 = vpop.xlane.xlu0 %148
    %v150 = vsel %vm47, %v117, 0.0
    %151 = vadd.xlane.f32.xlu0 %v150
    %v152 = vpop.xlane.xlu0 %151
    %v153 = vsel %vm47, %v119, 0.0
    %154 = vadd.xlane.f32.xlu0 %v153
    %v155 = vpop.xlane.xlu0 %154
    %v156 = vsel %vm47, %v121, 0.0
    %157 = vadd.xlane.f32.xlu0 %v156
    %v158 = vpop.xlane.xlu0 %157
    %v159 = vsel %vm47, %v123, 0.0
    %160 = vadd.xlane.f32.xlu0 %v159
    %v161 = vpop.xlane.xlu0 %160
    %v162 = vsel %vm47, %v125, 0.0
    %163 = vadd.xlane.f32.xlu0 %v162
    %v164 = vpop.xlane.xlu0 %163
    %v165 = vsel %vm47, %v127, 0.0
    %166 = vadd.xlane.f32.xlu0 %v165
    %v167 = vpop.xlane.xlu0 %166
    %v168 = vsel %vm47, %v129, 0.0
    %169 = vadd.xlane.f32.xlu0 %v168
    %v170 = vpop.xlane.xlu0 %169
    %v171 = vsel %vm47, %v131, 0.0
    %172 = vadd.xlane.f32.xlu0 %v171
    %v173 = vpop.xlane.xlu0 %172
    %v174 = vsel %vm47, %v133, 0.0
    %175 = vadd.xlane.f32.xlu0 %v174
    %v176 = vpop.xlane.xlu0 %175
    %v177 = vsel %vm47, %v135, 0.0
    %178 = vadd.xlane.f32.xlu0 %v177
    %v179 = vpop.xlane.xlu0 %178
    %v180 = vsel %vm47, %v137, 0.0
    %181 = vadd.xlane.f32.xlu0 %v180
    %v182 = vpop.xlane.xlu0 %181
    %v183 = vsel %vm47, %v139, 0.0
    %184 = vadd.xlane.f32.xlu0 %v183
    %v185 = vpop.xlane.xlu0 %184
    %v186 = vsel %vm47, %v141, 0.0
    %187 = vadd.xlane.f32.xlu0 %v186
    %v188 = vpop.xlane.xlu0 %187
    %v189 = vsel %vm47, %v143, 0.0
    %190 = vadd.xlane.f32.xlu0 %v189
    %v191 = vpop.xlane.xlu0 %190
    %v192 = vlog2.pop %v146
    %v193 = vmul.f32 %v192, 0.6931472
    %v194 = vlog2.pop %v149
    %v195 = vmul.f32 %v194, 0.6931472
    %v196 = vlog2.pop %v152
    %v197 = vmul.f32 %v196, 0.6931472
    %v198 = vlog2.pop %v155
    %v199 = vmul.f32 %v198, 0.6931472
    %v200 = vlog2.pop %v158
    %v201 = vmul.f32 %v200, 0.6931472
    %v202 = vlog2.pop %v161
    %v203 = vmul.f32 %v202, 0.6931472
    %v204 = vlog2.pop %v164
    %v205 = vmul.f32 %v204, 0.6931472
    %v206 = vlog2.pop %v167
    %v207 = vmul.f32 %v206, 0.6931472
    %v208 = vlog2.pop %v170
    %v209 = vmul.f32 %v208, 0.6931472
    %v210 = vlog2.pop %v173
    %v211 = vmul.f32 %v210, 0.6931472
    %v212 = vlog2.pop %v176
    %v213 = vmul.f32 %v212, 0.6931472
    %v214 = vlog2.pop %v179
    %v215 = vmul.f32 %v214, 0.6931472
    %v216 = vlog2.pop %v182
    %v217 = vmul.f32 %v216, 0.6931472
    %v218 = vlog2.pop %v185
    %v219 = vmul.f32 %v218, 0.6931472
    %v220 = vlog2.pop %v188
    %v221 = vmul.f32 %v220, 0.6931472
    %v222 = vlog2.pop %v191
    %v223 = vmul.f32 %v222, 0.6931472
    %v224 = vadd.f32 %v50, %v193
    %v225 = vadd.f32 %v53, %v195
    %v226 = vadd.f32 %v56, %v197
    %v227 = vadd.f32 %v59, %v199
    %v228 = vadd.f32 %v62, %v201
    %v229 = vadd.f32 %v65, %v203
    %v230 = vadd.f32 %v68, %v205
    %v231 = vadd.f32 %v71, %v207
    %v232 = vadd.f32 %v74, %v209
    %v233 = vadd.f32 %v77, %v211
    %v234 = vadd.f32 %v80, %v213
    %v235 = vadd.f32 %v83, %v215
    %v236 = vadd.f32 %v86, %v217
    %v237 = vadd.f32 %v89, %v219
    %v238 = vadd.f32 %v92, %v221
    %v239 = vadd.f32 %v95, %v223
    %v240 = vsub.f32 %v31, %v224
    %v241 = vsub.f32 %v32, %v225
    %v242 = vsub.f32 %v33, %v226
    %v243 = vsub.f32 %v34, %v227
    %v244 = vsub.f32 %v35, %v228
    %v245 = vsub.f32 %v36, %v229
    %v246 = vsub.f32 %v37, %v230
    %v247 = vsub.f32 %v38, %v231
    %v248 = vsub.f32 %v39, %v232
    %v249 = vsub.f32 %v40, %v233
    %v250 = vsub.f32 %v41, %v234
    %v251 = vsub.f32 %v42, %v235
    %v252 = vsub.f32 %v43, %v236
    %v253 = vsub.f32 %v44, %v237
    %v254 = vsub.f32 %v45, %v238
    %v255 = vsub.f32 %v46, %v239
    %v256 = vld [vmem:[%s1] sm:$0xff]
    %vm257 = vcmp.eq.s32.totalorder %v256, 0
    %v258 = vsel %vm257, 1, 0
    %v259 = vcvt.s32.f32 %v258
    %261 = vset.pattern.permute.xlu0 0
    %262 = vperm.xlu0 %261, %v240
    %v263 = vpop.permute.xlu0 %262
    %266 = vset.pattern.permute.xlu0 0
    %267 = vperm.xlu0 %266, %v241
    %v268 = vpop.permute.xlu0 %267
    %271 = vset.pattern.permute.xlu0 0
    %272 = vperm.xlu0 %271, %v242
    %v273 = vpop.permute.xlu0 %272
    %276 = vset.pattern.permute.xlu0 0
    %277 = vperm.xlu0 %276, %v243
    %v278 = vpop.permute.xlu0 %277
    %281 = vset.pattern.permute.xlu0 0
    %282 = vperm.xlu0 %281, %v244
    %v283 = vpop.permute.xlu0 %282
    %286 = vset.pattern.permute.xlu0 0
    %287 = vperm.xlu0 %286, %v245
    %v288 = vpop.permute.xlu0 %287
    %291 = vset.pattern.permute.xlu0 0
    %292 = vperm.xlu0 %291, %v246
    %v293 = vpop.permute.xlu0 %292
    %296 = vset.pattern.permute.xlu0 0
    %297 = vperm.xlu0 %296, %v247
    %v298 = vpop.permute.xlu0 %297
    %301 = vset.pattern.permute.xlu0 0
    %302 = vperm.xlu0 %301, %v248
    %v303 = vpop.permute.xlu0 %302
    %306 = vset.pattern.permute.xlu0 0
    %307 = vperm.xlu0 %306, %v249
    %v308 = vpop.permute.xlu0 %307
    %311 = vset.pattern.permute.xlu0 0
    %312 = vperm.xlu0 %311, %v250
    %v313 = vpop.permute.xlu0 %312
    %316 = vset.pattern.permute.xlu0 0
    %317 = vperm.xlu0 %316, %v251
    %v318 = vpop.permute.xlu0 %317
    %321 = vset.pattern.permute.xlu0 0
    %322 = vperm.xlu0 %321, %v252
    %v323 = vpop.permute.xlu0 %322
    %326 = vset.pattern.permute.xlu0 0
    %327 = vperm.xlu0 %326, %v253
    %v328 = vpop.permute.xlu0 %327
    %331 = vset.pattern.permute.xlu0 0
    %332 = vperm.xlu0 %331, %v254
    %v333 = vpop.permute.xlu0 %332
    %336 = vset.pattern.permute.xlu0 0
    %337 = vperm.xlu0 %336, %v255
    %v338 = vpop.permute.xlu0 %337
    %v340 = vmul.f32 %v259, %v263
    %v341 = vmul.f32 %v259, %v268
    %v342 = vmul.f32 %v259, %v273
    %v343 = vmul.f32 %v259, %v278
    %v344 = vmul.f32 %v259, %v283
    %v345 = vmul.f32 %v259, %v288
    %v346 = vmul.f32 %v259, %v293
    %v347 = vmul.f32 %v259, %v298
    %v348 = vmul.f32 %v259, %v303
    %v349 = vmul.f32 %v259, %v308
    %v350 = vmul.f32 %v259, %v313
    %v351 = vmul.f32 %v259, %v318
    %v352 = vmul.f32 %v259, %v323
    %v353 = vmul.f32 %v259, %v328
    %v354 = vmul.f32 %v259, %v333
    %v355 = vmul.f32 %v259, %v338
    %v356 = vadd.f32 %v340, 0.0
    %v357 = vadd.f32 %v341, 0.0
    %v358 = vadd.f32 %v342, 0.0
    %v359 = vadd.f32 %v343, 0.0
    %v360 = vadd.f32 %v344, 0.0
    %v361 = vadd.f32 %v345, 0.0
    %v362 = vadd.f32 %v346, 0.0
    %v363 = vadd.f32 %v347, 0.0
    %v364 = vadd.f32 %v348, 0.0
    %v365 = vadd.f32 %v349, 0.0
    %v366 = vadd.f32 %v350, 0.0
    %v367 = vadd.f32 %v351, 0.0
    %v368 = vadd.f32 %v352, 0.0
    %v369 = vadd.f32 %v353, 0.0
    %v370 = vadd.f32 %v354, 0.0
    %v371 = vadd.f32 %v355, 0.0
    %vm372 = vcmp.eq.s32.totalorder %v256, 1
    %v373 = vsel %vm372, 1, 0
    %v374 = vcvt.s32.f32 %v373
    %375 = vset.pattern.permute.xlu0 1
    %376 = vperm.xlu0 %375, %v240
    %v377 = vpop.permute.xlu0 %376
    %379 = vset.pattern.permute.xlu0 1
    %380 = vperm.xlu0 %379, %v241
    %v381 = vpop.permute.xlu0 %380
    %383 = vset.pattern.permute.xlu0 1
    %384 = vperm.xlu0 %383, %v242
    %v385 = vpop.permute.xlu0 %384
    %387 = vset.pattern.permute.xlu0 1
    %388 = vperm.xlu0 %387, %v243
    %v389 = vpop.permute.xlu0 %388
    %391 = vset.pattern.permute.xlu0 1
    %392 = vperm.xlu0 %391, %v244
    %v393 = vpop.permute.xlu0 %392
    %395 = vset.pattern.permute.xlu0 1
    %396 = vperm.xlu0 %395, %v245
    %v397 = vpop.permute.xlu0 %396
    %399 = vset.pattern.permute.xlu0 1
    %400 = vperm.xlu0 %399, %v246
    %v401 = vpop.permute.xlu0 %400
    %403 = vset.pattern.permute.xlu0 1
    %404 = vperm.xlu0 %403, %v247
    %v405 = vpop.permute.xlu0 %404
    %407 = vset.pattern.permute.xlu0 1
    %408 = vperm.xlu0 %407, %v248
    %v409 = vpop.permute.xlu0 %408
    %411 = vset.pattern.permute.xlu0 1
    %412 = vperm.xlu0 %411, %v249
    %v413 = vpop.permute.xlu0 %412
    %415 = vset.pattern.permute.xlu0 1
    %416 = vperm.xlu0 %415, %v250
    %v417 = vpop.permute.xlu0 %416
    %419 = vset.pattern.permute.xlu0 1
    %420 = vperm.xlu0 %419, %v251
    %v421 = vpop.permute.xlu0 %420
    %423 = vset.pattern.permute.xlu0 1
    %424 = vperm.xlu0 %423, %v252
    %v425 = vpop.permute.xlu0 %424
    %427 = vset.pattern.permute.xlu0 1
    %428 = vperm.xlu0 %427, %v253
    %v429 = vpop.permute.xlu0 %428
    %431 = vset.pattern.permute.xlu0 1
    %432 = vperm.xlu0 %431, %v254
    %v433 = vpop.permute.xlu0 %432
    %435 = vset.pattern.permute.xlu0 1
    %436 = vperm.xlu0 %435, %v255
    %v437 = vpop.permute.xlu0 %436
    %v439 = vmul.f32 %v374, %v377
    %v440 = vmul.f32 %v374, %v381
    %v441 = vmul.f32 %v374, %v385
    %v442 = vmul.f32 %v374, %v389
    %v443 = vmul.f32 %v374, %v393
    %v444 = vmul.f32 %v374, %v397
    %v445 = vmul.f32 %v374, %v401
    %v446 = vmul.f32 %v374, %v405
    %v447 = vmul.f32 %v374, %v409
    %v448 = vmul.f32 %v374, %v413
    %v449 = vmul.f32 %v374, %v417
    %v450 = vmul.f32 %v374, %v421
    %v451 = vmul.f32 %v374, %v425
    %v452 = vmul.f32 %v374, %v429
    %v453 = vmul.f32 %v374, %v433
    %v454 = vmul.f32 %v374, %v437
    %v455 = vadd.f32 %v356, %v439
    %v456 = vadd.f32 %v357, %v440
    %v457 = vadd.f32 %v358, %v441
    %v458 = vadd.f32 %v359, %v442
    %v459 = vadd.f32 %v360, %v443
    %v460 = vadd.f32 %v361, %v444
    %v461 = vadd.f32 %v362, %v445
    %v462 = vadd.f32 %v363, %v446
    %v463 = vadd.f32 %v364, %v447
    %v464 = vadd.f32 %v365, %v448
    %v465 = vadd.f32 %v366, %v449
    %v466 = vadd.f32 %v367, %v450
    %v467 = vadd.f32 %v368, %v451
    %v468 = vadd.f32 %v369, %v452
    %v469 = vadd.f32 %v370, %v453
    %v470 = vadd.f32 %v371, %v454
    %vm471 = vcmp.eq.s32.totalorder %v256, 2
    %v472 = vsel %vm471, 1, 0
    %v473 = vcvt.s32.f32 %v472
    %474 = vset.pattern.permute.xlu0 2
    %475 = vperm.xlu0 %474, %v240
    %v476 = vpop.permute.xlu0 %475
    %478 = vset.pattern.permute.xlu0 2
    %479 = vperm.xlu0 %478, %v241
    %v480 = vpop.permute.xlu0 %479
    %482 = vset.pattern.permute.xlu0 2
    %483 = vperm.xlu0 %482, %v242
    %v484 = vpop.permute.xlu0 %483
    %486 = vset.pattern.permute.xlu0 2
    %487 = vperm.xlu0 %486, %v243
    %v488 = vpop.permute.xlu0 %487
    %490 = vset.pattern.permute.xlu0 2
    %491 = vperm.xlu0 %490, %v244
    %v492 = vpop.permute.xlu0 %491
    %494 = vset.pattern.permute.xlu0 2
    %495 = vperm.xlu0 %494, %v245
    %v496 = vpop.permute.xlu0 %495
    %498 = vset.pattern.permute.xlu0 2
    %499 = vperm.xlu0 %498, %v246
    %v500 = vpop.permute.xlu0 %499
    %502 = vset.pattern.permute.xlu0 2
    %503 = vperm.xlu0 %502, %v247
    %v504 = vpop.permute.xlu0 %503
    %506 = vset.pattern.permute.xlu0 2
    %507 = vperm.xlu0 %506, %v248
    %v508 = vpop.permute.xlu0 %507
    %510 = vset.pattern.permute.xlu0 2
    %511 = vperm.xlu0 %510, %v249
    %v512 = vpop.permute.xlu0 %511
    %514 = vset.pattern.permute.xlu0 2
    %515 = vperm.xlu0 %514, %v250
    %v516 = vpop.permute.xlu0 %515
    %518 = vset.pattern.permute.xlu0 2
    %519 = vperm.xlu0 %518, %v251
    %v520 = vpop.permute.xlu0 %519
    %522 = vset.pattern.permute.xlu0 2
    %523 = vperm.xlu0 %522, %v252
    %v524 = vpop.permute.xlu0 %523
    %526 = vset.pattern.permute.xlu0 2
    %527 = vperm.xlu0 %526, %v253
    %v528 = vpop.permute.xlu0 %527
    %530 = vset.pattern.permute.xlu0 2
    %531 = vperm.xlu0 %530, %v254
    %v532 = vpop.permute.xlu0 %531
    %534 = vset.pattern.permute.xlu0 2
    %535 = vperm.xlu0 %534, %v255
    %v536 = vpop.permute.xlu0 %535
    %v538 = vmul.f32 %v473, %v476
    %v539 = vmul.f32 %v473, %v480
    %v540 = vmul.f32 %v473, %v484
    %v541 = vmul.f32 %v473, %v488
    %v542 = vmul.f32 %v473, %v492
    %v543 = vmul.f32 %v473, %v496
    %v544 = vmul.f32 %v473, %v500
    %v545 = vmul.f32 %v473, %v504
    %v546 = vmul.f32 %v473, %v508
    %v547 = vmul.f32 %v473, %v512
    %v548 = vmul.f32 %v473, %v516
    %v549 = vmul.f32 %v473, %v520
    %v550 = vmul.f32 %v473, %v524
    %v551 = vmul.f32 %v473, %v528
    %v552 = vmul.f32 %v473, %v532
    %v553 = vmul.f32 %v473, %v536
    %v554 = vadd.f32 %v455, %v538
    %v555 = vadd.f32 %v456, %v539
    %v556 = vadd.f32 %v457, %v540
    %v557 = vadd.f32 %v458, %v541
    %v558 = vadd.f32 %v459, %v542
    %v559 = vadd.f32 %v460, %v543
    %v560 = vadd.f32 %v461, %v544
    %v561 = vadd.f32 %v462, %v545
    %v562 = vadd.f32 %v463, %v546
    %v563 = vadd.f32 %v464, %v547
    %v564 = vadd.f32 %v465, %v548
    %v565 = vadd.f32 %v466, %v549
    %v566 = vadd.f32 %v467, %v550
    %v567 = vadd.f32 %v468, %v551
    %v568 = vadd.f32 %v469, %v552
    %v569 = vadd.f32 %v470, %v553
    %vm570 = vcmp.eq.s32.totalorder %v256, 3
    %v571 = vsel %vm570, 1, 0
    %v572 = vcvt.s32.f32 %v571
    %573 = vset.pattern.permute.xlu0 3
    %574 = vperm.xlu0 %573, %v240
    %v575 = vpop.permute.xlu0 %574
    %577 = vset.pattern.permute.xlu0 3
    %578 = vperm.xlu0 %577, %v241
    %v579 = vpop.permute.xlu0 %578
    %581 = vset.pattern.permute.xlu0 3
    %582 = vperm.xlu0 %581, %v242
    %v583 = vpop.permute.xlu0 %582
    %585 = vset.pattern.permute.xlu0 3
    %586 = vperm.xlu0 %585, %v243
    %v587 = vpop.permute.xlu0 %586
    %589 = vset.pattern.permute.xlu0 3
    %590 = vperm.xlu0 %589, %v244
    %v591 = vpop.permute.xlu0 %590
    %593 = vset.pattern.permute.xlu0 3
    %594 = vperm.xlu0 %593, %v245
    %v595 = vpop.permute.xlu0 %594
    %597 = vset.pattern.permute.xlu0 3
    %598 = vperm.xlu0 %597, %v246
    %v599 = vpop.permute.xlu0 %598
    %601 = vset.pattern.permute.xlu0 3
    %602 = vperm.xlu0 %601, %v247
    %v603 = vpop.permute.xlu0 %602
    %605 = vset.pattern.permute.xlu0 3
    %606 = vperm.xlu0 %605, %v248
    %v607 = vpop.permute.xlu0 %606
    %609 = vset.pattern.permute.xlu0 3
    %610 = vperm.xlu0 %609, %v249
    %v611 = vpop.permute.xlu0 %610
    %613 = vset.pattern.permute.xlu0 3
    %614 = vperm.xlu0 %613, %v250
    %v615 = vpop.permute.xlu0 %614
    %617 = vset.pattern.permute.xlu0 3
    %618 = vperm.xlu0 %617, %v251
    %v619 = vpop.permute.xlu0 %618
    %621 = vset.pattern.permute.xlu0 3
    %622 = vperm.xlu0 %621, %v252
    %v623 = vpop.permute.xlu0 %622
    %625 = vset.pattern.permute.xlu0 3
    %626 = vperm.xlu0 %625, %v253
    %v627 = vpop.permute.xlu0 %626
    %629 = vset.pattern.permute.xlu0 3
    %630 = vperm.xlu0 %629, %v254
    %v631 = vpop.permute.xlu0 %630
    %633 = vset.pattern.permute.xlu0 3
    %634 = vperm.xlu0 %633, %v255
    %v635 = vpop.permute.xlu0 %634
    %v637 = vmul.f32 %v572, %v575
    %v638 = vmul.f32 %v572, %v579
    %v639 = vmul.f32 %v572, %v583
    %v640 = vmul.f32 %v572, %v587
    %v641 = vmul.f32 %v572, %v591
    %v642 = vmul.f32 %v572, %v595
    %v643 = vmul.f32 %v572, %v599
    %v644 = vmul.f32 %v572, %v603
    %v645 = vmul.f32 %v572, %v607
    %v646 = vmul.f32 %v572, %v611
    %v647 = vmul.f32 %v572, %v615
    %v648 = vmul.f32 %v572, %v619
    %v649 = vmul.f32 %v572, %v623
    %v650 = vmul.f32 %v572, %v627
    %v651 = vmul.f32 %v572, %v631
    %v652 = vmul.f32 %v572, %v635
    %v653 = vadd.f32 %v554, %v637
    %v654 = vadd.f32 %v555, %v638
    %v655 = vadd.f32 %v556, %v639
    %v656 = vadd.f32 %v557, %v640
    %v657 = vadd.f32 %v558, %v641
    %v658 = vadd.f32 %v559, %v642
    %v659 = vadd.f32 %v560, %v643
    %v660 = vadd.f32 %v561, %v644
    %v661 = vadd.f32 %v562, %v645
    %v662 = vadd.f32 %v563, %v646
    %v663 = vadd.f32 %v564, %v647
    %v664 = vadd.f32 %v565, %v648
    %v665 = vadd.f32 %v566, %v649
    %v666 = vadd.f32 %v567, %v650
    %v667 = vadd.f32 %v568, %v651
    %v668 = vadd.f32 %v569, %v652
    %vm669 = vcmp.eq.s32.totalorder %v256, 4
    %v670 = vsel %vm669, 1, 0
    %v671 = vcvt.s32.f32 %v670
    %672 = vset.pattern.permute.xlu0 4
    %673 = vperm.xlu0 %672, %v240
    %v674 = vpop.permute.xlu0 %673
    %676 = vset.pattern.permute.xlu0 4
    %677 = vperm.xlu0 %676, %v241
    %v678 = vpop.permute.xlu0 %677
    %680 = vset.pattern.permute.xlu0 4
    %681 = vperm.xlu0 %680, %v242
    %v682 = vpop.permute.xlu0 %681
    %684 = vset.pattern.permute.xlu0 4
    %685 = vperm.xlu0 %684, %v243
    %v686 = vpop.permute.xlu0 %685
    %688 = vset.pattern.permute.xlu0 4
    %689 = vperm.xlu0 %688, %v244
    %v690 = vpop.permute.xlu0 %689
    %692 = vset.pattern.permute.xlu0 4
    %693 = vperm.xlu0 %692, %v245
    %v694 = vpop.permute.xlu0 %693
    %696 = vset.pattern.permute.xlu0 4
    %697 = vperm.xlu0 %696, %v246
    %v698 = vpop.permute.xlu0 %697
    %700 = vset.pattern.permute.xlu0 4
    %701 = vperm.xlu0 %700, %v247
    %v702 = vpop.permute.xlu0 %701
    %704 = vset.pattern.permute.xlu0 4
    %705 = vperm.xlu0 %704, %v248
    %v706 = vpop.permute.xlu0 %705
    %708 = vset.pattern.permute.xlu0 4
    %709 = vperm.xlu0 %708, %v249
    %v710 = vpop.permute.xlu0 %709
    %712 = vset.pattern.permute.xlu0 4
    %713 = vperm.xlu0 %712, %v250
    %v714 = vpop.permute.xlu0 %713
    %716 = vset.pattern.permute.xlu0 4
    %717 = vperm.xlu0 %716, %v251
    %v718 = vpop.permute.xlu0 %717
    %720 = vset.pattern.permute.xlu0 4
    %721 = vperm.xlu0 %720, %v252
    %v722 = vpop.permute.xlu0 %721
    %724 = vset.pattern.permute.xlu0 4
    %725 = vperm.xlu0 %724, %v253
    %v726 = vpop.permute.xlu0 %725
    %728 = vset.pattern.permute.xlu0 4
    %729 = vperm.xlu0 %728, %v254
    %v730 = vpop.permute.xlu0 %729
    %732 = vset.pattern.permute.xlu0 4
    %733 = vperm.xlu0 %732, %v255
    %v734 = vpop.permute.xlu0 %733
    %v736 = vmul.f32 %v671, %v674
    %v737 = vmul.f32 %v671, %v678
    %v738 = vmul.f32 %v671, %v682
    %v739 = vmul.f32 %v671, %v686
    %v740 = vmul.f32 %v671, %v690
    %v741 = vmul.f32 %v671, %v694
    %v742 = vmul.f32 %v671, %v698
    %v743 = vmul.f32 %v671, %v702
    %v744 = vmul.f32 %v671, %v706
    %v745 = vmul.f32 %v671, %v710
    %v746 = vmul.f32 %v671, %v714
    %v747 = vmul.f32 %v671, %v718
    %v748 = vmul.f32 %v671, %v722
    %v749 = vmul.f32 %v671, %v726
    %v750 = vmul.f32 %v671, %v730
    %v751 = vmul.f32 %v671, %v734
    %v752 = vadd.f32 %v653, %v736
    %v753 = vadd.f32 %v654, %v737
    %v754 = vadd.f32 %v655, %v738
    %v755 = vadd.f32 %v656, %v739
    %v756 = vadd.f32 %v657, %v740
    %v757 = vadd.f32 %v658, %v741
    %v758 = vadd.f32 %v659, %v742
    %v759 = vadd.f32 %v660, %v743
    %v760 = vadd.f32 %v661, %v744
    %v761 = vadd.f32 %v662, %v745
    %v762 = vadd.f32 %v663, %v746
    %v763 = vadd.f32 %v664, %v747
    %v764 = vadd.f32 %v665, %v748
    %v765 = vadd.f32 %v666, %v749
    %v766 = vadd.f32 %v667, %v750
    %v767 = vadd.f32 %v668, %v751
    %vm768 = vcmp.eq.s32.totalorder %v256, 5
    %v769 = vsel %vm768, 1, 0
    %v770 = vcvt.s32.f32 %v769
    %771 = vset.pattern.permute.xlu0 5
    %772 = vperm.xlu0 %771, %v240
    %v773 = vpop.permute.xlu0 %772
    %775 = vset.pattern.permute.xlu0 5
    %776 = vperm.xlu0 %775, %v241
    %v777 = vpop.permute.xlu0 %776
    %779 = vset.pattern.permute.xlu0 5
    %780 = vperm.xlu0 %779, %v242
    %v781 = vpop.permute.xlu0 %780
    %783 = vset.pattern.permute.xlu0 5
    %784 = vperm.xlu0 %783, %v243
    %v785 = vpop.permute.xlu0 %784
    %787 = vset.pattern.permute.xlu0 5
    %788 = vperm.xlu0 %787, %v244
    %v789 = vpop.permute.xlu0 %788
    %791 = vset.pattern.permute.xlu0 5
    %792 = vperm.xlu0 %791, %v245
    %v793 = vpop.permute.xlu0 %792
    %795 = vset.pattern.permute.xlu0 5
    %796 = vperm.xlu0 %795, %v246
    %v797 = vpop.permute.xlu0 %796
    %799 = vset.pattern.permute.xlu0 5
    %800 = vperm.xlu0 %799, %v247
    %v801 = vpop.permute.xlu0 %800
    %803 = vset.pattern.permute.xlu0 5
    %804 = vperm.xlu0 %803, %v248
    %v805 = vpop.permute.xlu0 %804
    %807 = vset.pattern.permute.xlu0 5
    %808 = vperm.xlu0 %807, %v249
    %v809 = vpop.permute.xlu0 %808
    %811 = vset.pattern.permute.xlu0 5
    %812 = vperm.xlu0 %811, %v250
    %v813 = vpop.permute.xlu0 %812
    %815 = vset.pattern.permute.xlu0 5
    %816 = vperm.xlu0 %815, %v251
    %v817 = vpop.permute.xlu0 %816
    %819 = vset.pattern.permute.xlu0 5
    %820 = vperm.xlu0 %819, %v252
    %v821 = vpop.permute.xlu0 %820
    %823 = vset.pattern.permute.xlu0 5
    %824 = vperm.xlu0 %823, %v253
    %v825 = vpop.permute.xlu0 %824
    %827 = vset.pattern.permute.xlu0 5
    %828 = vperm.xlu0 %827, %v254
    %v829 = vpop.permute.xlu0 %828
    %831 = vset.pattern.permute.xlu0 5
    %832 = vperm.xlu0 %831, %v255
    %v833 = vpop.permute.xlu0 %832
    %v835 = vmul.f32 %v770, %v773
    %v836 = vmul.f32 %v770, %v777
    %v837 = vmul.f32 %v770, %v781
    %v838 = vmul.f32 %v770, %v785
    %v839 = vmul.f32 %v770, %v789
    %v840 = vmul.f32 %v770, %v793
    %v841 = vmul.f32 %v770, %v797
    %v842 = vmul.f32 %v770, %v801
    %v843 = vmul.f32 %v770, %v805
    %v844 = vmul.f32 %v770, %v809
    %v845 = vmul.f32 %v770, %v813
    %v846 = vmul.f32 %v770, %v817
    %v847 = vmul.f32 %v770, %v821
    %v848 = vmul.f32 %v770, %v825
    %v849 = vmul.f32 %v770, %v829
    %v850 = vmul.f32 %v770, %v833
    %v851 = vadd.f32 %v752, %v835
    %v852 = vadd.f32 %v753, %v836
    %v853 = vadd.f32 %v754, %v837
    %v854 = vadd.f32 %v755, %v838
    %v855 = vadd.f32 %v756, %v839
    %v856 = vadd.f32 %v757, %v840
    %v857 = vadd.f32 %v758, %v841
    %v858 = vadd.f32 %v759, %v842
    %v859 = vadd.f32 %v760, %v843
    %v860 = vadd.f32 %v761, %v844
    %v861 = vadd.f32 %v762, %v845
    %v862 = vadd.f32 %v763, %v846
    %v863 = vadd.f32 %v764, %v847
    %v864 = vadd.f32 %v765, %v848
    %v865 = vadd.f32 %v766, %v849
    %v866 = vadd.f32 %v767, %v850
    %vm867 = vcmp.eq.s32.totalorder %v256, 6
    %v868 = vsel %vm867, 1, 0
    %v869 = vcvt.s32.f32 %v868
    %870 = vset.pattern.permute.xlu0 6
    %871 = vperm.xlu0 %870, %v240
    %v872 = vpop.permute.xlu0 %871
    %874 = vset.pattern.permute.xlu0 6
    %875 = vperm.xlu0 %874, %v241
    %v876 = vpop.permute.xlu0 %875
    %878 = vset.pattern.permute.xlu0 6
    %879 = vperm.xlu0 %878, %v242
    %v880 = vpop.permute.xlu0 %879
    %882 = vset.pattern.permute.xlu0 6
    %883 = vperm.xlu0 %882, %v243
    %v884 = vpop.permute.xlu0 %883
    %886 = vset.pattern.permute.xlu0 6
    %887 = vperm.xlu0 %886, %v244
    %v888 = vpop.permute.xlu0 %887
    %890 = vset.pattern.permute.xlu0 6
    %891 = vperm.xlu0 %890, %v245
    %v892 = vpop.permute.xlu0 %891
    %894 = vset.pattern.permute.xlu0 6
    %895 = vperm.xlu0 %894, %v246
    %v896 = vpop.permute.xlu0 %895
    %898 = vset.pattern.permute.xlu0 6
    %899 = vperm.xlu0 %898, %v247
    %v900 = vpop.permute.xlu0 %899
    %902 = vset.pattern.permute.xlu0 6
    %903 = vperm.xlu0 %902, %v248
    %v904 = vpop.permute.xlu0 %903
    %906 = vset.pattern.permute.xlu0 6
    %907 = vperm.xlu0 %906, %v249
    %v908 = vpop.permute.xlu0 %907
    %910 = vset.pattern.permute.xlu0 6
    %911 = vperm.xlu0 %910, %v250
    %v912 = vpop.permute.xlu0 %911
    %914 = vset.pattern.permute.xlu0 6
    %915 = vperm.xlu0 %914, %v251
    %v916 = vpop.permute.xlu0 %915
    %918 = vset.pattern.permute.xlu0 6
    %919 = vperm.xlu0 %918, %v252
    %v920 = vpop.permute.xlu0 %919
    %922 = vset.pattern.permute.xlu0 6
    %923 = vperm.xlu0 %922, %v253
    %v924 = vpop.permute.xlu0 %923
    %926 = vset.pattern.permute.xlu0 6
    %927 = vperm.xlu0 %926, %v254
    %v928 = vpop.permute.xlu0 %927
    %930 = vset.pattern.permute.xlu0 6
    %931 = vperm.xlu0 %930, %v255
    %v932 = vpop.permute.xlu0 %931
    %v934 = vmul.f32 %v869, %v872
    %v935 = vmul.f32 %v869, %v876
    %v936 = vmul.f32 %v869, %v880
    %v937 = vmul.f32 %v869, %v884
    %v938 = vmul.f32 %v869, %v888
    %v939 = vmul.f32 %v869, %v892
    %v940 = vmul.f32 %v869, %v896
    %v941 = vmul.f32 %v869, %v900
    %v942 = vmul.f32 %v869, %v904
    %v943 = vmul.f32 %v869, %v908
    %v944 = vmul.f32 %v869, %v912
    %v945 = vmul.f32 %v869, %v916
    %v946 = vmul.f32 %v869, %v920
    %v947 = vmul.f32 %v869, %v924
    %v948 = vmul.f32 %v869, %v928
    %v949 = vmul.f32 %v869, %v932
    %v950 = vadd.f32 %v851, %v934
    %v951 = vadd.f32 %v852, %v935
    %v952 = vadd.f32 %v853, %v936
    %v953 = vadd.f32 %v854, %v937
    %v954 = vadd.f32 %v855, %v938
    %v955 = vadd.f32 %v856, %v939
    %v956 = vadd.f32 %v857, %v940
    %v957 = vadd.f32 %v858, %v941
    %v958 = vadd.f32 %v859, %v942
    %v959 = vadd.f32 %v860, %v943
    %v960 = vadd.f32 %v861, %v944
    %v961 = vadd.f32 %v862, %v945
    %v962 = vadd.f32 %v863, %v946
    %v963 = vadd.f32 %v864, %v947
    %v964 = vadd.f32 %v865, %v948
    %v965 = vadd.f32 %v866, %v949
    %vm966 = vcmp.eq.s32.totalorder %v256, 7
    %v967 = vsel %vm966, 1, 0
    %v968 = vcvt.s32.f32 %v967
    %969 = vset.pattern.permute.xlu0 7
    %970 = vperm.xlu0 %969, %v240
    %v971 = vpop.permute.xlu0 %970
    %973 = vset.pattern.permute.xlu0 7
    %974 = vperm.xlu0 %973, %v241
    %v975 = vpop.permute.xlu0 %974
    %977 = vset.pattern.permute.xlu0 7
    %978 = vperm.xlu0 %977, %v242
    %v979 = vpop.permute.xlu0 %978
    %981 = vset.pattern.permute.xlu0 7
    %982 = vperm.xlu0 %981, %v243
    %v983 = vpop.permute.xlu0 %982
    %985 = vset.pattern.permute.xlu0 7
    %986 = vperm.xlu0 %985, %v244
    %v987 = vpop.permute.xlu0 %986
    %989 = vset.pattern.permute.xlu0 7
    %990 = vperm.xlu0 %989, %v245
    %v991 = vpop.permute.xlu0 %990
    %993 = vset.pattern.permute.xlu0 7
    %994 = vperm.xlu0 %993, %v246
    %v995 = vpop.permute.xlu0 %994
    %997 = vset.pattern.permute.xlu0 7
    %998 = vperm.xlu0 %997, %v247
    %v999 = vpop.permute.xlu0 %998
    %1001 = vset.pattern.permute.xlu0 7
    %1002 = vperm.xlu0 %1001, %v248
    %v1003 = vpop.permute.xlu0 %1002
    %1005 = vset.pattern.permute.xlu0 7
    %1006 = vperm.xlu0 %1005, %v249
    %v1007 = vpop.permute.xlu0 %1006
    %1009 = vset.pattern.permute.xlu0 7
    %1010 = vperm.xlu0 %1009, %v250
    %v1011 = vpop.permute.xlu0 %1010
    %1013 = vset.pattern.permute.xlu0 7
    %1014 = vperm.xlu0 %1013, %v251
    %v1015 = vpop.permute.xlu0 %1014
    %1017 = vset.pattern.permute.xlu0 7
    %1018 = vperm.xlu0 %1017, %v252
    %v1019 = vpop.permute.xlu0 %1018
    %1021 = vset.pattern.permute.xlu0 7
    %1022 = vperm.xlu0 %1021, %v253
    %v1023 = vpop.permute.xlu0 %1022
    %1025 = vset.pattern.permute.xlu0 7
    %1026 = vperm.xlu0 %1025, %v254
    %v1027 = vpop.permute.xlu0 %1026
    %1029 = vset.pattern.permute.xlu0 7
    %1030 = vperm.xlu0 %1029, %v255
    %v1031 = vpop.permute.xlu0 %1030
    %v1033 = vmul.f32 %v968, %v971
    %v1034 = vmul.f32 %v968, %v975
    %v1035 = vmul.f32 %v968, %v979
    %v1036 = vmul.f32 %v968, %v983
    %v1037 = vmul.f32 %v968, %v987
    %v1038 = vmul.f32 %v968, %v991
    %v1039 = vmul.f32 %v968, %v995
    %v1040 = vmul.f32 %v968, %v999
    %v1041 = vmul.f32 %v968, %v1003
    %v1042 = vmul.f32 %v968, %v1007
    %v1043 = vmul.f32 %v968, %v1011
    %v1044 = vmul.f32 %v968, %v1015
    %v1045 = vmul.f32 %v968, %v1019
    %v1046 = vmul.f32 %v968, %v1023
    %v1047 = vmul.f32 %v968, %v1027
    %v1048 = vmul.f32 %v968, %v1031
    %v1049 = vadd.f32 %v950, %v1033
    %v1050 = vadd.f32 %v951, %v1034
    %v1051 = vadd.f32 %v952, %v1035
    %v1052 = vadd.f32 %v953, %v1036
    %v1053 = vadd.f32 %v954, %v1037
    %v1054 = vadd.f32 %v955, %v1038
    %v1055 = vadd.f32 %v956, %v1039
    %v1056 = vadd.f32 %v957, %v1040
    %v1057 = vadd.f32 %v958, %v1041
    %v1058 = vadd.f32 %v959, %v1042
    %v1059 = vadd.f32 %v960, %v1043
    %v1060 = vadd.f32 %v961, %v1044
    %v1061 = vadd.f32 %v962, %v1045
    %v1062 = vadd.f32 %v963, %v1046
    %v1063 = vadd.f32 %v964, %v1047
    %v1064 = vadd.f32 %v965, %v1048
    %vm1065 = vcmp.eq.s32.totalorder %v256, 8
    %v1066 = vsel %vm1065, 1, 0
    %v1067 = vcvt.s32.f32 %v1066
    %1068 = vset.pattern.permute.xlu0 8
    %1069 = vperm.xlu0 %1068, %v240
    %v1070 = vpop.permute.xlu0 %1069
    %1072 = vset.pattern.permute.xlu0 8
    %1073 = vperm.xlu0 %1072, %v241
    %v1074 = vpop.permute.xlu0 %1073
    %1076 = vset.pattern.permute.xlu0 8
    %1077 = vperm.xlu0 %1076, %v242
    %v1078 = vpop.permute.xlu0 %1077
    %1080 = vset.pattern.permute.xlu0 8
    %1081 = vperm.xlu0 %1080, %v243
    %v1082 = vpop.permute.xlu0 %1081
    %1084 = vset.pattern.permute.xlu0 8
    %1085 = vperm.xlu0 %1084, %v244
    %v1086 = vpop.permute.xlu0 %1085
    %1088 = vset.pattern.permute.xlu0 8
    %1089 = vperm.xlu0 %1088, %v245
    %v1090 = vpop.permute.xlu0 %1089
    %1092 = vset.pattern.permute.xlu0 8
    %1093 = vperm.xlu0 %1092, %v246
    %v1094 = vpop.permute.xlu0 %1093
    %1096 = vset.pattern.permute.xlu0 8
    %1097 = vperm.xlu0 %1096, %v247
    %v1098 = vpop.permute.xlu0 %1097
    %1100 = vset.pattern.permute.xlu0 8
    %1101 = vperm.xlu0 %1100, %v248
    %v1102 = vpop.permute.xlu0 %1101
    %1104 = vset.pattern.permute.xlu0 8
    %1105 = vperm.xlu0 %1104, %v249
    %v1106 = vpop.permute.xlu0 %1105
    %1108 = vset.pattern.permute.xlu0 8
    %1109 = vperm.xlu0 %1108, %v250
    %v1110 = vpop.permute.xlu0 %1109
    %1112 = vset.pattern.permute.xlu0 8
    %1113 = vperm.xlu0 %1112, %v251
    %v1114 = vpop.permute.xlu0 %1113
    %1116 = vset.pattern.permute.xlu0 8
    %1117 = vperm.xlu0 %1116, %v252
    %v1118 = vpop.permute.xlu0 %1117
    %1120 = vset.pattern.permute.xlu0 8
    %1121 = vperm.xlu0 %1120, %v253
    %v1122 = vpop.permute.xlu0 %1121
    %1124 = vset.pattern.permute.xlu0 8
    %1125 = vperm.xlu0 %1124, %v254
    %v1126 = vpop.permute.xlu0 %1125
    %1128 = vset.pattern.permute.xlu0 8
    %1129 = vperm.xlu0 %1128, %v255
    %v1130 = vpop.permute.xlu0 %1129
    %v1132 = vmul.f32 %v1067, %v1070
    %v1133 = vmul.f32 %v1067, %v1074
    %v1134 = vmul.f32 %v1067, %v1078
    %v1135 = vmul.f32 %v1067, %v1082
    %v1136 = vmul.f32 %v1067, %v1086
    %v1137 = vmul.f32 %v1067, %v1090
    %v1138 = vmul.f32 %v1067, %v1094
    %v1139 = vmul.f32 %v1067, %v1098
    %v1140 = vmul.f32 %v1067, %v1102
    %v1141 = vmul.f32 %v1067, %v1106
    %v1142 = vmul.f32 %v1067, %v1110
    %v1143 = vmul.f32 %v1067, %v1114
    %v1144 = vmul.f32 %v1067, %v1118
    %v1145 = vmul.f32 %v1067, %v1122
    %v1146 = vmul.f32 %v1067, %v1126
    %v1147 = vmul.f32 %v1067, %v1130
    %v1148 = vadd.f32 %v1049, %v1132
    %v1149 = vadd.f32 %v1050, %v1133
    %v1150 = vadd.f32 %v1051, %v1134
    %v1151 = vadd.f32 %v1052, %v1135
    %v1152 = vadd.f32 %v1053, %v1136
    %v1153 = vadd.f32 %v1054, %v1137
    %v1154 = vadd.f32 %v1055, %v1138
    %v1155 = vadd.f32 %v1056, %v1139
    %v1156 = vadd.f32 %v1057, %v1140
    %v1157 = vadd.f32 %v1058, %v1141
    %v1158 = vadd.f32 %v1059, %v1142
    %v1159 = vadd.f32 %v1060, %v1143
    %v1160 = vadd.f32 %v1061, %v1144
    %v1161 = vadd.f32 %v1062, %v1145
    %v1162 = vadd.f32 %v1063, %v1146
    %v1163 = vadd.f32 %v1064, %v1147
    %vm1164 = vcmp.eq.s32.totalorder %v256, 9
    %v1165 = vsel %vm1164, 1, 0
    %v1166 = vcvt.s32.f32 %v1165
    %1167 = vset.pattern.permute.xlu0 9
    %1168 = vperm.xlu0 %1167, %v240
    %v1169 = vpop.permute.xlu0 %1168
    %1171 = vset.pattern.permute.xlu0 9
    %1172 = vperm.xlu0 %1171, %v241
    %v1173 = vpop.permute.xlu0 %1172
    %1175 = vset.pattern.permute.xlu0 9
    %1176 = vperm.xlu0 %1175, %v242
    %v1177 = vpop.permute.xlu0 %1176
    %1179 = vset.pattern.permute.xlu0 9
    %1180 = vperm.xlu0 %1179, %v243
    %v1181 = vpop.permute.xlu0 %1180
    %1183 = vset.pattern.permute.xlu0 9
    %1184 = vperm.xlu0 %1183, %v244
    %v1185 = vpop.permute.xlu0 %1184
    %1187 = vset.pattern.permute.xlu0 9
    %1188 = vperm.xlu0 %1187, %v245
    %v1189 = vpop.permute.xlu0 %1188
    %1191 = vset.pattern.permute.xlu0 9
    %1192 = vperm.xlu0 %1191, %v246
    %v1193 = vpop.permute.xlu0 %1192
    %1195 = vset.pattern.permute.xlu0 9
    %1196 = vperm.xlu0 %1195, %v247
    %v1197 = vpop.permute.xlu0 %1196
    %1199 = vset.pattern.permute.xlu0 9
    %1200 = vperm.xlu0 %1199, %v248
    %v1201 = vpop.permute.xlu0 %1200
    %1203 = vset.pattern.permute.xlu0 9
    %1204 = vperm.xlu0 %1203, %v249
    %v1205 = vpop.permute.xlu0 %1204
    %1207 = vset.pattern.permute.xlu0 9
    %1208 = vperm.xlu0 %1207, %v250
    %v1209 = vpop.permute.xlu0 %1208
    %1211 = vset.pattern.permute.xlu0 9
    %1212 = vperm.xlu0 %1211, %v251
    %v1213 = vpop.permute.xlu0 %1212
    %1215 = vset.pattern.permute.xlu0 9
    %1216 = vperm.xlu0 %1215, %v252
    %v1217 = vpop.permute.xlu0 %1216
    %1219 = vset.pattern.permute.xlu0 9
    %1220 = vperm.xlu0 %1219, %v253
    %v1221 = vpop.permute.xlu0 %1220
    %1223 = vset.pattern.permute.xlu0 9
    %1224 = vperm.xlu0 %1223, %v254
    %v1225 = vpop.permute.xlu0 %1224
    %1227 = vset.pattern.permute.xlu0 9
    %1228 = vperm.xlu0 %1227, %v255
    %v1229 = vpop.permute.xlu0 %1228
    %v1231 = vmul.f32 %v1166, %v1169
    %v1232 = vmul.f32 %v1166, %v1173
    %v1233 = vmul.f32 %v1166, %v1177
    %v1234 = vmul.f32 %v1166, %v1181
    %v1235 = vmul.f32 %v1166, %v1185
    %v1236 = vmul.f32 %v1166, %v1189
    %v1237 = vmul.f32 %v1166, %v1193
    %v1238 = vmul.f32 %v1166, %v1197
    %v1239 = vmul.f32 %v1166, %v1201
    %v1240 = vmul.f32 %v1166, %v1205
    %v1241 = vmul.f32 %v1166, %v1209
    %v1242 = vmul.f32 %v1166, %v1213
    %v1243 = vmul.f32 %v1166, %v1217
    %v1244 = vmul.f32 %v1166, %v1221
    %v1245 = vmul.f32 %v1166, %v1225
    %v1246 = vmul.f32 %v1166, %v1229
    %v1247 = vadd.f32 %v1148, %v1231
    %v1248 = vadd.f32 %v1149, %v1232
    %v1249 = vadd.f32 %v1150, %v1233
    %v1250 = vadd.f32 %v1151, %v1234
    %v1251 = vadd.f32 %v1152, %v1235
    %v1252 = vadd.f32 %v1153, %v1236
    %v1253 = vadd.f32 %v1154, %v1237
    %v1254 = vadd.f32 %v1155, %v1238
    %v1255 = vadd.f32 %v1156, %v1239
    %v1256 = vadd.f32 %v1157, %v1240
    %v1257 = vadd.f32 %v1158, %v1241
    %v1258 = vadd.f32 %v1159, %v1242
    %v1259 = vadd.f32 %v1160, %v1243
    %v1260 = vadd.f32 %v1161, %v1244
    %v1261 = vadd.f32 %v1162, %v1245
    %v1262 = vadd.f32 %v1163, %v1246
    %vm1263 = vcmp.eq.s32.totalorder %v256, 10
    %v1264 = vsel %vm1263, 1, 0
    %v1265 = vcvt.s32.f32 %v1264
    %1266 = vset.pattern.permute.xlu0 10
    %1267 = vperm.xlu0 %1266, %v240
    %v1268 = vpop.permute.xlu0 %1267
    %1270 = vset.pattern.permute.xlu0 10
    %1271 = vperm.xlu0 %1270, %v241
    %v1272 = vpop.permute.xlu0 %1271
    %1274 = vset.pattern.permute.xlu0 10
    %1275 = vperm.xlu0 %1274, %v242
    %v1276 = vpop.permute.xlu0 %1275
    %1278 = vset.pattern.permute.xlu0 10
    %1279 = vperm.xlu0 %1278, %v243
    %v1280 = vpop.permute.xlu0 %1279
    %1282 = vset.pattern.permute.xlu0 10
    %1283 = vperm.xlu0 %1282, %v244
    %v1284 = vpop.permute.xlu0 %1283
    %1286 = vset.pattern.permute.xlu0 10
    %1287 = vperm.xlu0 %1286, %v245
    %v1288 = vpop.permute.xlu0 %1287
    %1290 = vset.pattern.permute.xlu0 10
    %1291 = vperm.xlu0 %1290, %v246
    %v1292 = vpop.permute.xlu0 %1291
    %1294 = vset.pattern.permute.xlu0 10
    %1295 = vperm.xlu0 %1294, %v247
    %v1296 = vpop.permute.xlu0 %1295
    %1298 = vset.pattern.permute.xlu0 10
    %1299 = vperm.xlu0 %1298, %v248
    %v1300 = vpop.permute.xlu0 %1299
    %1302 = vset.pattern.permute.xlu0 10
    %1303 = vperm.xlu0 %1302, %v249
    %v1304 = vpop.permute.xlu0 %1303
    %1306 = vset.pattern.permute.xlu0 10
    %1307 = vperm.xlu0 %1306, %v250
    %v1308 = vpop.permute.xlu0 %1307
    %1310 = vset.pattern.permute.xlu0 10
    %1311 = vperm.xlu0 %1310, %v251
    %v1312 = vpop.permute.xlu0 %1311
    %1314 = vset.pattern.permute.xlu0 10
    %1315 = vperm.xlu0 %1314, %v252
    %v1316 = vpop.permute.xlu0 %1315
    %1318 = vset.pattern.permute.xlu0 10
    %1319 = vperm.xlu0 %1318, %v253
    %v1320 = vpop.permute.xlu0 %1319
    %1322 = vset.pattern.permute.xlu0 10
    %1323 = vperm.xlu0 %1322, %v254
    %v1324 = vpop.permute.xlu0 %1323
    %1326 = vset.pattern.permute.xlu0 10
    %1327 = vperm.xlu0 %1326, %v255
    %v1328 = vpop.permute.xlu0 %1327
    %v1330 = vmul.f32 %v1265, %v1268
    %v1331 = vmul.f32 %v1265, %v1272
    %v1332 = vmul.f32 %v1265, %v1276
    %v1333 = vmul.f32 %v1265, %v1280
    %v1334 = vmul.f32 %v1265, %v1284
    %v1335 = vmul.f32 %v1265, %v1288
    %v1336 = vmul.f32 %v1265, %v1292
    %v1337 = vmul.f32 %v1265, %v1296
    %v1338 = vmul.f32 %v1265, %v1300
    %v1339 = vmul.f32 %v1265, %v1304
    %v1340 = vmul.f32 %v1265, %v1308
    %v1341 = vmul.f32 %v1265, %v1312
    %v1342 = vmul.f32 %v1265, %v1316
    %v1343 = vmul.f32 %v1265, %v1320
    %v1344 = vmul.f32 %v1265, %v1324
    %v1345 = vmul.f32 %v1265, %v1328
    %v1346 = vadd.f32 %v1247, %v1330
    %v1347 = vadd.f32 %v1248, %v1331
    %v1348 = vadd.f32 %v1249, %v1332
    %v1349 = vadd.f32 %v1250, %v1333
    %v1350 = vadd.f32 %v1251, %v1334
    %v1351 = vadd.f32 %v1252, %v1335
    %v1352 = vadd.f32 %v1253, %v1336
    %v1353 = vadd.f32 %v1254, %v1337
    %v1354 = vadd.f32 %v1255, %v1338
    %v1355 = vadd.f32 %v1256, %v1339
    %v1356 = vadd.f32 %v1257, %v1340
    %v1357 = vadd.f32 %v1258, %v1341
    %v1358 = vadd.f32 %v1259, %v1342
    %v1359 = vadd.f32 %v1260, %v1343
    %v1360 = vadd.f32 %v1261, %v1344
    %v1361 = vadd.f32 %v1262, %v1345
    %vm1362 = vcmp.eq.s32.totalorder %v256, 11
    %v1363 = vsel %vm1362, 1, 0
    %v1364 = vcvt.s32.f32 %v1363
    %1365 = vset.pattern.permute.xlu0 11
    %1366 = vperm.xlu0 %1365, %v240
    %v1367 = vpop.permute.xlu0 %1366
    %1369 = vset.pattern.permute.xlu0 11
    %1370 = vperm.xlu0 %1369, %v241
    %v1371 = vpop.permute.xlu0 %1370
    %1373 = vset.pattern.permute.xlu0 11
    %1374 = vperm.xlu0 %1373, %v242
    %v1375 = vpop.permute.xlu0 %1374
    %1377 = vset.pattern.permute.xlu0 11
    %1378 = vperm.xlu0 %1377, %v243
    %v1379 = vpop.permute.xlu0 %1378
    %1381 = vset.pattern.permute.xlu0 11
    %1382 = vperm.xlu0 %1381, %v244
    %v1383 = vpop.permute.xlu0 %1382
    %1385 = vset.pattern.permute.xlu0 11
    %1386 = vperm.xlu0 %1385, %v245
    %v1387 = vpop.permute.xlu0 %1386
    %1389 = vset.pattern.permute.xlu0 11
    %1390 = vperm.xlu0 %1389, %v246
    %v1391 = vpop.permute.xlu0 %1390
    %1393 = vset.pattern.permute.xlu0 11
    %1394 = vperm.xlu0 %1393, %v247
    %v1395 = vpop.permute.xlu0 %1394
    %1397 = vset.pattern.permute.xlu0 11
    %1398 = vperm.xlu0 %1397, %v248
    %v1399 = vpop.permute.xlu0 %1398
    %1401 = vset.pattern.permute.xlu0 11
    %1402 = vperm.xlu0 %1401, %v249
    %v1403 = vpop.permute.xlu0 %1402
    %1405 = vset.pattern.permute.xlu0 11
    %1406 = vperm.xlu0 %1405, %v250
    %v1407 = vpop.permute.xlu0 %1406
    %1409 = vset.pattern.permute.xlu0 11
    %1410 = vperm.xlu0 %1409, %v251
    %v1411 = vpop.permute.xlu0 %1410
    %1413 = vset.pattern.permute.xlu0 11
    %1414 = vperm.xlu0 %1413, %v252
    %v1415 = vpop.permute.xlu0 %1414
    %1417 = vset.pattern.permute.xlu0 11
    %1418 = vperm.xlu0 %1417, %v253
    %v1419 = vpop.permute.xlu0 %1418
    %1421 = vset.pattern.permute.xlu0 11
    %1422 = vperm.xlu0 %1421, %v254
    %v1423 = vpop.permute.xlu0 %1422
    %1425 = vset.pattern.permute.xlu0 11
    %1426 = vperm.xlu0 %1425, %v255
    %v1427 = vpop.permute.xlu0 %1426
    %v1429 = vmul.f32 %v1364, %v1367
    %v1430 = vmul.f32 %v1364, %v1371
    %v1431 = vmul.f32 %v1364, %v1375
    %v1432 = vmul.f32 %v1364, %v1379
    %v1433 = vmul.f32 %v1364, %v1383
    %v1434 = vmul.f32 %v1364, %v1387
    %v1435 = vmul.f32 %v1364, %v1391
    %v1436 = vmul.f32 %v1364, %v1395
    %v1437 = vmul.f32 %v1364, %v1399
    %v1438 = vmul.f32 %v1364, %v1403
    %v1439 = vmul.f32 %v1364, %v1407
    %v1440 = vmul.f32 %v1364, %v1411
    %v1441 = vmul.f32 %v1364, %v1415
    %v1442 = vmul.f32 %v1364, %v1419
    %v1443 = vmul.f32 %v1364, %v1423
    %v1444 = vmul.f32 %v1364, %v1427
    %v1445 = vadd.f32 %v1346, %v1429
    %v1446 = vadd.f32 %v1347, %v1430
    %v1447 = vadd.f32 %v1348, %v1431
    %v1448 = vadd.f32 %v1349, %v1432
    %v1449 = vadd.f32 %v1350, %v1433
    %v1450 = vadd.f32 %v1351, %v1434
    %v1451 = vadd.f32 %v1352, %v1435
    %v1452 = vadd.f32 %v1353, %v1436
    %v1453 = vadd.f32 %v1354, %v1437
    %v1454 = vadd.f32 %v1355, %v1438
    %v1455 = vadd.f32 %v1356, %v1439
    %v1456 = vadd.f32 %v1357, %v1440
    %v1457 = vadd.f32 %v1358, %v1441
    %v1458 = vadd.f32 %v1359, %v1442
    %v1459 = vadd.f32 %v1360, %v1443
    %v1460 = vadd.f32 %v1361, %v1444
    %vm1461 = vcmp.eq.s32.totalorder %v256, 12
    %v1462 = vsel %vm1461, 1, 0
    %v1463 = vcvt.s32.f32 %v1462
    %1464 = vset.pattern.permute.xlu0 12
    %1465 = vperm.xlu0 %1464, %v240
    %v1466 = vpop.permute.xlu0 %1465
    %1468 = vset.pattern.permute.xlu0 12
    %1469 = vperm.xlu0 %1468, %v241
    %v1470 = vpop.permute.xlu0 %1469
    %1472 = vset.pattern.permute.xlu0 12
    %1473 = vperm.xlu0 %1472, %v242
    %v1474 = vpop.permute.xlu0 %1473
    %1476 = vset.pattern.permute.xlu0 12
    %1477 = vperm.xlu0 %1476, %v243
    %v1478 = vpop.permute.xlu0 %1477
    %1480 = vset.pattern.permute.xlu0 12
    %1481 = vperm.xlu0 %1480, %v244
    %v1482 = vpop.permute.xlu0 %1481
    %1484 = vset.pattern.permute.xlu0 12
    %1485 = vperm.xlu0 %1484, %v245
    %v1486 = vpop.permute.xlu0 %1485
    %1488 = vset.pattern.permute.xlu0 12
    %1489 = vperm.xlu0 %1488, %v246
    %v1490 = vpop.permute.xlu0 %1489
    %1492 = vset.pattern.permute.xlu0 12
    %1493 = vperm.xlu0 %1492, %v247
    %v1494 = vpop.permute.xlu0 %1493
    %1496 = vset.pattern.permute.xlu0 12
    %1497 = vperm.xlu0 %1496, %v248
    %v1498 = vpop.permute.xlu0 %1497
    %1500 = vset.pattern.permute.xlu0 12
    %1501 = vperm.xlu0 %1500, %v249
    %v1502 = vpop.permute.xlu0 %1501
    %1504 = vset.pattern.permute.xlu0 12
    %1505 = vperm.xlu0 %1504, %v250
    %v1506 = vpop.permute.xlu0 %1505
    %1508 = vset.pattern.permute.xlu0 12
    %1509 = vperm.xlu0 %1508, %v251
    %v1510 = vpop.permute.xlu0 %1509
    %1512 = vset.pattern.permute.xlu0 12
    %1513 = vperm.xlu0 %1512, %v252
    %v1514 = vpop.permute.xlu0 %1513
    %1516 = vset.pattern.permute.xlu0 12
    %1517 = vperm.xlu0 %1516, %v253
    %v1518 = vpop.permute.xlu0 %1517
    %1520 = vset.pattern.permute.xlu0 12
    %1521 = vperm.xlu0 %1520, %v254
    %v1522 = vpop.permute.xlu0 %1521
    %1524 = vset.pattern.permute.xlu0 12
    %1525 = vperm.xlu0 %1524, %v255
    %v1526 = vpop.permute.xlu0 %1525
    %v1528 = vmul.f32 %v1463, %v1466
    %v1529 = vmul.f32 %v1463, %v1470
    %v1530 = vmul.f32 %v1463, %v1474
    %v1531 = vmul.f32 %v1463, %v1478
    %v1532 = vmul.f32 %v1463, %v1482
    %v1533 = vmul.f32 %v1463, %v1486
    %v1534 = vmul.f32 %v1463, %v1490
    %v1535 = vmul.f32 %v1463, %v1494
    %v1536 = vmul.f32 %v1463, %v1498
    %v1537 = vmul.f32 %v1463, %v1502
    %v1538 = vmul.f32 %v1463, %v1506
    %v1539 = vmul.f32 %v1463, %v1510
    %v1540 = vmul.f32 %v1463, %v1514
    %v1541 = vmul.f32 %v1463, %v1518
    %v1542 = vmul.f32 %v1463, %v1522
    %v1543 = vmul.f32 %v1463, %v1526
    %v1544 = vadd.f32 %v1445, %v1528
    %v1545 = vadd.f32 %v1446, %v1529
    %v1546 = vadd.f32 %v1447, %v1530
    %v1547 = vadd.f32 %v1448, %v1531
    %v1548 = vadd.f32 %v1449, %v1532
    %v1549 = vadd.f32 %v1450, %v1533
    %v1550 = vadd.f32 %v1451, %v1534
    %v1551 = vadd.f32 %v1452, %v1535
    %v1552 = vadd.f32 %v1453, %v1536
    %v1553 = vadd.f32 %v1454, %v1537
    %v1554 = vadd.f32 %v1455, %v1538
    %v1555 = vadd.f32 %v1456, %v1539
    %v1556 = vadd.f32 %v1457, %v1540
    %v1557 = vadd.f32 %v1458, %v1541
    %v1558 = vadd.f32 %v1459, %v1542
    %v1559 = vadd.f32 %v1460, %v1543
    %vm1560 = vcmp.eq.s32.totalorder %v256, 13
    %v1561 = vsel %vm1560, 1, 0
    %v1562 = vcvt.s32.f32 %v1561
    %1563 = vset.pattern.permute.xlu0 13
    %1564 = vperm.xlu0 %1563, %v240
    %v1565 = vpop.permute.xlu0 %1564
    %1567 = vset.pattern.permute.xlu0 13
    %1568 = vperm.xlu0 %1567, %v241
    %v1569 = vpop.permute.xlu0 %1568
    %1571 = vset.pattern.permute.xlu0 13
    %1572 = vperm.xlu0 %1571, %v242
    %v1573 = vpop.permute.xlu0 %1572
    %1575 = vset.pattern.permute.xlu0 13
    %1576 = vperm.xlu0 %1575, %v243
    %v1577 = vpop.permute.xlu0 %1576
    %1579 = vset.pattern.permute.xlu0 13
    %1580 = vperm.xlu0 %1579, %v244
    %v1581 = vpop.permute.xlu0 %1580
    %1583 = vset.pattern.permute.xlu0 13
    %1584 = vperm.xlu0 %1583, %v245
    %v1585 = vpop.permute.xlu0 %1584
    %1587 = vset.pattern.permute.xlu0 13
    %1588 = vperm.xlu0 %1587, %v246
    %v1589 = vpop.permute.xlu0 %1588
    %1591 = vset.pattern.permute.xlu0 13
    %1592 = vperm.xlu0 %1591, %v247
    %v1593 = vpop.permute.xlu0 %1592
    %1595 = vset.pattern.permute.xlu0 13
    %1596 = vperm.xlu0 %1595, %v248
    %v1597 = vpop.permute.xlu0 %1596
    %1599 = vset.pattern.permute.xlu0 13
    %1600 = vperm.xlu0 %1599, %v249
    %v1601 = vpop.permute.xlu0 %1600
    %1603 = vset.pattern.permute.xlu0 13
    %1604 = vperm.xlu0 %1603, %v250
    %v1605 = vpop.permute.xlu0 %1604
    %1607 = vset.pattern.permute.xlu0 13
    %1608 = vperm.xlu0 %1607, %v251
    %v1609 = vpop.permute.xlu0 %1608
    %1611 = vset.pattern.permute.xlu0 13
    %1612 = vperm.xlu0 %1611, %v252
    %v1613 = vpop.permute.xlu0 %1612
    %1615 = vset.pattern.permute.xlu0 13
    %1616 = vperm.xlu0 %1615, %v253
    %v1617 = vpop.permute.xlu0 %1616
    %1619 = vset.pattern.permute.xlu0 13
    %1620 = vperm.xlu0 %1619, %v254
    %v1621 = vpop.permute.xlu0 %1620
    %1623 = vset.pattern.permute.xlu0 13
    %1624 = vperm.xlu0 %1623, %v255
    %v1625 = vpop.permute.xlu0 %1624
    %v1627 = vmul.f32 %v1562, %v1565
    %v1628 = vmul.f32 %v1562, %v1569
    %v1629 = vmul.f32 %v1562, %v1573
    %v1630 = vmul.f32 %v1562, %v1577
    %v1631 = vmul.f32 %v1562, %v1581
    %v1632 = vmul.f32 %v1562, %v1585
    %v1633 = vmul.f32 %v1562, %v1589
    %v1634 = vmul.f32 %v1562, %v1593
    %v1635 = vmul.f32 %v1562, %v1597
    %v1636 = vmul.f32 %v1562, %v1601
    %v1637 = vmul.f32 %v1562, %v1605
    %v1638 = vmul.f32 %v1562, %v1609
    %v1639 = vmul.f32 %v1562, %v1613
    %v1640 = vmul.f32 %v1562, %v1617
    %v1641 = vmul.f32 %v1562, %v1621
    %v1642 = vmul.f32 %v1562, %v1625
    %v1643 = vadd.f32 %v1544, %v1627
    %v1644 = vadd.f32 %v1545, %v1628
    %v1645 = vadd.f32 %v1546, %v1629
    %v1646 = vadd.f32 %v1547, %v1630
    %v1647 = vadd.f32 %v1548, %v1631
    %v1648 = vadd.f32 %v1549, %v1632
    %v1649 = vadd.f32 %v1550, %v1633
    %v1650 = vadd.f32 %v1551, %v1634
    %v1651 = vadd.f32 %v1552, %v1635
    %v1652 = vadd.f32 %v1553, %v1636
    %v1653 = vadd.f32 %v1554, %v1637
    %v1654 = vadd.f32 %v1555, %v1638
    %v1655 = vadd.f32 %v1556, %v1639
    %v1656 = vadd.f32 %v1557, %v1640
    %v1657 = vadd.f32 %v1558, %v1641
    %v1658 = vadd.f32 %v1559, %v1642
    %vm1659 = vcmp.eq.s32.totalorder %v256, 14
    %v1660 = vsel %vm1659, 1, 0
    %v1661 = vcvt.s32.f32 %v1660
    %1662 = vset.pattern.permute.xlu0 14
    %1663 = vperm.xlu0 %1662, %v240
    %v1664 = vpop.permute.xlu0 %1663
    %1666 = vset.pattern.permute.xlu0 14
    %1667 = vperm.xlu0 %1666, %v241
    %v1668 = vpop.permute.xlu0 %1667
    %1670 = vset.pattern.permute.xlu0 14
    %1671 = vperm.xlu0 %1670, %v242
    %v1672 = vpop.permute.xlu0 %1671
    %1674 = vset.pattern.permute.xlu0 14
    %1675 = vperm.xlu0 %1674, %v243
    %v1676 = vpop.permute.xlu0 %1675
    %1678 = vset.pattern.permute.xlu0 14
    %1679 = vperm.xlu0 %1678, %v244
    %v1680 = vpop.permute.xlu0 %1679
    %1682 = vset.pattern.permute.xlu0 14
    %1683 = vperm.xlu0 %1682, %v245
    %v1684 = vpop.permute.xlu0 %1683
    %1686 = vset.pattern.permute.xlu0 14
    %1687 = vperm.xlu0 %1686, %v246
    %v1688 = vpop.permute.xlu0 %1687
    %1690 = vset.pattern.permute.xlu0 14
    %1691 = vperm.xlu0 %1690, %v247
    %v1692 = vpop.permute.xlu0 %1691
    %1694 = vset.pattern.permute.xlu0 14
    %1695 = vperm.xlu0 %1694, %v248
    %v1696 = vpop.permute.xlu0 %1695
    %1698 = vset.pattern.permute.xlu0 14
    %1699 = vperm.xlu0 %1698, %v249
    %v1700 = vpop.permute.xlu0 %1699
    %1702 = vset.pattern.permute.xlu0 14
    %1703 = vperm.xlu0 %1702, %v250
    %v1704 = vpop.permute.xlu0 %1703
    %1706 = vset.pattern.permute.xlu0 14
    %1707 = vperm.xlu0 %1706, %v251
    %v1708 = vpop.permute.xlu0 %1707
    %1710 = vset.pattern.permute.xlu0 14
    %1711 = vperm.xlu0 %1710, %v252
    %v1712 = vpop.permute.xlu0 %1711
    %1714 = vset.pattern.permute.xlu0 14
    %1715 = vperm.xlu0 %1714, %v253
    %v1716 = vpop.permute.xlu0 %1715
    %1718 = vset.pattern.permute.xlu0 14
    %1719 = vperm.xlu0 %1718, %v254
    %v1720 = vpop.permute.xlu0 %1719
    %1722 = vset.pattern.permute.xlu0 14
    %1723 = vperm.xlu0 %1722, %v255
    %v1724 = vpop.permute.xlu0 %1723
    %v1726 = vmul.f32 %v1661, %v1664
    %v1727 = vmul.f32 %v1661, %v1668
    %v1728 = vmul.f32 %v1661, %v1672
    %v1729 = vmul.f32 %v1661, %v1676
    %v1730 = vmul.f32 %v1661, %v1680
    %v1731 = vmul.f32 %v1661, %v1684
    %v1732 = vmul.f32 %v1661, %v1688
    %v1733 = vmul.f32 %v1661, %v1692
    %v1734 = vmul.f32 %v1661, %v1696
    %v1735 = vmul.f32 %v1661, %v1700
    %v1736 = vmul.f32 %v1661, %v1704
    %v1737 = vmul.f32 %v1661, %v1708
    %v1738 = vmul.f32 %v1661, %v1712
    %v1739 = vmul.f32 %v1661, %v1716
    %v1740 = vmul.f32 %v1661, %v1720
    %v1741 = vmul.f32 %v1661, %v1724
    %v1742 = vadd.f32 %v1643, %v1726
    %v1743 = vadd.f32 %v1644, %v1727
    %v1744 = vadd.f32 %v1645, %v1728
    %v1745 = vadd.f32 %v1646, %v1729
    %v1746 = vadd.f32 %v1647, %v1730
    %v1747 = vadd.f32 %v1648, %v1731
    %v1748 = vadd.f32 %v1649, %v1732
    %v1749 = vadd.f32 %v1650, %v1733
    %v1750 = vadd.f32 %v1651, %v1734
    %v1751 = vadd.f32 %v1652, %v1735
    %v1752 = vadd.f32 %v1653, %v1736
    %v1753 = vadd.f32 %v1654, %v1737
    %v1754 = vadd.f32 %v1655, %v1738
    %v1755 = vadd.f32 %v1656, %v1739
    %v1756 = vadd.f32 %v1657, %v1740
    %v1757 = vadd.f32 %v1658, %v1741
    %vm1758 = vcmp.eq.s32.totalorder %v256, 15
    %v1759 = vsel %vm1758, 1, 0
    %v1760 = vcvt.s32.f32 %v1759
    %1761 = vset.pattern.permute.xlu0 15
    %1762 = vperm.xlu0 %1761, %v240
    %v1763 = vpop.permute.xlu0 %1762
    %1765 = vset.pattern.permute.xlu0 15
    %1766 = vperm.xlu0 %1765, %v241
    %v1767 = vpop.permute.xlu0 %1766
    %1769 = vset.pattern.permute.xlu0 15
    %1770 = vperm.xlu0 %1769, %v242
    %v1771 = vpop.permute.xlu0 %1770
    %1773 = vset.pattern.permute.xlu0 15
    %1774 = vperm.xlu0 %1773, %v243
    %v1775 = vpop.permute.xlu0 %1774
    %1777 = vset.pattern.permute.xlu0 15
    %1778 = vperm.xlu0 %1777, %v244
    %v1779 = vpop.permute.xlu0 %1778
    %1781 = vset.pattern.permute.xlu0 15
    %1782 = vperm.xlu0 %1781, %v245
    %v1783 = vpop.permute.xlu0 %1782
    %1785 = vset.pattern.permute.xlu0 15
    %1786 = vperm.xlu0 %1785, %v246
    %v1787 = vpop.permute.xlu0 %1786
    %1789 = vset.pattern.permute.xlu0 15
    %1790 = vperm.xlu0 %1789, %v247
    %v1791 = vpop.permute.xlu0 %1790
    %1793 = vset.pattern.permute.xlu0 15
    %1794 = vperm.xlu0 %1793, %v248
    %v1795 = vpop.permute.xlu0 %1794
    %1797 = vset.pattern.permute.xlu0 15
    %1798 = vperm.xlu0 %1797, %v249
    %v1799 = vpop.permute.xlu0 %1798
    %1801 = vset.pattern.permute.xlu0 15
    %1802 = vperm.xlu0 %1801, %v250
    %v1803 = vpop.permute.xlu0 %1802
    %1805 = vset.pattern.permute.xlu0 15
    %1806 = vperm.xlu0 %1805, %v251
    %v1807 = vpop.permute.xlu0 %1806
    %1809 = vset.pattern.permute.xlu0 15
    %1810 = vperm.xlu0 %1809, %v252
    %v1811 = vpop.permute.xlu0 %1810
    %1813 = vset.pattern.permute.xlu0 15
    %1814 = vperm.xlu0 %1813, %v253
    %v1815 = vpop.permute.xlu0 %1814
    %1817 = vset.pattern.permute.xlu0 15
    %1818 = vperm.xlu0 %1817, %v254
    %v1819 = vpop.permute.xlu0 %1818
    %1821 = vset.pattern.permute.xlu0 15
    %1822 = vperm.xlu0 %1821, %v255
    %v1823 = vpop.permute.xlu0 %1822
    %v1825 = vmul.f32 %v1760, %v1763
    %v1826 = vmul.f32 %v1760, %v1767
    %v1827 = vmul.f32 %v1760, %v1771
    %v1828 = vmul.f32 %v1760, %v1775
    %v1829 = vmul.f32 %v1760, %v1779
    %v1830 = vmul.f32 %v1760, %v1783
    %v1831 = vmul.f32 %v1760, %v1787
    %v1832 = vmul.f32 %v1760, %v1791
    %v1833 = vmul.f32 %v1760, %v1795
    %v1834 = vmul.f32 %v1760, %v1799
    %v1835 = vmul.f32 %v1760, %v1803
    %v1836 = vmul.f32 %v1760, %v1807
    %v1837 = vmul.f32 %v1760, %v1811
    %v1838 = vmul.f32 %v1760, %v1815
    %v1839 = vmul.f32 %v1760, %v1819
    %v1840 = vmul.f32 %v1760, %v1823
    %v1841 = vadd.f32 %v1742, %v1825
    %v1842 = vadd.f32 %v1743, %v1826
    %v1843 = vadd.f32 %v1744, %v1827
    %v1844 = vadd.f32 %v1745, %v1828
    %v1845 = vadd.f32 %v1746, %v1829
    %v1846 = vadd.f32 %v1747, %v1830
    %v1847 = vadd.f32 %v1748, %v1831
    %v1848 = vadd.f32 %v1749, %v1832
    %v1849 = vadd.f32 %v1750, %v1833
    %v1850 = vadd.f32 %v1751, %v1834
    %v1851 = vadd.f32 %v1752, %v1835
    %v1852 = vadd.f32 %v1753, %v1836
    %v1853 = vadd.f32 %v1754, %v1837
    %v1854 = vadd.f32 %v1755, %v1838
    %v1855 = vadd.f32 %v1756, %v1839
    %v1856 = vadd.f32 %v1757, %v1840
    %vm1857 = vcmp.eq.s32.totalorder %v256, 16
    %v1858 = vsel %vm1857, 1, 0
    %v1859 = vcvt.s32.f32 %v1858
    %1860 = vset.pattern.permute.xlu0 16
    %1861 = vperm.xlu0 %1860, %v240
    %v1862 = vpop.permute.xlu0 %1861
    %1864 = vset.pattern.permute.xlu0 16
    %1865 = vperm.xlu0 %1864, %v241
    %v1866 = vpop.permute.xlu0 %1865
    %1868 = vset.pattern.permute.xlu0 16
    %1869 = vperm.xlu0 %1868, %v242
    %v1870 = vpop.permute.xlu0 %1869
    %1872 = vset.pattern.permute.xlu0 16
    %1873 = vperm.xlu0 %1872, %v243
    %v1874 = vpop.permute.xlu0 %1873
    %1876 = vset.pattern.permute.xlu0 16
    %1877 = vperm.xlu0 %1876, %v244
    %v1878 = vpop.permute.xlu0 %1877
    %1880 = vset.pattern.permute.xlu0 16
    %1881 = vperm.xlu0 %1880, %v245
    %v1882 = vpop.permute.xlu0 %1881
    %1884 = vset.pattern.permute.xlu0 16
    %1885 = vperm.xlu0 %1884, %v246
    %v1886 = vpop.permute.xlu0 %1885
    %1888 = vset.pattern.permute.xlu0 16
    %1889 = vperm.xlu0 %1888, %v247
    %v1890 = vpop.permute.xlu0 %1889
    %1892 = vset.pattern.permute.xlu0 16
    %1893 = vperm.xlu0 %1892, %v248
    %v1894 = vpop.permute.xlu0 %1893
    %1896 = vset.pattern.permute.xlu0 16
    %1897 = vperm.xlu0 %1896, %v249
    %v1898 = vpop.permute.xlu0 %1897
    %1900 = vset.pattern.permute.xlu0 16
    %1901 = vperm.xlu0 %1900, %v250
    %v1902 = vpop.permute.xlu0 %1901
    %1904 = vset.pattern.permute.xlu0 16
    %1905 = vperm.xlu0 %1904, %v251
    %v1906 = vpop.permute.xlu0 %1905
    %1908 = vset.pattern.permute.xlu0 16
    %1909 = vperm.xlu0 %1908, %v252
    %v1910 = vpop.permute.xlu0 %1909
    %1912 = vset.pattern.permute.xlu0 16
    %1913 = vperm.xlu0 %1912, %v253
    %v1914 = vpop.permute.xlu0 %1913
    %1916 = vset.pattern.permute.xlu0 16
    %1917 = vperm.xlu0 %1916, %v254
    %v1918 = vpop.permute.xlu0 %1917
    %1920 = vset.pattern.permute.xlu0 16
    %1921 = vperm.xlu0 %1920, %v255
    %v1922 = vpop.permute.xlu0 %1921
    %v1924 = vmul.f32 %v1859, %v1862
    %v1925 = vmul.f32 %v1859, %v1866
    %v1926 = vmul.f32 %v1859, %v1870
    %v1927 = vmul.f32 %v1859, %v1874
    %v1928 = vmul.f32 %v1859, %v1878
    %v1929 = vmul.f32 %v1859, %v1882
    %v1930 = vmul.f32 %v1859, %v1886
    %v1931 = vmul.f32 %v1859, %v1890
    %v1932 = vmul.f32 %v1859, %v1894
    %v1933 = vmul.f32 %v1859, %v1898
    %v1934 = vmul.f32 %v1859, %v1902
    %v1935 = vmul.f32 %v1859, %v1906
    %v1936 = vmul.f32 %v1859, %v1910
    %v1937 = vmul.f32 %v1859, %v1914
    %v1938 = vmul.f32 %v1859, %v1918
    %v1939 = vmul.f32 %v1859, %v1922
    %v1940 = vadd.f32 %v1841, %v1924
    %v1941 = vadd.f32 %v1842, %v1925
    %v1942 = vadd.f32 %v1843, %v1926
    %v1943 = vadd.f32 %v1844, %v1927
    %v1944 = vadd.f32 %v1845, %v1928
    %v1945 = vadd.f32 %v1846, %v1929
    %v1946 = vadd.f32 %v1847, %v1930
    %v1947 = vadd.f32 %v1848, %v1931
    %v1948 = vadd.f32 %v1849, %v1932
    %v1949 = vadd.f32 %v1850, %v1933
    %v1950 = vadd.f32 %v1851, %v1934
    %v1951 = vadd.f32 %v1852, %v1935
    %v1952 = vadd.f32 %v1853, %v1936
    %v1953 = vadd.f32 %v1854, %v1937
    %v1954 = vadd.f32 %v1855, %v1938
    %v1955 = vadd.f32 %v1856, %v1939
    %vm1956 = vcmp.eq.s32.totalorder %v256, 17
    %v1957 = vsel %vm1956, 1, 0
    %v1958 = vcvt.s32.f32 %v1957
    %1959 = vset.pattern.permute.xlu0 17
    %1960 = vperm.xlu0 %1959, %v240
    %v1961 = vpop.permute.xlu0 %1960
    %1963 = vset.pattern.permute.xlu0 17
    %1964 = vperm.xlu0 %1963, %v241
    %v1965 = vpop.permute.xlu0 %1964
    %1967 = vset.pattern.permute.xlu0 17
    %1968 = vperm.xlu0 %1967, %v242
    %v1969 = vpop.permute.xlu0 %1968
    %1971 = vset.pattern.permute.xlu0 17
    %1972 = vperm.xlu0 %1971, %v243
    %v1973 = vpop.permute.xlu0 %1972
    %1975 = vset.pattern.permute.xlu0 17
    %1976 = vperm.xlu0 %1975, %v244
    %v1977 = vpop.permute.xlu0 %1976
    %1979 = vset.pattern.permute.xlu0 17
    %1980 = vperm.xlu0 %1979, %v245
    %v1981 = vpop.permute.xlu0 %1980
    %1983 = vset.pattern.permute.xlu0 17
    %1984 = vperm.xlu0 %1983, %v246
    %v1985 = vpop.permute.xlu0 %1984
    %1987 = vset.pattern.permute.xlu0 17
    %1988 = vperm.xlu0 %1987, %v247
    %v1989 = vpop.permute.xlu0 %1988
    %1991 = vset.pattern.permute.xlu0 17
    %1992 = vperm.xlu0 %1991, %v248
    %v1993 = vpop.permute.xlu0 %1992
    %1995 = vset.pattern.permute.xlu0 17
    %1996 = vperm.xlu0 %1995, %v249
    %v1997 = vpop.permute.xlu0 %1996
    %1999 = vset.pattern.permute.xlu0 17
    %2000 = vperm.xlu0 %1999, %v250
    %v2001 = vpop.permute.xlu0 %2000
    %2003 = vset.pattern.permute.xlu0 17
    %2004 = vperm.xlu0 %2003, %v251
    %v2005 = vpop.permute.xlu0 %2004
    %2007 = vset.pattern.permute.xlu0 17
    %2008 = vperm.xlu0 %2007, %v252
    %v2009 = vpop.permute.xlu0 %2008
    %2011 = vset.pattern.permute.xlu0 17
    %2012 = vperm.xlu0 %2011, %v253
    %v2013 = vpop.permute.xlu0 %2012
    %2015 = vset.pattern.permute.xlu0 17
    %2016 = vperm.xlu0 %2015, %v254
    %v2017 = vpop.permute.xlu0 %2016
    %2019 = vset.pattern.permute.xlu0 17
    %2020 = vperm.xlu0 %2019, %v255
    %v2021 = vpop.permute.xlu0 %2020
    %v2023 = vmul.f32 %v1958, %v1961
    %v2024 = vmul.f32 %v1958, %v1965
    %v2025 = vmul.f32 %v1958, %v1969
    %v2026 = vmul.f32 %v1958, %v1973
    %v2027 = vmul.f32 %v1958, %v1977
    %v2028 = vmul.f32 %v1958, %v1981
    %v2029 = vmul.f32 %v1958, %v1985
    %v2030 = vmul.f32 %v1958, %v1989
    %v2031 = vmul.f32 %v1958, %v1993
    %v2032 = vmul.f32 %v1958, %v1997
    %v2033 = vmul.f32 %v1958, %v2001
    %v2034 = vmul.f32 %v1958, %v2005
    %v2035 = vmul.f32 %v1958, %v2009
    %v2036 = vmul.f32 %v1958, %v2013
    %v2037 = vmul.f32 %v1958, %v2017
    %v2038 = vmul.f32 %v1958, %v2021
    %v2039 = vadd.f32 %v1940, %v2023
    %v2040 = vadd.f32 %v1941, %v2024
    %v2041 = vadd.f32 %v1942, %v2025
    %v2042 = vadd.f32 %v1943, %v2026
    %v2043 = vadd.f32 %v1944, %v2027
    %v2044 = vadd.f32 %v1945, %v2028
    %v2045 = vadd.f32 %v1946, %v2029
    %v2046 = vadd.f32 %v1947, %v2030
    %v2047 = vadd.f32 %v1948, %v2031
    %v2048 = vadd.f32 %v1949, %v2032
    %v2049 = vadd.f32 %v1950, %v2033
    %v2050 = vadd.f32 %v1951, %v2034
    %v2051 = vadd.f32 %v1952, %v2035
    %v2052 = vadd.f32 %v1953, %v2036
    %v2053 = vadd.f32 %v1954, %v2037
    %v2054 = vadd.f32 %v1955, %v2038
    %vm2055 = vcmp.eq.s32.totalorder %v256, 18
    %v2056 = vsel %vm2055, 1, 0
    %v2057 = vcvt.s32.f32 %v2056
    %2058 = vset.pattern.permute.xlu0 18
    %2059 = vperm.xlu0 %2058, %v240
    %v2060 = vpop.permute.xlu0 %2059
    %2062 = vset.pattern.permute.xlu0 18
    %2063 = vperm.xlu0 %2062, %v241
    %v2064 = vpop.permute.xlu0 %2063
    %2066 = vset.pattern.permute.xlu0 18
    %2067 = vperm.xlu0 %2066, %v242
    %v2068 = vpop.permute.xlu0 %2067
    %2070 = vset.pattern.permute.xlu0 18
    %2071 = vperm.xlu0 %2070, %v243
    %v2072 = vpop.permute.xlu0 %2071
    %2074 = vset.pattern.permute.xlu0 18
    %2075 = vperm.xlu0 %2074, %v244
    %v2076 = vpop.permute.xlu0 %2075
    %2078 = vset.pattern.permute.xlu0 18
    %2079 = vperm.xlu0 %2078, %v245
    %v2080 = vpop.permute.xlu0 %2079
    %2082 = vset.pattern.permute.xlu0 18
    %2083 = vperm.xlu0 %2082, %v246
    %v2084 = vpop.permute.xlu0 %2083
    %2086 = vset.pattern.permute.xlu0 18
    %2087 = vperm.xlu0 %2086, %v247
    %v2088 = vpop.permute.xlu0 %2087
    %2090 = vset.pattern.permute.xlu0 18
    %2091 = vperm.xlu0 %2090, %v248
    %v2092 = vpop.permute.xlu0 %2091
    %2094 = vset.pattern.permute.xlu0 18
    %2095 = vperm.xlu0 %2094, %v249
    %v2096 = vpop.permute.xlu0 %2095
    %2098 = vset.pattern.permute.xlu0 18
    %2099 = vperm.xlu0 %2098, %v250
    %v2100 = vpop.permute.xlu0 %2099
    %2102 = vset.pattern.permute.xlu0 18
    %2103 = vperm.xlu0 %2102, %v251
    %v2104 = vpop.permute.xlu0 %2103
    %2106 = vset.pattern.permute.xlu0 18
    %2107 = vperm.xlu0 %2106, %v252
    %v2108 = vpop.permute.xlu0 %2107
    %2110 = vset.pattern.permute.xlu0 18
    %2111 = vperm.xlu0 %2110, %v253
    %v2112 = vpop.permute.xlu0 %2111
    %2114 = vset.pattern.permute.xlu0 18
    %2115 = vperm.xlu0 %2114, %v254
    %v2116 = vpop.permute.xlu0 %2115
    %2118 = vset.pattern.permute.xlu0 18
    %2119 = vperm.xlu0 %2118, %v255
    %v2120 = vpop.permute.xlu0 %2119
    %v2122 = vmul.f32 %v2057, %v2060
    %v2123 = vmul.f32 %v2057, %v2064
    %v2124 = vmul.f32 %v2057, %v2068
    %v2125 = vmul.f32 %v2057, %v2072
    %v2126 = vmul.f32 %v2057, %v2076
    %v2127 = vmul.f32 %v2057, %v2080
    %v2128 = vmul.f32 %v2057, %v2084
    %v2129 = vmul.f32 %v2057, %v2088
    %v2130 = vmul.f32 %v2057, %v2092
    %v2131 = vmul.f32 %v2057, %v2096
    %v2132 = vmul.f32 %v2057, %v2100
    %v2133 = vmul.f32 %v2057, %v2104
    %v2134 = vmul.f32 %v2057, %v2108
    %v2135 = vmul.f32 %v2057, %v2112
    %v2136 = vmul.f32 %v2057, %v2116
    %v2137 = vmul.f32 %v2057, %v2120
    %v2138 = vadd.f32 %v2039, %v2122
    %v2139 = vadd.f32 %v2040, %v2123
    %v2140 = vadd.f32 %v2041, %v2124
    %v2141 = vadd.f32 %v2042, %v2125
    %v2142 = vadd.f32 %v2043, %v2126
    %v2143 = vadd.f32 %v2044, %v2127
    %v2144 = vadd.f32 %v2045, %v2128
    %v2145 = vadd.f32 %v2046, %v2129
    %v2146 = vadd.f32 %v2047, %v2130
    %v2147 = vadd.f32 %v2048, %v2131
    %v2148 = vadd.f32 %v2049, %v2132
    %v2149 = vadd.f32 %v2050, %v2133
    %v2150 = vadd.f32 %v2051, %v2134
    %v2151 = vadd.f32 %v2052, %v2135
    %v2152 = vadd.f32 %v2053, %v2136
    %v2153 = vadd.f32 %v2054, %v2137
    %vm2154 = vcmp.eq.s32.totalorder %v256, 19
    %v2155 = vsel %vm2154, 1, 0
    %v2156 = vcvt.s32.f32 %v2155
    %2157 = vset.pattern.permute.xlu0 19
    %2158 = vperm.xlu0 %2157, %v240
    %v2159 = vpop.permute.xlu0 %2158
    %2161 = vset.pattern.permute.xlu0 19
    %2162 = vperm.xlu0 %2161, %v241
    %v2163 = vpop.permute.xlu0 %2162
    %2165 = vset.pattern.permute.xlu0 19
    %2166 = vperm.xlu0 %2165, %v242
    %v2167 = vpop.permute.xlu0 %2166
    %2169 = vset.pattern.permute.xlu0 19
    %2170 = vperm.xlu0 %2169, %v243
    %v2171 = vpop.permute.xlu0 %2170
    %2173 = vset.pattern.permute.xlu0 19
    %2174 = vperm.xlu0 %2173, %v244
    %v2175 = vpop.permute.xlu0 %2174
    %2177 = vset.pattern.permute.xlu0 19
    %2178 = vperm.xlu0 %2177, %v245
    %v2179 = vpop.permute.xlu0 %2178
    %2181 = vset.pattern.permute.xlu0 19
    %2182 = vperm.xlu0 %2181, %v246
    %v2183 = vpop.permute.xlu0 %2182
    %2185 = vset.pattern.permute.xlu0 19
    %2186 = vperm.xlu0 %2185, %v247
    %v2187 = vpop.permute.xlu0 %2186
    %2189 = vset.pattern.permute.xlu0 19
    %2190 = vperm.xlu0 %2189, %v248
    %v2191 = vpop.permute.xlu0 %2190
    %2193 = vset.pattern.permute.xlu0 19
    %2194 = vperm.xlu0 %2193, %v249
    %v2195 = vpop.permute.xlu0 %2194
    %2197 = vset.pattern.permute.xlu0 19
    %2198 = vperm.xlu0 %2197, %v250
    %v2199 = vpop.permute.xlu0 %2198
    %2201 = vset.pattern.permute.xlu0 19
    %2202 = vperm.xlu0 %2201, %v251
    %v2203 = vpop.permute.xlu0 %2202
    %2205 = vset.pattern.permute.xlu0 19
    %2206 = vperm.xlu0 %2205, %v252
    %v2207 = vpop.permute.xlu0 %2206
    %2209 = vset.pattern.permute.xlu0 19
    %2210 = vperm.xlu0 %2209, %v253
    %v2211 = vpop.permute.xlu0 %2210
    %2213 = vset.pattern.permute.xlu0 19
    %2214 = vperm.xlu0 %2213, %v254
    %v2215 = vpop.permute.xlu0 %2214
    %2217 = vset.pattern.permute.xlu0 19
    %2218 = vperm.xlu0 %2217, %v255
    %v2219 = vpop.permute.xlu0 %2218
    %v2221 = vmul.f32 %v2156, %v2159
    %v2222 = vmul.f32 %v2156, %v2163
    %v2223 = vmul.f32 %v2156, %v2167
    %v2224 = vmul.f32 %v2156, %v2171
    %v2225 = vmul.f32 %v2156, %v2175
    %v2226 = vmul.f32 %v2156, %v2179
    %v2227 = vmul.f32 %v2156, %v2183
    %v2228 = vmul.f32 %v2156, %v2187
    %v2229 = vmul.f32 %v2156, %v2191
    %v2230 = vmul.f32 %v2156, %v2195
    %v2231 = vmul.f32 %v2156, %v2199
    %v2232 = vmul.f32 %v2156, %v2203
    %v2233 = vmul.f32 %v2156, %v2207
    %v2234 = vmul.f32 %v2156, %v2211
    %v2235 = vmul.f32 %v2156, %v2215
    %v2236 = vmul.f32 %v2156, %v2219
    %v2237 = vadd.f32 %v2138, %v2221
    %v2238 = vadd.f32 %v2139, %v2222
    %v2239 = vadd.f32 %v2140, %v2223
    %v2240 = vadd.f32 %v2141, %v2224
    %v2241 = vadd.f32 %v2142, %v2225
    %v2242 = vadd.f32 %v2143, %v2226
    %v2243 = vadd.f32 %v2144, %v2227
    %v2244 = vadd.f32 %v2145, %v2228
    %v2245 = vadd.f32 %v2146, %v2229
    %v2246 = vadd.f32 %v2147, %v2230
    %v2247 = vadd.f32 %v2148, %v2231
    %v2248 = vadd.f32 %v2149, %v2232
    %v2249 = vadd.f32 %v2150, %v2233
    %v2250 = vadd.f32 %v2151, %v2234
    %v2251 = vadd.f32 %v2152, %v2235
    %v2252 = vadd.f32 %v2153, %v2236
    %vm2253 = vcmp.eq.s32.totalorder %v256, 20
    %v2254 = vsel %vm2253, 1, 0
    %v2255 = vcvt.s32.f32 %v2254
    %2256 = vset.pattern.permute.xlu0 20
    %2257 = vperm.xlu0 %2256, %v240
    %v2258 = vpop.permute.xlu0 %2257
    %2260 = vset.pattern.permute.xlu0 20
    %2261 = vperm.xlu0 %2260, %v241
    %v2262 = vpop.permute.xlu0 %2261
    %2264 = vset.pattern.permute.xlu0 20
    %2265 = vperm.xlu0 %2264, %v242
    %v2266 = vpop.permute.xlu0 %2265
    %2268 = vset.pattern.permute.xlu0 20
    %2269 = vperm.xlu0 %2268, %v243
    %v2270 = vpop.permute.xlu0 %2269
    %2272 = vset.pattern.permute.xlu0 20
    %2273 = vperm.xlu0 %2272, %v244
    %v2274 = vpop.permute.xlu0 %2273
    %2276 = vset.pattern.permute.xlu0 20
    %2277 = vperm.xlu0 %2276, %v245
    %v2278 = vpop.permute.xlu0 %2277
    %2280 = vset.pattern.permute.xlu0 20
    %2281 = vperm.xlu0 %2280, %v246
    %v2282 = vpop.permute.xlu0 %2281
    %2284 = vset.pattern.permute.xlu0 20
    %2285 = vperm.xlu0 %2284, %v247
    %v2286 = vpop.permute.xlu0 %2285
    %2288 = vset.pattern.permute.xlu0 20
    %2289 = vperm.xlu0 %2288, %v248
    %v2290 = vpop.permute.xlu0 %2289
    %2292 = vset.pattern.permute.xlu0 20
    %2293 = vperm.xlu0 %2292, %v249
    %v2294 = vpop.permute.xlu0 %2293
    %2296 = vset.pattern.permute.xlu0 20
    %2297 = vperm.xlu0 %2296, %v250
    %v2298 = vpop.permute.xlu0 %2297
    %2300 = vset.pattern.permute.xlu0 20
    %2301 = vperm.xlu0 %2300, %v251
    %v2302 = vpop.permute.xlu0 %2301
    %2304 = vset.pattern.permute.xlu0 20
    %2305 = vperm.xlu0 %2304, %v252
    %v2306 = vpop.permute.xlu0 %2305
    %2308 = vset.pattern.permute.xlu0 20
    %2309 = vperm.xlu0 %2308, %v253
    %v2310 = vpop.permute.xlu0 %2309
    %2312 = vset.pattern.permute.xlu0 20
    %2313 = vperm.xlu0 %2312, %v254
    %v2314 = vpop.permute.xlu0 %2313
    %2316 = vset.pattern.permute.xlu0 20
    %2317 = vperm.xlu0 %2316, %v255
    %v2318 = vpop.permute.xlu0 %2317
    %v2320 = vmul.f32 %v2255, %v2258
    %v2321 = vmul.f32 %v2255, %v2262
    %v2322 = vmul.f32 %v2255, %v2266
    %v2323 = vmul.f32 %v2255, %v2270
    %v2324 = vmul.f32 %v2255, %v2274
    %v2325 = vmul.f32 %v2255, %v2278
    %v2326 = vmul.f32 %v2255, %v2282
    %v2327 = vmul.f32 %v2255, %v2286
    %v2328 = vmul.f32 %v2255, %v2290
    %v2329 = vmul.f32 %v2255, %v2294
    %v2330 = vmul.f32 %v2255, %v2298
    %v2331 = vmul.f32 %v2255, %v2302
    %v2332 = vmul.f32 %v2255, %v2306
    %v2333 = vmul.f32 %v2255, %v2310
    %v2334 = vmul.f32 %v2255, %v2314
    %v2335 = vmul.f32 %v2255, %v2318
    %v2336 = vadd.f32 %v2237, %v2320
    %v2337 = vadd.f32 %v2238, %v2321
    %v2338 = vadd.f32 %v2239, %v2322
    %v2339 = vadd.f32 %v2240, %v2323
    %v2340 = vadd.f32 %v2241, %v2324
    %v2341 = vadd.f32 %v2242, %v2325
    %v2342 = vadd.f32 %v2243, %v2326
    %v2343 = vadd.f32 %v2244, %v2327
    %v2344 = vadd.f32 %v2245, %v2328
    %v2345 = vadd.f32 %v2246, %v2329
    %v2346 = vadd.f32 %v2247, %v2330
    %v2347 = vadd.f32 %v2248, %v2331
    %v2348 = vadd.f32 %v2249, %v2332
    %v2349 = vadd.f32 %v2250, %v2333
    %v2350 = vadd.f32 %v2251, %v2334
    %v2351 = vadd.f32 %v2252, %v2335
    %vm2352 = vcmp.eq.s32.totalorder %v256, 21
    %v2353 = vsel %vm2352, 1, 0
    %v2354 = vcvt.s32.f32 %v2353
    %2355 = vset.pattern.permute.xlu0 21
    %2356 = vperm.xlu0 %2355, %v240
    %v2357 = vpop.permute.xlu0 %2356
    %2359 = vset.pattern.permute.xlu0 21
    %2360 = vperm.xlu0 %2359, %v241
    %v2361 = vpop.permute.xlu0 %2360
    %2363 = vset.pattern.permute.xlu0 21
    %2364 = vperm.xlu0 %2363, %v242
    %v2365 = vpop.permute.xlu0 %2364
    %2367 = vset.pattern.permute.xlu0 21
    %2368 = vperm.xlu0 %2367, %v243
    %v2369 = vpop.permute.xlu0 %2368
    %2371 = vset.pattern.permute.xlu0 21
    %2372 = vperm.xlu0 %2371, %v244
    %v2373 = vpop.permute.xlu0 %2372
    %2375 = vset.pattern.permute.xlu0 21
    %2376 = vperm.xlu0 %2375, %v245
    %v2377 = vpop.permute.xlu0 %2376
    %2379 = vset.pattern.permute.xlu0 21
    %2380 = vperm.xlu0 %2379, %v246
    %v2381 = vpop.permute.xlu0 %2380
    %2383 = vset.pattern.permute.xlu0 21
    %2384 = vperm.xlu0 %2383, %v247
    %v2385 = vpop.permute.xlu0 %2384
    %2387 = vset.pattern.permute.xlu0 21
    %2388 = vperm.xlu0 %2387, %v248
    %v2389 = vpop.permute.xlu0 %2388
    %2391 = vset.pattern.permute.xlu0 21
    %2392 = vperm.xlu0 %2391, %v249
    %v2393 = vpop.permute.xlu0 %2392
    %2395 = vset.pattern.permute.xlu0 21
    %2396 = vperm.xlu0 %2395, %v250
    %v2397 = vpop.permute.xlu0 %2396
    %2399 = vset.pattern.permute.xlu0 21
    %2400 = vperm.xlu0 %2399, %v251
    %v2401 = vpop.permute.xlu0 %2400
    %2403 = vset.pattern.permute.xlu0 21
    %2404 = vperm.xlu0 %2403, %v252
    %v2405 = vpop.permute.xlu0 %2404
    %2407 = vset.pattern.permute.xlu0 21
    %2408 = vperm.xlu0 %2407, %v253
    %v2409 = vpop.permute.xlu0 %2408
    %2411 = vset.pattern.permute.xlu0 21
    %2412 = vperm.xlu0 %2411, %v254
    %v2413 = vpop.permute.xlu0 %2412
    %2415 = vset.pattern.permute.xlu0 21
    %2416 = vperm.xlu0 %2415, %v255
    %v2417 = vpop.permute.xlu0 %2416
    %v2419 = vmul.f32 %v2354, %v2357
    %v2420 = vmul.f32 %v2354, %v2361
    %v2421 = vmul.f32 %v2354, %v2365
    %v2422 = vmul.f32 %v2354, %v2369
    %v2423 = vmul.f32 %v2354, %v2373
    %v2424 = vmul.f32 %v2354, %v2377
    %v2425 = vmul.f32 %v2354, %v2381
    %v2426 = vmul.f32 %v2354, %v2385
    %v2427 = vmul.f32 %v2354, %v2389
    %v2428 = vmul.f32 %v2354, %v2393
    %v2429 = vmul.f32 %v2354, %v2397
    %v2430 = vmul.f32 %v2354, %v2401
    %v2431 = vmul.f32 %v2354, %v2405
    %v2432 = vmul.f32 %v2354, %v2409
    %v2433 = vmul.f32 %v2354, %v2413
    %v2434 = vmul.f32 %v2354, %v2417
    %v2435 = vadd.f32 %v2336, %v2419
    %v2436 = vadd.f32 %v2337, %v2420
    %v2437 = vadd.f32 %v2338, %v2421
    %v2438 = vadd.f32 %v2339, %v2422
    %v2439 = vadd.f32 %v2340, %v2423
    %v2440 = vadd.f32 %v2341, %v2424
    %v2441 = vadd.f32 %v2342, %v2425
    %v2442 = vadd.f32 %v2343, %v2426
    %v2443 = vadd.f32 %v2344, %v2427
    %v2444 = vadd.f32 %v2345, %v2428
    %v2445 = vadd.f32 %v2346, %v2429
    %v2446 = vadd.f32 %v2347, %v2430
    %v2447 = vadd.f32 %v2348, %v2431
    %v2448 = vadd.f32 %v2349, %v2432
    %v2449 = vadd.f32 %v2350, %v2433
    %v2450 = vadd.f32 %v2351, %v2434
    %vm2451 = vcmp.eq.s32.totalorder %v256, 22
    %v2452 = vsel %vm2451, 1, 0
    %v2453 = vcvt.s32.f32 %v2452
    %2454 = vset.pattern.permute.xlu0 22
    %2455 = vperm.xlu0 %2454, %v240
    %v2456 = vpop.permute.xlu0 %2455
    %2458 = vset.pattern.permute.xlu0 22
    %2459 = vperm.xlu0 %2458, %v241
    %v2460 = vpop.permute.xlu0 %2459
    %2462 = vset.pattern.permute.xlu0 22
    %2463 = vperm.xlu0 %2462, %v242
    %v2464 = vpop.permute.xlu0 %2463
    %2466 = vset.pattern.permute.xlu0 22
    %2467 = vperm.xlu0 %2466, %v243
    %v2468 = vpop.permute.xlu0 %2467
    %2470 = vset.pattern.permute.xlu0 22
    %2471 = vperm.xlu0 %2470, %v244
    %v2472 = vpop.permute.xlu0 %2471
    %2474 = vset.pattern.permute.xlu0 22
    %2475 = vperm.xlu0 %2474, %v245
    %v2476 = vpop.permute.xlu0 %2475
    %2478 = vset.pattern.permute.xlu0 22
    %2479 = vperm.xlu0 %2478, %v246
    %v2480 = vpop.permute.xlu0 %2479
    %2482 = vset.pattern.permute.xlu0 22
    %2483 = vperm.xlu0 %2482, %v247
    %v2484 = vpop.permute.xlu0 %2483
    %2486 = vset.pattern.permute.xlu0 22
    %2487 = vperm.xlu0 %2486, %v248
    %v2488 = vpop.permute.xlu0 %2487
    %2490 = vset.pattern.permute.xlu0 22
    %2491 = vperm.xlu0 %2490, %v249
    %v2492 = vpop.permute.xlu0 %2491
    %2494 = vset.pattern.permute.xlu0 22
    %2495 = vperm.xlu0 %2494, %v250
    %v2496 = vpop.permute.xlu0 %2495
    %2498 = vset.pattern.permute.xlu0 22
    %2499 = vperm.xlu0 %2498, %v251
    %v2500 = vpop.permute.xlu0 %2499
    %2502 = vset.pattern.permute.xlu0 22
    %2503 = vperm.xlu0 %2502, %v252
    %v2504 = vpop.permute.xlu0 %2503
    %2506 = vset.pattern.permute.xlu0 22
    %2507 = vperm.xlu0 %2506, %v253
    %v2508 = vpop.permute.xlu0 %2507
    %2510 = vset.pattern.permute.xlu0 22
    %2511 = vperm.xlu0 %2510, %v254
    %v2512 = vpop.permute.xlu0 %2511
    %2514 = vset.pattern.permute.xlu0 22
    %2515 = vperm.xlu0 %2514, %v255
    %v2516 = vpop.permute.xlu0 %2515
    %v2518 = vmul.f32 %v2453, %v2456
    %v2519 = vmul.f32 %v2453, %v2460
    %v2520 = vmul.f32 %v2453, %v2464
    %v2521 = vmul.f32 %v2453, %v2468
    %v2522 = vmul.f32 %v2453, %v2472
    %v2523 = vmul.f32 %v2453, %v2476
    %v2524 = vmul.f32 %v2453, %v2480
    %v2525 = vmul.f32 %v2453, %v2484
    %v2526 = vmul.f32 %v2453, %v2488
    %v2527 = vmul.f32 %v2453, %v2492
    %v2528 = vmul.f32 %v2453, %v2496
    %v2529 = vmul.f32 %v2453, %v2500
    %v2530 = vmul.f32 %v2453, %v2504
    %v2531 = vmul.f32 %v2453, %v2508
    %v2532 = vmul.f32 %v2453, %v2512
    %v2533 = vmul.f32 %v2453, %v2516
    %v2534 = vadd.f32 %v2435, %v2518
    %v2535 = vadd.f32 %v2436, %v2519
    %v2536 = vadd.f32 %v2437, %v2520
    %v2537 = vadd.f32 %v2438, %v2521
    %v2538 = vadd.f32 %v2439, %v2522
    %v2539 = vadd.f32 %v2440, %v2523
    %v2540 = vadd.f32 %v2441, %v2524
    %v2541 = vadd.f32 %v2442, %v2525
    %v2542 = vadd.f32 %v2443, %v2526
    %v2543 = vadd.f32 %v2444, %v2527
    %v2544 = vadd.f32 %v2445, %v2528
    %v2545 = vadd.f32 %v2446, %v2529
    %v2546 = vadd.f32 %v2447, %v2530
    %v2547 = vadd.f32 %v2448, %v2531
    %v2548 = vadd.f32 %v2449, %v2532
    %v2549 = vadd.f32 %v2450, %v2533
    %vm2550 = vcmp.eq.s32.totalorder %v256, 23
    %v2551 = vsel %vm2550, 1, 0
    %v2552 = vcvt.s32.f32 %v2551
    %2553 = vset.pattern.permute.xlu0 23
    %2554 = vperm.xlu0 %2553, %v240
    %v2555 = vpop.permute.xlu0 %2554
    %2557 = vset.pattern.permute.xlu0 23
    %2558 = vperm.xlu0 %2557, %v241
    %v2559 = vpop.permute.xlu0 %2558
    %2561 = vset.pattern.permute.xlu0 23
    %2562 = vperm.xlu0 %2561, %v242
    %v2563 = vpop.permute.xlu0 %2562
    %2565 = vset.pattern.permute.xlu0 23
    %2566 = vperm.xlu0 %2565, %v243
    %v2567 = vpop.permute.xlu0 %2566
    %2569 = vset.pattern.permute.xlu0 23
    %2570 = vperm.xlu0 %2569, %v244
    %v2571 = vpop.permute.xlu0 %2570
    %2573 = vset.pattern.permute.xlu0 23
    %2574 = vperm.xlu0 %2573, %v245
    %v2575 = vpop.permute.xlu0 %2574
    %2577 = vset.pattern.permute.xlu0 23
    %2578 = vperm.xlu0 %2577, %v246
    %v2579 = vpop.permute.xlu0 %2578
    %2581 = vset.pattern.permute.xlu0 23
    %2582 = vperm.xlu0 %2581, %v247
    %v2583 = vpop.permute.xlu0 %2582
    %2585 = vset.pattern.permute.xlu0 23
    %2586 = vperm.xlu0 %2585, %v248
    %v2587 = vpop.permute.xlu0 %2586
    %2589 = vset.pattern.permute.xlu0 23
    %2590 = vperm.xlu0 %2589, %v249
    %v2591 = vpop.permute.xlu0 %2590
    %2593 = vset.pattern.permute.xlu0 23
    %2594 = vperm.xlu0 %2593, %v250
    %v2595 = vpop.permute.xlu0 %2594
    %2597 = vset.pattern.permute.xlu0 23
    %2598 = vperm.xlu0 %2597, %v251
    %v2599 = vpop.permute.xlu0 %2598
    %2601 = vset.pattern.permute.xlu0 23
    %2602 = vperm.xlu0 %2601, %v252
    %v2603 = vpop.permute.xlu0 %2602
    %2605 = vset.pattern.permute.xlu0 23
    %2606 = vperm.xlu0 %2605, %v253
    %v2607 = vpop.permute.xlu0 %2606
    %2609 = vset.pattern.permute.xlu0 23
    %2610 = vperm.xlu0 %2609, %v254
    %v2611 = vpop.permute.xlu0 %2610
    %2613 = vset.pattern.permute.xlu0 23
    %2614 = vperm.xlu0 %2613, %v255
    %v2615 = vpop.permute.xlu0 %2614
    %v2617 = vmul.f32 %v2552, %v2555
    %v2618 = vmul.f32 %v2552, %v2559
    %v2619 = vmul.f32 %v2552, %v2563
    %v2620 = vmul.f32 %v2552, %v2567
    %v2621 = vmul.f32 %v2552, %v2571
    %v2622 = vmul.f32 %v2552, %v2575
    %v2623 = vmul.f32 %v2552, %v2579
    %v2624 = vmul.f32 %v2552, %v2583
    %v2625 = vmul.f32 %v2552, %v2587
    %v2626 = vmul.f32 %v2552, %v2591
    %v2627 = vmul.f32 %v2552, %v2595
    %v2628 = vmul.f32 %v2552, %v2599
    %v2629 = vmul.f32 %v2552, %v2603
    %v2630 = vmul.f32 %v2552, %v2607
    %v2631 = vmul.f32 %v2552, %v2611
    %v2632 = vmul.f32 %v2552, %v2615
    %v2633 = vadd.f32 %v2534, %v2617
    %v2634 = vadd.f32 %v2535, %v2618
    %v2635 = vadd.f32 %v2536, %v2619
    %v2636 = vadd.f32 %v2537, %v2620
    %v2637 = vadd.f32 %v2538, %v2621
    %v2638 = vadd.f32 %v2539, %v2622
    %v2639 = vadd.f32 %v2540, %v2623
    %v2640 = vadd.f32 %v2541, %v2624
    %v2641 = vadd.f32 %v2542, %v2625
    %v2642 = vadd.f32 %v2543, %v2626
    %v2643 = vadd.f32 %v2544, %v2627
    %v2644 = vadd.f32 %v2545, %v2628
    %v2645 = vadd.f32 %v2546, %v2629
    %v2646 = vadd.f32 %v2547, %v2630
    %v2647 = vadd.f32 %v2548, %v2631
    %v2648 = vadd.f32 %v2549, %v2632
    %vm2649 = vcmp.eq.s32.totalorder %v256, 24
    %v2650 = vsel %vm2649, 1, 0
    %v2651 = vcvt.s32.f32 %v2650
    %2652 = vset.pattern.permute.xlu0 24
    %2653 = vperm.xlu0 %2652, %v240
    %v2654 = vpop.permute.xlu0 %2653
    %2656 = vset.pattern.permute.xlu0 24
    %2657 = vperm.xlu0 %2656, %v241
    %v2658 = vpop.permute.xlu0 %2657
    %2660 = vset.pattern.permute.xlu0 24
    %2661 = vperm.xlu0 %2660, %v242
    %v2662 = vpop.permute.xlu0 %2661
    %2664 = vset.pattern.permute.xlu0 24
    %2665 = vperm.xlu0 %2664, %v243
    %v2666 = vpop.permute.xlu0 %2665
    %2668 = vset.pattern.permute.xlu0 24
    %2669 = vperm.xlu0 %2668, %v244
    %v2670 = vpop.permute.xlu0 %2669
    %2672 = vset.pattern.permute.xlu0 24
    %2673 = vperm.xlu0 %2672, %v245
    %v2674 = vpop.permute.xlu0 %2673
    %2676 = vset.pattern.permute.xlu0 24
    %2677 = vperm.xlu0 %2676, %v246
    %v2678 = vpop.permute.xlu0 %2677
    %2680 = vset.pattern.permute.xlu0 24
    %2681 = vperm.xlu0 %2680, %v247
    %v2682 = vpop.permute.xlu0 %2681
    %2684 = vset.pattern.permute.xlu0 24
    %2685 = vperm.xlu0 %2684, %v248
    %v2686 = vpop.permute.xlu0 %2685
    %2688 = vset.pattern.permute.xlu0 24
    %2689 = vperm.xlu0 %2688, %v249
    %v2690 = vpop.permute.xlu0 %2689
    %2692 = vset.pattern.permute.xlu0 24
    %2693 = vperm.xlu0 %2692, %v250
    %v2694 = vpop.permute.xlu0 %2693
    %2696 = vset.pattern.permute.xlu0 24
    %2697 = vperm.xlu0 %2696, %v251
    %v2698 = vpop.permute.xlu0 %2697
    %2700 = vset.pattern.permute.xlu0 24
    %2701 = vperm.xlu0 %2700, %v252
    %v2702 = vpop.permute.xlu0 %2701
    %2704 = vset.pattern.permute.xlu0 24
    %2705 = vperm.xlu0 %2704, %v253
    %v2706 = vpop.permute.xlu0 %2705
    %2708 = vset.pattern.permute.xlu0 24
    %2709 = vperm.xlu0 %2708, %v254
    %v2710 = vpop.permute.xlu0 %2709
    %2712 = vset.pattern.permute.xlu0 24
    %2713 = vperm.xlu0 %2712, %v255
    %v2714 = vpop.permute.xlu0 %2713
    %v2716 = vmul.f32 %v2651, %v2654
    %v2717 = vmul.f32 %v2651, %v2658
    %v2718 = vmul.f32 %v2651, %v2662
    %v2719 = vmul.f32 %v2651, %v2666
    %v2720 = vmul.f32 %v2651, %v2670
    %v2721 = vmul.f32 %v2651, %v2674
    %v2722 = vmul.f32 %v2651, %v2678
    %v2723 = vmul.f32 %v2651, %v2682
    %v2724 = vmul.f32 %v2651, %v2686
    %v2725 = vmul.f32 %v2651, %v2690
    %v2726 = vmul.f32 %v2651, %v2694
    %v2727 = vmul.f32 %v2651, %v2698
    %v2728 = vmul.f32 %v2651, %v2702
    %v2729 = vmul.f32 %v2651, %v2706
    %v2730 = vmul.f32 %v2651, %v2710
    %v2731 = vmul.f32 %v2651, %v2714
    %v2732 = vadd.f32 %v2633, %v2716
    %v2733 = vadd.f32 %v2634, %v2717
    %v2734 = vadd.f32 %v2635, %v2718
    %v2735 = vadd.f32 %v2636, %v2719
    %v2736 = vadd.f32 %v2637, %v2720
    %v2737 = vadd.f32 %v2638, %v2721
    %v2738 = vadd.f32 %v2639, %v2722
    %v2739 = vadd.f32 %v2640, %v2723
    %v2740 = vadd.f32 %v2641, %v2724
    %v2741 = vadd.f32 %v2642, %v2725
    %v2742 = vadd.f32 %v2643, %v2726
    %v2743 = vadd.f32 %v2644, %v2727
    %v2744 = vadd.f32 %v2645, %v2728
    %v2745 = vadd.f32 %v2646, %v2729
    %v2746 = vadd.f32 %v2647, %v2730
    %v2747 = vadd.f32 %v2648, %v2731
    %vm2748 = vcmp.eq.s32.totalorder %v256, 25
    %v2749 = vsel %vm2748, 1, 0
    %v2750 = vcvt.s32.f32 %v2749
    %2751 = vset.pattern.permute.xlu0 25
    %2752 = vperm.xlu0 %2751, %v240
    %v2753 = vpop.permute.xlu0 %2752
    %2755 = vset.pattern.permute.xlu0 25
    %2756 = vperm.xlu0 %2755, %v241
    %v2757 = vpop.permute.xlu0 %2756
    %2759 = vset.pattern.permute.xlu0 25
    %2760 = vperm.xlu0 %2759, %v242
    %v2761 = vpop.permute.xlu0 %2760
    %2763 = vset.pattern.permute.xlu0 25
    %2764 = vperm.xlu0 %2763, %v243
    %v2765 = vpop.permute.xlu0 %2764
    %2767 = vset.pattern.permute.xlu0 25
    %2768 = vperm.xlu0 %2767, %v244
    %v2769 = vpop.permute.xlu0 %2768
    %2771 = vset.pattern.permute.xlu0 25
    %2772 = vperm.xlu0 %2771, %v245
    %v2773 = vpop.permute.xlu0 %2772
    %2775 = vset.pattern.permute.xlu0 25
    %2776 = vperm.xlu0 %2775, %v246
    %v2777 = vpop.permute.xlu0 %2776
    %2779 = vset.pattern.permute.xlu0 25
    %2780 = vperm.xlu0 %2779, %v247
    %v2781 = vpop.permute.xlu0 %2780
    %2783 = vset.pattern.permute.xlu0 25
    %2784 = vperm.xlu0 %2783, %v248
    %v2785 = vpop.permute.xlu0 %2784
    %2787 = vset.pattern.permute.xlu0 25
    %2788 = vperm.xlu0 %2787, %v249
    %v2789 = vpop.permute.xlu0 %2788
    %2791 = vset.pattern.permute.xlu0 25
    %2792 = vperm.xlu0 %2791, %v250
    %v2793 = vpop.permute.xlu0 %2792
    %2795 = vset.pattern.permute.xlu0 25
    %2796 = vperm.xlu0 %2795, %v251
    %v2797 = vpop.permute.xlu0 %2796
    %2799 = vset.pattern.permute.xlu0 25
    %2800 = vperm.xlu0 %2799, %v252
    %v2801 = vpop.permute.xlu0 %2800
    %2803 = vset.pattern.permute.xlu0 25
    %2804 = vperm.xlu0 %2803, %v253
    %v2805 = vpop.permute.xlu0 %2804
    %2807 = vset.pattern.permute.xlu0 25
    %2808 = vperm.xlu0 %2807, %v254
    %v2809 = vpop.permute.xlu0 %2808
    %2811 = vset.pattern.permute.xlu0 25
    %2812 = vperm.xlu0 %2811, %v255
    %v2813 = vpop.permute.xlu0 %2812
    %v2815 = vmul.f32 %v2750, %v2753
    %v2816 = vmul.f32 %v2750, %v2757
    %v2817 = vmul.f32 %v2750, %v2761
    %v2818 = vmul.f32 %v2750, %v2765
    %v2819 = vmul.f32 %v2750, %v2769
    %v2820 = vmul.f32 %v2750, %v2773
    %v2821 = vmul.f32 %v2750, %v2777
    %v2822 = vmul.f32 %v2750, %v2781
    %v2823 = vmul.f32 %v2750, %v2785
    %v2824 = vmul.f32 %v2750, %v2789
    %v2825 = vmul.f32 %v2750, %v2793
    %v2826 = vmul.f32 %v2750, %v2797
    %v2827 = vmul.f32 %v2750, %v2801
    %v2828 = vmul.f32 %v2750, %v2805
    %v2829 = vmul.f32 %v2750, %v2809
    %v2830 = vmul.f32 %v2750, %v2813
    %v2831 = vadd.f32 %v2732, %v2815
    %v2832 = vadd.f32 %v2733, %v2816
    %v2833 = vadd.f32 %v2734, %v2817
    %v2834 = vadd.f32 %v2735, %v2818
    %v2835 = vadd.f32 %v2736, %v2819
    %v2836 = vadd.f32 %v2737, %v2820
    %v2837 = vadd.f32 %v2738, %v2821
    %v2838 = vadd.f32 %v2739, %v2822
    %v2839 = vadd.f32 %v2740, %v2823
    %v2840 = vadd.f32 %v2741, %v2824
    %v2841 = vadd.f32 %v2742, %v2825
    %v2842 = vadd.f32 %v2743, %v2826
    %v2843 = vadd.f32 %v2744, %v2827
    %v2844 = vadd.f32 %v2745, %v2828
    %v2845 = vadd.f32 %v2746, %v2829
    %v2846 = vadd.f32 %v2747, %v2830
    %vm2847 = vcmp.eq.s32.totalorder %v256, 26
    %v2848 = vsel %vm2847, 1, 0
    %v2849 = vcvt.s32.f32 %v2848
    %2850 = vset.pattern.permute.xlu0 26
    %2851 = vperm.xlu0 %2850, %v240
    %v2852 = vpop.permute.xlu0 %2851
    %2854 = vset.pattern.permute.xlu0 26
    %2855 = vperm.xlu0 %2854, %v241
    %v2856 = vpop.permute.xlu0 %2855
    %2858 = vset.pattern.permute.xlu0 26
    %2859 = vperm.xlu0 %2858, %v242
    %v2860 = vpop.permute.xlu0 %2859
    %2862 = vset.pattern.permute.xlu0 26
    %2863 = vperm.xlu0 %2862, %v243
    %v2864 = vpop.permute.xlu0 %2863
    %2866 = vset.pattern.permute.xlu0 26
    %2867 = vperm.xlu0 %2866, %v244
    %v2868 = vpop.permute.xlu0 %2867
    %2870 = vset.pattern.permute.xlu0 26
    %2871 = vperm.xlu0 %2870, %v245
    %v2872 = vpop.permute.xlu0 %2871
    %2874 = vset.pattern.permute.xlu0 26
    %2875 = vperm.xlu0 %2874, %v246
    %v2876 = vpop.permute.xlu0 %2875
    %2878 = vset.pattern.permute.xlu0 26
    %2879 = vperm.xlu0 %2878, %v247
    %v2880 = vpop.permute.xlu0 %2879
    %2882 = vset.pattern.permute.xlu0 26
    %2883 = vperm.xlu0 %2882, %v248
    %v2884 = vpop.permute.xlu0 %2883
    %2886 = vset.pattern.permute.xlu0 26
    %2887 = vperm.xlu0 %2886, %v249
    %v2888 = vpop.permute.xlu0 %2887
    %2890 = vset.pattern.permute.xlu0 26
    %2891 = vperm.xlu0 %2890, %v250
    %v2892 = vpop.permute.xlu0 %2891
    %2894 = vset.pattern.permute.xlu0 26
    %2895 = vperm.xlu0 %2894, %v251
    %v2896 = vpop.permute.xlu0 %2895
    %2898 = vset.pattern.permute.xlu0 26
    %2899 = vperm.xlu0 %2898, %v252
    %v2900 = vpop.permute.xlu0 %2899
    %2902 = vset.pattern.permute.xlu0 26
    %2903 = vperm.xlu0 %2902, %v253
    %v2904 = vpop.permute.xlu0 %2903
    %2906 = vset.pattern.permute.xlu0 26
    %2907 = vperm.xlu0 %2906, %v254
    %v2908 = vpop.permute.xlu0 %2907
    %2910 = vset.pattern.permute.xlu0 26
    %2911 = vperm.xlu0 %2910, %v255
    %v2912 = vpop.permute.xlu0 %2911
    %v2914 = vmul.f32 %v2849, %v2852
    %v2915 = vmul.f32 %v2849, %v2856
    %v2916 = vmul.f32 %v2849, %v2860
    %v2917 = vmul.f32 %v2849, %v2864
    %v2918 = vmul.f32 %v2849, %v2868
    %v2919 = vmul.f32 %v2849, %v2872
    %v2920 = vmul.f32 %v2849, %v2876
    %v2921 = vmul.f32 %v2849, %v2880
    %v2922 = vmul.f32 %v2849, %v2884
    %v2923 = vmul.f32 %v2849, %v2888
    %v2924 = vmul.f32 %v2849, %v2892
    %v2925 = vmul.f32 %v2849, %v2896
    %v2926 = vmul.f32 %v2849, %v2900
    %v2927 = vmul.f32 %v2849, %v2904
    %v2928 = vmul.f32 %v2849, %v2908
    %v2929 = vmul.f32 %v2849, %v2912
    %v2930 = vadd.f32 %v2831, %v2914
    %v2931 = vadd.f32 %v2832, %v2915
    %v2932 = vadd.f32 %v2833, %v2916
    %v2933 = vadd.f32 %v2834, %v2917
    %v2934 = vadd.f32 %v2835, %v2918
    %v2935 = vadd.f32 %v2836, %v2919
    %v2936 = vadd.f32 %v2837, %v2920
    %v2937 = vadd.f32 %v2838, %v2921
    %v2938 = vadd.f32 %v2839, %v2922
    %v2939 = vadd.f32 %v2840, %v2923
    %v2940 = vadd.f32 %v2841, %v2924
    %v2941 = vadd.f32 %v2842, %v2925
    %v2942 = vadd.f32 %v2843, %v2926
    %v2943 = vadd.f32 %v2844, %v2927
    %v2944 = vadd.f32 %v2845, %v2928
    %v2945 = vadd.f32 %v2846, %v2929
    %vm2946 = vcmp.eq.s32.totalorder %v256, 27
    %v2947 = vsel %vm2946, 1, 0
    %v2948 = vcvt.s32.f32 %v2947
    %2949 = vset.pattern.permute.xlu0 27
    %2950 = vperm.xlu0 %2949, %v240
    %v2951 = vpop.permute.xlu0 %2950
    %2953 = vset.pattern.permute.xlu0 27
    %2954 = vperm.xlu0 %2953, %v241
    %v2955 = vpop.permute.xlu0 %2954
    %2957 = vset.pattern.permute.xlu0 27
    %2958 = vperm.xlu0 %2957, %v242
    %v2959 = vpop.permute.xlu0 %2958
    %2961 = vset.pattern.permute.xlu0 27
    %2962 = vperm.xlu0 %2961, %v243
    %v2963 = vpop.permute.xlu0 %2962
    %2965 = vset.pattern.permute.xlu0 27
    %2966 = vperm.xlu0 %2965, %v244
    %v2967 = vpop.permute.xlu0 %2966
    %2969 = vset.pattern.permute.xlu0 27
    %2970 = vperm.xlu0 %2969, %v245
    %v2971 = vpop.permute.xlu0 %2970
    %2973 = vset.pattern.permute.xlu0 27
    %2974 = vperm.xlu0 %2973, %v246
    %v2975 = vpop.permute.xlu0 %2974
    %2977 = vset.pattern.permute.xlu0 27
    %2978 = vperm.xlu0 %2977, %v247
    %v2979 = vpop.permute.xlu0 %2978
    %2981 = vset.pattern.permute.xlu0 27
    %2982 = vperm.xlu0 %2981, %v248
    %v2983 = vpop.permute.xlu0 %2982
    %2985 = vset.pattern.permute.xlu0 27
    %2986 = vperm.xlu0 %2985, %v249
    %v2987 = vpop.permute.xlu0 %2986
    %2989 = vset.pattern.permute.xlu0 27
    %2990 = vperm.xlu0 %2989, %v250
    %v2991 = vpop.permute.xlu0 %2990
    %2993 = vset.pattern.permute.xlu0 27
    %2994 = vperm.xlu0 %2993, %v251
    %v2995 = vpop.permute.xlu0 %2994
    %2997 = vset.pattern.permute.xlu0 27
    %2998 = vperm.xlu0 %2997, %v252
    %v2999 = vpop.permute.xlu0 %2998
    %3001 = vset.pattern.permute.xlu0 27
    %3002 = vperm.xlu0 %3001, %v253
    %v3003 = vpop.permute.xlu0 %3002
    %3005 = vset.pattern.permute.xlu0 27
    %3006 = vperm.xlu0 %3005, %v254
    %v3007 = vpop.permute.xlu0 %3006
    %3009 = vset.pattern.permute.xlu0 27
    %3010 = vperm.xlu0 %3009, %v255
    %v3011 = vpop.permute.xlu0 %3010
    %v3013 = vmul.f32 %v2948, %v2951
    %v3014 = vmul.f32 %v2948, %v2955
    %v3015 = vmul.f32 %v2948, %v2959
    %v3016 = vmul.f32 %v2948, %v2963
    %v3017 = vmul.f32 %v2948, %v2967
    %v3018 = vmul.f32 %v2948, %v2971
    %v3019 = vmul.f32 %v2948, %v2975
    %v3020 = vmul.f32 %v2948, %v2979
    %v3021 = vmul.f32 %v2948, %v2983
    %v3022 = vmul.f32 %v2948, %v2987
    %v3023 = vmul.f32 %v2948, %v2991
    %v3024 = vmul.f32 %v2948, %v2995
    %v3025 = vmul.f32 %v2948, %v2999
    %v3026 = vmul.f32 %v2948, %v3003
    %v3027 = vmul.f32 %v2948, %v3007
    %v3028 = vmul.f32 %v2948, %v3011
    %v3029 = vadd.f32 %v2930, %v3013
    %v3030 = vadd.f32 %v2931, %v3014
    %v3031 = vadd.f32 %v2932, %v3015
    %v3032 = vadd.f32 %v2933, %v3016
    %v3033 = vadd.f32 %v2934, %v3017
    %v3034 = vadd.f32 %v2935, %v3018
    %v3035 = vadd.f32 %v2936, %v3019
    %v3036 = vadd.f32 %v2937, %v3020
    %v3037 = vadd.f32 %v2938, %v3021
    %v3038 = vadd.f32 %v2939, %v3022
    %v3039 = vadd.f32 %v2940, %v3023
    %v3040 = vadd.f32 %v2941, %v3024
    %v3041 = vadd.f32 %v2942, %v3025
    %v3042 = vadd.f32 %v2943, %v3026
    %v3043 = vadd.f32 %v2944, %v3027
    %v3044 = vadd.f32 %v2945, %v3028
    %vm3045 = vcmp.eq.s32.totalorder %v256, 28
    %v3046 = vsel %vm3045, 1, 0
    %v3047 = vcvt.s32.f32 %v3046
    %3048 = vset.pattern.permute.xlu0 28
    %3049 = vperm.xlu0 %3048, %v240
    %v3050 = vpop.permute.xlu0 %3049
    %3052 = vset.pattern.permute.xlu0 28
    %3053 = vperm.xlu0 %3052, %v241
    %v3054 = vpop.permute.xlu0 %3053
    %3056 = vset.pattern.permute.xlu0 28
    %3057 = vperm.xlu0 %3056, %v242
    %v3058 = vpop.permute.xlu0 %3057
    %3060 = vset.pattern.permute.xlu0 28
    %3061 = vperm.xlu0 %3060, %v243
    %v3062 = vpop.permute.xlu0 %3061
    %3064 = vset.pattern.permute.xlu0 28
    %3065 = vperm.xlu0 %3064, %v244
    %v3066 = vpop.permute.xlu0 %3065
    %3068 = vset.pattern.permute.xlu0 28
    %3069 = vperm.xlu0 %3068, %v245
    %v3070 = vpop.permute.xlu0 %3069
    %3072 = vset.pattern.permute.xlu0 28
    %3073 = vperm.xlu0 %3072, %v246
    %v3074 = vpop.permute.xlu0 %3073
    %3076 = vset.pattern.permute.xlu0 28
    %3077 = vperm.xlu0 %3076, %v247
    %v3078 = vpop.permute.xlu0 %3077
    %3080 = vset.pattern.permute.xlu0 28
    %3081 = vperm.xlu0 %3080, %v248
    %v3082 = vpop.permute.xlu0 %3081
    %3084 = vset.pattern.permute.xlu0 28
    %3085 = vperm.xlu0 %3084, %v249
    %v3086 = vpop.permute.xlu0 %3085
    %3088 = vset.pattern.permute.xlu0 28
    %3089 = vperm.xlu0 %3088, %v250
    %v3090 = vpop.permute.xlu0 %3089
    %3092 = vset.pattern.permute.xlu0 28
    %3093 = vperm.xlu0 %3092, %v251
    %v3094 = vpop.permute.xlu0 %3093
    %3096 = vset.pattern.permute.xlu0 28
    %3097 = vperm.xlu0 %3096, %v252
    %v3098 = vpop.permute.xlu0 %3097
    %3100 = vset.pattern.permute.xlu0 28
    %3101 = vperm.xlu0 %3100, %v253
    %v3102 = vpop.permute.xlu0 %3101
    %3104 = vset.pattern.permute.xlu0 28
    %3105 = vperm.xlu0 %3104, %v254
    %v3106 = vpop.permute.xlu0 %3105
    %3108 = vset.pattern.permute.xlu0 28
    %3109 = vperm.xlu0 %3108, %v255
    %v3110 = vpop.permute.xlu0 %3109
    %v3112 = vmul.f32 %v3047, %v3050
    %v3113 = vmul.f32 %v3047, %v3054
    %v3114 = vmul.f32 %v3047, %v3058
    %v3115 = vmul.f32 %v3047, %v3062
    %v3116 = vmul.f32 %v3047, %v3066
    %v3117 = vmul.f32 %v3047, %v3070
    %v3118 = vmul.f32 %v3047, %v3074
    %v3119 = vmul.f32 %v3047, %v3078
    %v3120 = vmul.f32 %v3047, %v3082
    %v3121 = vmul.f32 %v3047, %v3086
    %v3122 = vmul.f32 %v3047, %v3090
    %v3123 = vmul.f32 %v3047, %v3094
    %v3124 = vmul.f32 %v3047, %v3098
    %v3125 = vmul.f32 %v3047, %v3102
    %v3126 = vmul.f32 %v3047, %v3106
    %v3127 = vmul.f32 %v3047, %v3110
    %v3128 = vadd.f32 %v3029, %v3112
    %v3129 = vadd.f32 %v3030, %v3113
    %v3130 = vadd.f32 %v3031, %v3114
    %v3131 = vadd.f32 %v3032, %v3115
    %v3132 = vadd.f32 %v3033, %v3116
    %v3133 = vadd.f32 %v3034, %v3117
    %v3134 = vadd.f32 %v3035, %v3118
    %v3135 = vadd.f32 %v3036, %v3119
    %v3136 = vadd.f32 %v3037, %v3120
    %v3137 = vadd.f32 %v3038, %v3121
    %v3138 = vadd.f32 %v3039, %v3122
    %v3139 = vadd.f32 %v3040, %v3123
    %v3140 = vadd.f32 %v3041, %v3124
    %v3141 = vadd.f32 %v3042, %v3125
    %v3142 = vadd.f32 %v3043, %v3126
    %v3143 = vadd.f32 %v3044, %v3127
    %vm3144 = vcmp.eq.s32.totalorder %v256, 29
    %v3145 = vsel %vm3144, 1, 0
    %v3146 = vcvt.s32.f32 %v3145
    %3147 = vset.pattern.permute.xlu0 29
    %3148 = vperm.xlu0 %3147, %v240
    %v3149 = vpop.permute.xlu0 %3148
    %3151 = vset.pattern.permute.xlu0 29
    %3152 = vperm.xlu0 %3151, %v241
    %v3153 = vpop.permute.xlu0 %3152
    %3155 = vset.pattern.permute.xlu0 29
    %3156 = vperm.xlu0 %3155, %v242
    %v3157 = vpop.permute.xlu0 %3156
    %3159 = vset.pattern.permute.xlu0 29
    %3160 = vperm.xlu0 %3159, %v243
    %v3161 = vpop.permute.xlu0 %3160
    %3163 = vset.pattern.permute.xlu0 29
    %3164 = vperm.xlu0 %3163, %v244
    %v3165 = vpop.permute.xlu0 %3164
    %3167 = vset.pattern.permute.xlu0 29
    %3168 = vperm.xlu0 %3167, %v245
    %v3169 = vpop.permute.xlu0 %3168
    %3171 = vset.pattern.permute.xlu0 29
    %3172 = vperm.xlu0 %3171, %v246
    %v3173 = vpop.permute.xlu0 %3172
    %3175 = vset.pattern.permute.xlu0 29
    %3176 = vperm.xlu0 %3175, %v247
    %v3177 = vpop.permute.xlu0 %3176
    %3179 = vset.pattern.permute.xlu0 29
    %3180 = vperm.xlu0 %3179, %v248
    %v3181 = vpop.permute.xlu0 %3180
    %3183 = vset.pattern.permute.xlu0 29
    %3184 = vperm.xlu0 %3183, %v249
    %v3185 = vpop.permute.xlu0 %3184
    %3187 = vset.pattern.permute.xlu0 29
    %3188 = vperm.xlu0 %3187, %v250
    %v3189 = vpop.permute.xlu0 %3188
    %3191 = vset.pattern.permute.xlu0 29
    %3192 = vperm.xlu0 %3191, %v251
    %v3193 = vpop.permute.xlu0 %3192
    %3195 = vset.pattern.permute.xlu0 29
    %3196 = vperm.xlu0 %3195, %v252
    %v3197 = vpop.permute.xlu0 %3196
    %3199 = vset.pattern.permute.xlu0 29
    %3200 = vperm.xlu0 %3199, %v253
    %v3201 = vpop.permute.xlu0 %3200
    %3203 = vset.pattern.permute.xlu0 29
    %3204 = vperm.xlu0 %3203, %v254
    %v3205 = vpop.permute.xlu0 %3204
    %3207 = vset.pattern.permute.xlu0 29
    %3208 = vperm.xlu0 %3207, %v255
    %v3209 = vpop.permute.xlu0 %3208
    %v3211 = vmul.f32 %v3146, %v3149
    %v3212 = vmul.f32 %v3146, %v3153
    %v3213 = vmul.f32 %v3146, %v3157
    %v3214 = vmul.f32 %v3146, %v3161
    %v3215 = vmul.f32 %v3146, %v3165
    %v3216 = vmul.f32 %v3146, %v3169
    %v3217 = vmul.f32 %v3146, %v3173
    %v3218 = vmul.f32 %v3146, %v3177
    %v3219 = vmul.f32 %v3146, %v3181
    %v3220 = vmul.f32 %v3146, %v3185
    %v3221 = vmul.f32 %v3146, %v3189
    %v3222 = vmul.f32 %v3146, %v3193
    %v3223 = vmul.f32 %v3146, %v3197
    %v3224 = vmul.f32 %v3146, %v3201
    %v3225 = vmul.f32 %v3146, %v3205
    %v3226 = vmul.f32 %v3146, %v3209
    %v3227 = vadd.f32 %v3128, %v3211
    %v3228 = vadd.f32 %v3129, %v3212
    %v3229 = vadd.f32 %v3130, %v3213
    %v3230 = vadd.f32 %v3131, %v3214
    %v3231 = vadd.f32 %v3132, %v3215
    %v3232 = vadd.f32 %v3133, %v3216
    %v3233 = vadd.f32 %v3134, %v3217
    %v3234 = vadd.f32 %v3135, %v3218
    %v3235 = vadd.f32 %v3136, %v3219
    %v3236 = vadd.f32 %v3137, %v3220
    %v3237 = vadd.f32 %v3138, %v3221
    %v3238 = vadd.f32 %v3139, %v3222
    %v3239 = vadd.f32 %v3140, %v3223
    %v3240 = vadd.f32 %v3141, %v3224
    %v3241 = vadd.f32 %v3142, %v3225
    %v3242 = vadd.f32 %v3143, %v3226
    %vm3243 = vcmp.eq.s32.totalorder %v256, 30
    %v3244 = vsel %vm3243, 1, 0
    %v3245 = vcvt.s32.f32 %v3244
    %3246 = vset.pattern.permute.xlu0 30
    %3247 = vperm.xlu0 %3246, %v240
    %v3248 = vpop.permute.xlu0 %3247
    %3250 = vset.pattern.permute.xlu0 30
    %3251 = vperm.xlu0 %3250, %v241
    %v3252 = vpop.permute.xlu0 %3251
    %3254 = vset.pattern.permute.xlu0 30
    %3255 = vperm.xlu0 %3254, %v242
    %v3256 = vpop.permute.xlu0 %3255
    %3258 = vset.pattern.permute.xlu0 30
    %3259 = vperm.xlu0 %3258, %v243
    %v3260 = vpop.permute.xlu0 %3259
    %3262 = vset.pattern.permute.xlu0 30
    %3263 = vperm.xlu0 %3262, %v244
    %v3264 = vpop.permute.xlu0 %3263
    %3266 = vset.pattern.permute.xlu0 30
    %3267 = vperm.xlu0 %3266, %v245
    %v3268 = vpop.permute.xlu0 %3267
    %3270 = vset.pattern.permute.xlu0 30
    %3271 = vperm.xlu0 %3270, %v246
    %v3272 = vpop.permute.xlu0 %3271
    %3274 = vset.pattern.permute.xlu0 30
    %3275 = vperm.xlu0 %3274, %v247
    %v3276 = vpop.permute.xlu0 %3275
    %3278 = vset.pattern.permute.xlu0 30
    %3279 = vperm.xlu0 %3278, %v248
    %v3280 = vpop.permute.xlu0 %3279
    %3282 = vset.pattern.permute.xlu0 30
    %3283 = vperm.xlu0 %3282, %v249
    %v3284 = vpop.permute.xlu0 %3283
    %3286 = vset.pattern.permute.xlu0 30
    %3287 = vperm.xlu0 %3286, %v250
    %v3288 = vpop.permute.xlu0 %3287
    %3290 = vset.pattern.permute.xlu0 30
    %3291 = vperm.xlu0 %3290, %v251
    %v3292 = vpop.permute.xlu0 %3291
    %3294 = vset.pattern.permute.xlu0 30
    %3295 = vperm.xlu0 %3294, %v252
    %v3296 = vpop.permute.xlu0 %3295
    %3298 = vset.pattern.permute.xlu0 30
    %3299 = vperm.xlu0 %3298, %v253
    %v3300 = vpop.permute.xlu0 %3299
    %3302 = vset.pattern.permute.xlu0 30
    %3303 = vperm.xlu0 %3302, %v254
    %v3304 = vpop.permute.xlu0 %3303
    %3306 = vset.pattern.permute.xlu0 30
    %3307 = vperm.xlu0 %3306, %v255
    %v3308 = vpop.permute.xlu0 %3307
    %v3310 = vmul.f32 %v3245, %v3248
    %v3311 = vmul.f32 %v3245, %v3252
    %v3312 = vmul.f32 %v3245, %v3256
    %v3313 = vmul.f32 %v3245, %v3260
    %v3314 = vmul.f32 %v3245, %v3264
    %v3315 = vmul.f32 %v3245, %v3268
    %v3316 = vmul.f32 %v3245, %v3272
    %v3317 = vmul.f32 %v3245, %v3276
    %v3318 = vmul.f32 %v3245, %v3280
    %v3319 = vmul.f32 %v3245, %v3284
    %v3320 = vmul.f32 %v3245, %v3288
    %v3321 = vmul.f32 %v3245, %v3292
    %v3322 = vmul.f32 %v3245, %v3296
    %v3323 = vmul.f32 %v3245, %v3300
    %v3324 = vmul.f32 %v3245, %v3304
    %v3325 = vmul.f32 %v3245, %v3308
    %v3326 = vadd.f32 %v3227, %v3310
    %v3327 = vadd.f32 %v3228, %v3311
    %v3328 = vadd.f32 %v3229, %v3312
    %v3329 = vadd.f32 %v3230, %v3313
    %v3330 = vadd.f32 %v3231, %v3314
    %v3331 = vadd.f32 %v3232, %v3315
    %v3332 = vadd.f32 %v3233, %v3316
    %v3333 = vadd.f32 %v3234, %v3317
    %v3334 = vadd.f32 %v3235, %v3318
    %v3335 = vadd.f32 %v3236, %v3319
    %v3336 = vadd.f32 %v3237, %v3320
    %v3337 = vadd.f32 %v3238, %v3321
    %v3338 = vadd.f32 %v3239, %v3322
    %v3339 = vadd.f32 %v3240, %v3323
    %v3340 = vadd.f32 %v3241, %v3324
    %v3341 = vadd.f32 %v3242, %v3325
    %vm3342 = vcmp.eq.s32.totalorder %v256, 31
    %v3343 = vsel %vm3342, 1, 0
    %v3344 = vcvt.s32.f32 %v3343
    %3345 = vset.pattern.permute.xlu0 31
    %3346 = vperm.xlu0 %3345, %v240
    %v3347 = vpop.permute.xlu0 %3346
    %3349 = vset.pattern.permute.xlu0 31
    %3350 = vperm.xlu0 %3349, %v241
    %v3351 = vpop.permute.xlu0 %3350
    %3353 = vset.pattern.permute.xlu0 31
    %3354 = vperm.xlu0 %3353, %v242
    %v3355 = vpop.permute.xlu0 %3354
    %3357 = vset.pattern.permute.xlu0 31
    %3358 = vperm.xlu0 %3357, %v243
    %v3359 = vpop.permute.xlu0 %3358
    %3361 = vset.pattern.permute.xlu0 31
    %3362 = vperm.xlu0 %3361, %v244
    %v3363 = vpop.permute.xlu0 %3362
    %3365 = vset.pattern.permute.xlu0 31
    %3366 = vperm.xlu0 %3365, %v245
    %v3367 = vpop.permute.xlu0 %3366
    %3369 = vset.pattern.permute.xlu0 31
    %3370 = vperm.xlu0 %3369, %v246
    %v3371 = vpop.permute.xlu0 %3370
    %3373 = vset.pattern.permute.xlu0 31
    %3374 = vperm.xlu0 %3373, %v247
    %v3375 = vpop.permute.xlu0 %3374
    %3377 = vset.pattern.permute.xlu0 31
    %3378 = vperm.xlu0 %3377, %v248
    %v3379 = vpop.permute.xlu0 %3378
    %3381 = vset.pattern.permute.xlu0 31
    %3382 = vperm.xlu0 %3381, %v249
    %v3383 = vpop.permute.xlu0 %3382
    %3385 = vset.pattern.permute.xlu0 31
    %3386 = vperm.xlu0 %3385, %v250
    %v3387 = vpop.permute.xlu0 %3386
    %3389 = vset.pattern.permute.xlu0 31
    %3390 = vperm.xlu0 %3389, %v251
    %v3391 = vpop.permute.xlu0 %3390
    %3393 = vset.pattern.permute.xlu0 31
    %3394 = vperm.xlu0 %3393, %v252
    %v3395 = vpop.permute.xlu0 %3394
    %3397 = vset.pattern.permute.xlu0 31
    %3398 = vperm.xlu0 %3397, %v253
    %v3399 = vpop.permute.xlu0 %3398
    %3401 = vset.pattern.permute.xlu0 31
    %3402 = vperm.xlu0 %3401, %v254
    %v3403 = vpop.permute.xlu0 %3402
    %3405 = vset.pattern.permute.xlu0 31
    %3406 = vperm.xlu0 %3405, %v255
    %v3407 = vpop.permute.xlu0 %3406
    %v3409 = vmul.f32 %v3344, %v3347
    %v3410 = vmul.f32 %v3344, %v3351
    %v3411 = vmul.f32 %v3344, %v3355
    %v3412 = vmul.f32 %v3344, %v3359
    %v3413 = vmul.f32 %v3344, %v3363
    %v3414 = vmul.f32 %v3344, %v3367
    %v3415 = vmul.f32 %v3344, %v3371
    %v3416 = vmul.f32 %v3344, %v3375
    %v3417 = vmul.f32 %v3344, %v3379
    %v3418 = vmul.f32 %v3344, %v3383
    %v3419 = vmul.f32 %v3344, %v3387
    %v3420 = vmul.f32 %v3344, %v3391
    %v3421 = vmul.f32 %v3344, %v3395
    %v3422 = vmul.f32 %v3344, %v3399
    %v3423 = vmul.f32 %v3344, %v3403
    %v3424 = vmul.f32 %v3344, %v3407
    %v3425 = vadd.f32 %v3326, %v3409
    %v3426 = vadd.f32 %v3327, %v3410
    %v3427 = vadd.f32 %v3328, %v3411
    %v3428 = vadd.f32 %v3329, %v3412
    %v3429 = vadd.f32 %v3330, %v3413
    %v3430 = vadd.f32 %v3331, %v3414
    %v3431 = vadd.f32 %v3332, %v3415
    %v3432 = vadd.f32 %v3333, %v3416
    %v3433 = vadd.f32 %v3334, %v3417
    %v3434 = vadd.f32 %v3335, %v3418
    %v3435 = vadd.f32 %v3336, %v3419
    %v3436 = vadd.f32 %v3337, %v3420
    %v3437 = vadd.f32 %v3338, %v3421
    %v3438 = vadd.f32 %v3339, %v3422
    %v3439 = vadd.f32 %v3340, %v3423
    %v3440 = vadd.f32 %v3341, %v3424
    %3441 = vst [vmem:[#allocation2] sm:$0xff] %v3425
    %3442 = vst [vmem:[#allocation2 + $0x8] sm:$0xff] %v3426
    %3443 = vst [vmem:[#allocation2 + $0x10] sm:$0xff] %v3427
    %3444 = vst [vmem:[#allocation2 + $0x18] sm:$0xff] %v3428
    %3445 = vst [vmem:[#allocation2 + $0x20] sm:$0xff] %v3429
    %3446 = vst [vmem:[#allocation2 + $0x28] sm:$0xff] %v3430
    %3447 = vst [vmem:[#allocation2 + $0x30] sm:$0xff] %v3431
    %3448 = vst [vmem:[#allocation2 + $0x38] sm:$0xff] %v3432
    %3449 = vst [vmem:[#allocation2 + $0x40] sm:$0xff] %v3433
    %3450 = vst [vmem:[#allocation2 + $0x48] sm:$0xff] %v3434
    %3451 = vst [vmem:[#allocation2 + $0x50] sm:$0xff] %v3435
    %3452 = vst [vmem:[#allocation2 + $0x58] sm:$0xff] %v3436
    %3453 = vst [vmem:[#allocation2 + $0x60] sm:$0xff] %v3437
    %3454 = vst [vmem:[#allocation2 + $0x68] sm:$0xff] %v3438
    %3455 = vst [vmem:[#allocation2 + $0x70] sm:$0xff] %v3439
    %3456 = vst [vmem:[#allocation2 + $0x78] sm:$0xff] %v3440
    %v3457 = vlaneseq
    %v3458 = vand.u32 %v3457, 127
    %3459 = vrot.lane.b32.xlu0 %v256, 2
    %v3460 = vpop.permute.xlu0 %3459
    %vm3461 = vcmp.ne.s32.totalorder %v256, 0
    %vm3462 = vcmp.ne.s32.totalorder %v256, %v3460
    %vm3463 = vmand %vm3461, %vm3462
    %vm3464 = vcmp.ge.s32.totalorder %v3458, 2
    %vm3465 = vmand %vm3463, %vm3464
    %vm3466 = vcmp.ge.s32.totalorder %v3458, 1
    %v3467 = vld [vmem:[%s2] sm:$0xff]
    %v3468 = vld [vmem:[%s3] sm:$0xff]
    %v3469 = vld [vmem:[#allocation2] sm:$0xff]
    %vm3470 = vcmp.le.s32.totalorder %v3458, 1
    %v3471 = vsel %vm3470, %v3469, -1e+30
    %3472 = vrot.lane.b32.xlu0 %v3471, 1
    %v3473 = vpop.permute.xlu0 %3472
    %v3474 = vsel %vm3466, %v3473, -1e+30
    %3475 = vrot.lane.b32.xlu0 %v3471, 2
    %v3476 = vpop.permute.xlu0 %3475
    %v3477 = vsel %vm3465, %v3476, -1e+30
    %v3478 = vmax.f32 %v3471, %v3474
    %v3479 = vmax.f32 %v3478, %v3477
    %v3480 = vsub.f32 %v3471, %v3479
    %v3481 = vmul.f32 %v3480, 1.442695
    %v3482 = vpow.pop %v3481
    %v3483 = vsub.f32 %v3474, %v3479
    %v3484 = vmul.f32 %v3483, 1.442695
    %v3485 = vpow.pop %v3484
    %v3486 = vadd.f32 %v3482, %v3485
    %v3487 = vsub.f32 %v3477, %v3479
    %v3488 = vmul.f32 %v3487, 1.442695
    %v3489 = vpow.pop %v3488
    %v3490 = vadd.f32 %v3486, %v3489
    %s3491 = scalar_lea.vmem [#allocation2], 8
    %v3492 = vld [vmem:[%s3491] sm:$0xff]
    %v3493 = vadd.f32 %v3492, %v3479
    %v3494 = vlog2.pop %v3490
    %v3495 = vmul.f32 %v3494, 0.6931472
    %v3496 = vadd.f32 %v3493, %v3495
    %vm3497 = vcmp.gt.s32.totalorder %v3467, 1
    %v3498 = vsel %vm3497, 1, 0
    %3499 = vset.pattern.permute.xlu0 0
    %3500 = vperm.xlu0 %3499, %v3498
    %v3501 = vpop.permute.xlu0 %3500
    %vm3502 = vcmp.eq.s32.totalorder %v3501, 1
    %v3503 = vsel %vm3502, %v3496, %v3471
    %3504 = vrot.lane.b32.xlu0 %v3503, 1
    %v3505 = vpop.permute.xlu0 %3504
    %v3506 = vsel %vm3466, %v3505, -1e+30
    %3507 = vrot.lane.b32.xlu0 %v3503, 2
    %v3508 = vpop.permute.xlu0 %3507
    %v3509 = vsel %vm3465, %v3508, -1e+30
    %v3510 = vmax.f32 %v3503, %v3506
    %v3511 = vmax.f32 %v3510, %v3509
    %v3512 = vsub.f32 %v3503, %v3511
    %v3513 = vmul.f32 %v3512, 1.442695
    %v3514 = vpow.pop %v3513
    %v3515 = vsub.f32 %v3506, %v3511
    %v3516 = vmul.f32 %v3515, 1.442695
    %v3517 = vpow.pop %v3516
    %v3518 = vadd.f32 %v3514, %v3517
    %v3519 = vsub.f32 %v3509, %v3511
    %v3520 = vmul.f32 %v3519, 1.442695
    %v3521 = vpow.pop %v3520
    %v3522 = vadd.f32 %v3518, %v3521
    %s3523 = scalar_lea.vmem [#allocation2], 16
    %v3524 = vld [vmem:[%s3523] sm:$0xff]
    %v3525 = vadd.f32 %v3524, %v3511
    %v3526 = vlog2.pop %v3522
    %v3527 = vmul.f32 %v3526, 0.6931472
    %v3528 = vadd.f32 %v3525, %v3527
    %vm3529 = vcmp.gt.s32.totalorder %v3467, 2
    %v3530 = vsel %vm3529, 1, 0
    %3531 = vset.pattern.permute.xlu0 0
    %3532 = vperm.xlu0 %3531, %v3530
    %v3533 = vpop.permute.xlu0 %3532
    %vm3534 = vcmp.eq.s32.totalorder %v3533, 1
    %v3535 = vsel %vm3534, %v3528, %v3503
    %3536 = vrot.lane.b32.xlu0 %v3535, 1
    %v3537 = vpop.permute.xlu0 %3536
    %v3538 = vsel %vm3466, %v3537, -1e+30
    %3539 = vrot.lane.b32.xlu0 %v3535, 2
    %v3540 = vpop.permute.xlu0 %3539
    %v3541 = vsel %vm3465, %v3540, -1e+30
    %v3542 = vmax.f32 %v3535, %v3538
    %v3543 = vmax.f32 %v3542, %v3541
    %v3544 = vsub.f32 %v3535, %v3543
    %v3545 = vmul.f32 %v3544, 1.442695
    %v3546 = vpow.pop %v3545
    %v3547 = vsub.f32 %v3538, %v3543
    %v3548 = vmul.f32 %v3547, 1.442695
    %v3549 = vpow.pop %v3548
    %v3550 = vadd.f32 %v3546, %v3549
    %v3551 = vsub.f32 %v3541, %v3543
    %v3552 = vmul.f32 %v3551, 1.442695
    %v3553 = vpow.pop %v3552
    %v3554 = vadd.f32 %v3550, %v3553
    %s3555 = scalar_lea.vmem [#allocation2], 24
    %v3556 = vld [vmem:[%s3555] sm:$0xff]
    %v3557 = vadd.f32 %v3556, %v3543
    %v3558 = vlog2.pop %v3554
    %v3559 = vmul.f32 %v3558, 0.6931472
    %v3560 = vadd.f32 %v3557, %v3559
    %vm3561 = vcmp.gt.s32.totalorder %v3467, 3
    %v3562 = vsel %vm3561, 1, 0
    %3563 = vset.pattern.permute.xlu0 0
    %3564 = vperm.xlu0 %3563, %v3562
    %v3565 = vpop.permute.xlu0 %3564
    %vm3566 = vcmp.eq.s32.totalorder %v3565, 1
    %v3567 = vsel %vm3566, %v3560, %v3535
    %3568 = vrot.lane.b32.xlu0 %v3567, 1
    %v3569 = vpop.permute.xlu0 %3568
    %v3570 = vsel %vm3466, %v3569, -1e+30
    %3571 = vrot.lane.b32.xlu0 %v3567, 2
    %v3572 = vpop.permute.xlu0 %3571
    %v3573 = vsel %vm3465, %v3572, -1e+30
    %v3574 = vmax.f32 %v3567, %v3570
    %v3575 = vmax.f32 %v3574, %v3573
    %v3576 = vsub.f32 %v3567, %v3575
    %v3577 = vmul.f32 %v3576, 1.442695
    %v3578 = vpow.pop %v3577
    %v3579 = vsub.f32 %v3570, %v3575
    %v3580 = vmul.f32 %v3579, 1.442695
    %v3581 = vpow.pop %v3580
    %v3582 = vadd.f32 %v3578, %v3581
    %v3583 = vsub.f32 %v3573, %v3575
    %v3584 = vmul.f32 %v3583, 1.442695
    %v3585 = vpow.pop %v3584
    %v3586 = vadd.f32 %v3582, %v3585
    %s3587 = scalar_lea.vmem [#allocation2], 32
    %v3588 = vld [vmem:[%s3587] sm:$0xff]
    %v3589 = vadd.f32 %v3588, %v3575
    %v3590 = vlog2.pop %v3586
    %v3591 = vmul.f32 %v3590, 0.6931472
    %v3592 = vadd.f32 %v3589, %v3591
    %vm3593 = vcmp.gt.s32.totalorder %v3467, 4
    %v3594 = vsel %vm3593, 1, 0
    %3595 = vset.pattern.permute.xlu0 0
    %3596 = vperm.xlu0 %3595, %v3594
    %v3597 = vpop.permute.xlu0 %3596
    %vm3598 = vcmp.eq.s32.totalorder %v3597, 1
    %v3599 = vsel %vm3598, %v3592, %v3567
    %3600 = vrot.lane.b32.xlu0 %v3599, 1
    %v3601 = vpop.permute.xlu0 %3600
    %v3602 = vsel %vm3466, %v3601, -1e+30
    %3603 = vrot.lane.b32.xlu0 %v3599, 2
    %v3604 = vpop.permute.xlu0 %3603
    %v3605 = vsel %vm3465, %v3604, -1e+30
    %v3606 = vmax.f32 %v3599, %v3602
    %v3607 = vmax.f32 %v3606, %v3605
    %v3608 = vsub.f32 %v3599, %v3607
    %v3609 = vmul.f32 %v3608, 1.442695
    %v3610 = vpow.pop %v3609
    %v3611 = vsub.f32 %v3602, %v3607
    %v3612 = vmul.f32 %v3611, 1.442695
    %v3613 = vpow.pop %v3612
    %v3614 = vadd.f32 %v3610, %v3613
    %v3615 = vsub.f32 %v3605, %v3607
    %v3616 = vmul.f32 %v3615, 1.442695
    %v3617 = vpow.pop %v3616
    %v3618 = vadd.f32 %v3614, %v3617
    %s3619 = scalar_lea.vmem [#allocation2], 40
    %v3620 = vld [vmem:[%s3619] sm:$0xff]
    %v3621 = vadd.f32 %v3620, %v3607
    %v3622 = vlog2.pop %v3618
    %v3623 = vmul.f32 %v3622, 0.6931472
    %v3624 = vadd.f32 %v3621, %v3623
    %vm3625 = vcmp.gt.s32.totalorder %v3467, 5
    %v3626 = vsel %vm3625, 1, 0
    %3627 = vset.pattern.permute.xlu0 0
    %3628 = vperm.xlu0 %3627, %v3626
    %v3629 = vpop.permute.xlu0 %3628
    %vm3630 = vcmp.eq.s32.totalorder %v3629, 1
    %v3631 = vsel %vm3630, %v3624, %v3599
    %3632 = vrot.lane.b32.xlu0 %v3631, 1
    %v3633 = vpop.permute.xlu0 %3632
    %v3634 = vsel %vm3466, %v3633, -1e+30
    %3635 = vrot.lane.b32.xlu0 %v3631, 2
    %v3636 = vpop.permute.xlu0 %3635
    %v3637 = vsel %vm3465, %v3636, -1e+30
    %v3638 = vmax.f32 %v3631, %v3634
    %v3639 = vmax.f32 %v3638, %v3637
    %v3640 = vsub.f32 %v3631, %v3639
    %v3641 = vmul.f32 %v3640, 1.442695
    %v3642 = vpow.pop %v3641
    %v3643 = vsub.f32 %v3634, %v3639
    %v3644 = vmul.f32 %v3643, 1.442695
    %v3645 = vpow.pop %v3644
    %v3646 = vadd.f32 %v3642, %v3645
    %v3647 = vsub.f32 %v3637, %v3639
    %v3648 = vmul.f32 %v3647, 1.442695
    %v3649 = vpow.pop %v3648
    %v3650 = vadd.f32 %v3646, %v3649
    %s3651 = scalar_lea.vmem [#allocation2], 48
    %v3652 = vld [vmem:[%s3651] sm:$0xff]
    %v3653 = vadd.f32 %v3652, %v3639
    %v3654 = vlog2.pop %v3650
    %v3655 = vmul.f32 %v3654, 0.6931472
    %v3656 = vadd.f32 %v3653, %v3655
    %vm3657 = vcmp.gt.s32.totalorder %v3467, 6
    %v3658 = vsel %vm3657, 1, 0
    %3659 = vset.pattern.permute.xlu0 0
    %3660 = vperm.xlu0 %3659, %v3658
    %v3661 = vpop.permute.xlu0 %3660
    %vm3662 = vcmp.eq.s32.totalorder %v3661, 1
    %v3663 = vsel %vm3662, %v3656, %v3631
    %3664 = vrot.lane.b32.xlu0 %v3663, 1
    %v3665 = vpop.permute.xlu0 %3664
    %v3666 = vsel %vm3466, %v3665, -1e+30
    %3667 = vrot.lane.b32.xlu0 %v3663, 2
    %v3668 = vpop.permute.xlu0 %3667
    %v3669 = vsel %vm3465, %v3668, -1e+30
    %v3670 = vmax.f32 %v3663, %v3666
    %v3671 = vmax.f32 %v3670, %v3669
    %v3672 = vsub.f32 %v3663, %v3671
    %v3673 = vmul.f32 %v3672, 1.442695
    %v3674 = vpow.pop %v3673
    %v3675 = vsub.f32 %v3666, %v3671
    %v3676 = vmul.f32 %v3675, 1.442695
    %v3677 = vpow.pop %v3676
    %v3678 = vadd.f32 %v3674, %v3677
    %v3679 = vsub.f32 %v3669, %v3671
    %v3680 = vmul.f32 %v3679, 1.442695
    %v3681 = vpow.pop %v3680
    %v3682 = vadd.f32 %v3678, %v3681
    %s3683 = scalar_lea.vmem [#allocation2], 56
    %v3684 = vld [vmem:[%s3683] sm:$0xff]
    %v3685 = vadd.f32 %v3684, %v3671
    %v3686 = vlog2.pop %v3682
    %v3687 = vmul.f32 %v3686, 0.6931472
    %v3688 = vadd.f32 %v3685, %v3687
    %vm3689 = vcmp.gt.s32.totalorder %v3467, 7
    %v3690 = vsel %vm3689, 1, 0
    %3691 = vset.pattern.permute.xlu0 0
    %3692 = vperm.xlu0 %3691, %v3690
    %v3693 = vpop.permute.xlu0 %3692
    %vm3694 = vcmp.eq.s32.totalorder %v3693, 1
    %v3695 = vsel %vm3694, %v3688, %v3663
    %3696 = vrot.lane.b32.xlu0 %v3695, 1
    %v3697 = vpop.permute.xlu0 %3696
    %v3698 = vsel %vm3466, %v3697, -1e+30
    %3699 = vrot.lane.b32.xlu0 %v3695, 2
    %v3700 = vpop.permute.xlu0 %3699
    %v3701 = vsel %vm3465, %v3700, -1e+30
    %v3702 = vmax.f32 %v3695, %v3698
    %v3703 = vmax.f32 %v3702, %v3701
    %v3704 = vsub.f32 %v3695, %v3703
    %v3705 = vmul.f32 %v3704, 1.442695
    %v3706 = vpow.pop %v3705
    %v3707 = vsub.f32 %v3698, %v3703
    %v3708 = vmul.f32 %v3707, 1.442695
    %v3709 = vpow.pop %v3708
    %v3710 = vadd.f32 %v3706, %v3709
    %v3711 = vsub.f32 %v3701, %v3703
    %v3712 = vmul.f32 %v3711, 1.442695
    %v3713 = vpow.pop %v3712
    %v3714 = vadd.f32 %v3710, %v3713
    %s3715 = scalar_lea.vmem [#allocation2], 64
    %v3716 = vld [vmem:[%s3715] sm:$0xff]
    %v3717 = vadd.f32 %v3716, %v3703
    %v3718 = vlog2.pop %v3714
    %v3719 = vmul.f32 %v3718, 0.6931472
    %v3720 = vadd.f32 %v3717, %v3719
    %vm3721 = vcmp.gt.s32.totalorder %v3467, 8
    %v3722 = vsel %vm3721, 1, 0
    %3723 = vset.pattern.permute.xlu0 0
    %3724 = vperm.xlu0 %3723, %v3722
    %v3725 = vpop.permute.xlu0 %3724
    %vm3726 = vcmp.eq.s32.totalorder %v3725, 1
    %v3727 = vsel %vm3726, %v3720, %v3695
    %3728 = vrot.lane.b32.xlu0 %v3727, 1
    %v3729 = vpop.permute.xlu0 %3728
    %v3730 = vsel %vm3466, %v3729, -1e+30
    %3731 = vrot.lane.b32.xlu0 %v3727, 2
    %v3732 = vpop.permute.xlu0 %3731
    %v3733 = vsel %vm3465, %v3732, -1e+30
    %v3734 = vmax.f32 %v3727, %v3730
    %v3735 = vmax.f32 %v3734, %v3733
    %v3736 = vsub.f32 %v3727, %v3735
    %v3737 = vmul.f32 %v3736, 1.442695
    %v3738 = vpow.pop %v3737
    %v3739 = vsub.f32 %v3730, %v3735
    %v3740 = vmul.f32 %v3739, 1.442695
    %v3741 = vpow.pop %v3740
    %v3742 = vadd.f32 %v3738, %v3741
    %v3743 = vsub.f32 %v3733, %v3735
    %v3744 = vmul.f32 %v3743, 1.442695
    %v3745 = vpow.pop %v3744
    %v3746 = vadd.f32 %v3742, %v3745
    %s3747 = scalar_lea.vmem [#allocation2], 72
    %v3748 = vld [vmem:[%s3747] sm:$0xff]
    %v3749 = vadd.f32 %v3748, %v3735
    %v3750 = vlog2.pop %v3746
    %v3751 = vmul.f32 %v3750, 0.6931472
    %v3752 = vadd.f32 %v3749, %v3751
    %vm3753 = vcmp.gt.s32.totalorder %v3467, 9
    %v3754 = vsel %vm3753, 1, 0
    %3755 = vset.pattern.permute.xlu0 0
    %3756 = vperm.xlu0 %3755, %v3754
    %v3757 = vpop.permute.xlu0 %3756
    %vm3758 = vcmp.eq.s32.totalorder %v3757, 1
    %v3759 = vsel %vm3758, %v3752, %v3727
    %3760 = vrot.lane.b32.xlu0 %v3759, 1
    %v3761 = vpop.permute.xlu0 %3760
    %v3762 = vsel %vm3466, %v3761, -1e+30
    %3763 = vrot.lane.b32.xlu0 %v3759, 2
    %v3764 = vpop.permute.xlu0 %3763
    %v3765 = vsel %vm3465, %v3764, -1e+30
    %v3766 = vmax.f32 %v3759, %v3762
    %v3767 = vmax.f32 %v3766, %v3765
    %v3768 = vsub.f32 %v3759, %v3767
    %v3769 = vmul.f32 %v3768, 1.442695
    %v3770 = vpow.pop %v3769
    %v3771 = vsub.f32 %v3762, %v3767
    %v3772 = vmul.f32 %v3771, 1.442695
    %v3773 = vpow.pop %v3772
    %v3774 = vadd.f32 %v3770, %v3773
    %v3775 = vsub.f32 %v3765, %v3767
    %v3776 = vmul.f32 %v3775, 1.442695
    %v3777 = vpow.pop %v3776
    %v3778 = vadd.f32 %v3774, %v3777
    %s3779 = scalar_lea.vmem [#allocation2], 80
    %v3780 = vld [vmem:[%s3779] sm:$0xff]
    %v3781 = vadd.f32 %v3780, %v3767
    %v3782 = vlog2.pop %v3778
    %v3783 = vmul.f32 %v3782, 0.6931472
    %v3784 = vadd.f32 %v3781, %v3783
    %vm3785 = vcmp.gt.s32.totalorder %v3467, 10
    %v3786 = vsel %vm3785, 1, 0
    %3787 = vset.pattern.permute.xlu0 0
    %3788 = vperm.xlu0 %3787, %v3786
    %v3789 = vpop.permute.xlu0 %3788
    %vm3790 = vcmp.eq.s32.totalorder %v3789, 1
    %v3791 = vsel %vm3790, %v3784, %v3759
    %3792 = vrot.lane.b32.xlu0 %v3791, 1
    %v3793 = vpop.permute.xlu0 %3792
    %v3794 = vsel %vm3466, %v3793, -1e+30
    %3795 = vrot.lane.b32.xlu0 %v3791, 2
    %v3796 = vpop.permute.xlu0 %3795
    %v3797 = vsel %vm3465, %v3796, -1e+30
    %v3798 = vmax.f32 %v3791, %v3794
    %v3799 = vmax.f32 %v3798, %v3797
    %v3800 = vsub.f32 %v3791, %v3799
    %v3801 = vmul.f32 %v3800, 1.442695
    %v3802 = vpow.pop %v3801
    %v3803 = vsub.f32 %v3794, %v3799
    %v3804 = vmul.f32 %v3803, 1.442695
    %v3805 = vpow.pop %v3804
    %v3806 = vadd.f32 %v3802, %v3805
    %v3807 = vsub.f32 %v3797, %v3799
    %v3808 = vmul.f32 %v3807, 1.442695
    %v3809 = vpow.pop %v3808
    %v3810 = vadd.f32 %v3806, %v3809
    %s3811 = scalar_lea.vmem [#allocation2], 88
    %v3812 = vld [vmem:[%s3811] sm:$0xff]
    %v3813 = vadd.f32 %v3812, %v3799
    %v3814 = vlog2.pop %v3810
    %v3815 = vmul.f32 %v3814, 0.6931472
    %v3816 = vadd.f32 %v3813, %v3815
    %vm3817 = vcmp.gt.s32.totalorder %v3467, 11
    %v3818 = vsel %vm3817, 1, 0
    %3819 = vset.pattern.permute.xlu0 0
    %3820 = vperm.xlu0 %3819, %v3818
    %v3821 = vpop.permute.xlu0 %3820
    %vm3822 = vcmp.eq.s32.totalorder %v3821, 1
    %v3823 = vsel %vm3822, %v3816, %v3791
    %3824 = vrot.lane.b32.xlu0 %v3823, 1
    %v3825 = vpop.permute.xlu0 %3824
    %v3826 = vsel %vm3466, %v3825, -1e+30
    %3827 = vrot.lane.b32.xlu0 %v3823, 2
    %v3828 = vpop.permute.xlu0 %3827
    %v3829 = vsel %vm3465, %v3828, -1e+30
    %v3830 = vmax.f32 %v3823, %v3826
    %v3831 = vmax.f32 %v3830, %v3829
    %v3832 = vsub.f32 %v3823, %v3831
    %v3833 = vmul.f32 %v3832, 1.442695
    %v3834 = vpow.pop %v3833
    %v3835 = vsub.f32 %v3826, %v3831
    %v3836 = vmul.f32 %v3835, 1.442695
    %v3837 = vpow.pop %v3836
    %v3838 = vadd.f32 %v3834, %v3837
    %v3839 = vsub.f32 %v3829, %v3831
    %v3840 = vmul.f32 %v3839, 1.442695
    %v3841 = vpow.pop %v3840
    %v3842 = vadd.f32 %v3838, %v3841
    %s3843 = scalar_lea.vmem [#allocation2], 96
    %v3844 = vld [vmem:[%s3843] sm:$0xff]
    %v3845 = vadd.f32 %v3844, %v3831
    %v3846 = vlog2.pop %v3842
    %v3847 = vmul.f32 %v3846, 0.6931472
    %v3848 = vadd.f32 %v3845, %v3847
    %vm3849 = vcmp.gt.s32.totalorder %v3467, 12
    %v3850 = vsel %vm3849, 1, 0
    %3851 = vset.pattern.permute.xlu0 0
    %3852 = vperm.xlu0 %3851, %v3850
    %v3853 = vpop.permute.xlu0 %3852
    %vm3854 = vcmp.eq.s32.totalorder %v3853, 1
    %v3855 = vsel %vm3854, %v3848, %v3823
    %3856 = vrot.lane.b32.xlu0 %v3855, 1
    %v3857 = vpop.permute.xlu0 %3856
    %v3858 = vsel %vm3466, %v3857, -1e+30
    %3859 = vrot.lane.b32.xlu0 %v3855, 2
    %v3860 = vpop.permute.xlu0 %3859
    %v3861 = vsel %vm3465, %v3860, -1e+30
    %v3862 = vmax.f32 %v3855, %v3858
    %v3863 = vmax.f32 %v3862, %v3861
    %v3864 = vsub.f32 %v3855, %v3863
    %v3865 = vmul.f32 %v3864, 1.442695
    %v3866 = vpow.pop %v3865
    %v3867 = vsub.f32 %v3858, %v3863
    %v3868 = vmul.f32 %v3867, 1.442695
    %v3869 = vpow.pop %v3868
    %v3870 = vadd.f32 %v3866, %v3869
    %v3871 = vsub.f32 %v3861, %v3863
    %v3872 = vmul.f32 %v3871, 1.442695
    %v3873 = vpow.pop %v3872
    %v3874 = vadd.f32 %v3870, %v3873
    %s3875 = scalar_lea.vmem [#allocation2], 104
    %v3876 = vld [vmem:[%s3875] sm:$0xff]
    %v3877 = vadd.f32 %v3876, %v3863
    %v3878 = vlog2.pop %v3874
    %v3879 = vmul.f32 %v3878, 0.6931472
    %v3880 = vadd.f32 %v3877, %v3879
    %vm3881 = vcmp.gt.s32.totalorder %v3467, 13
    %v3882 = vsel %vm3881, 1, 0
    %3883 = vset.pattern.permute.xlu0 0
    %3884 = vperm.xlu0 %3883, %v3882
    %v3885 = vpop.permute.xlu0 %3884
    %vm3886 = vcmp.eq.s32.totalorder %v3885, 1
    %v3887 = vsel %vm3886, %v3880, %v3855
    %3888 = vrot.lane.b32.xlu0 %v3887, 1
    %v3889 = vpop.permute.xlu0 %3888
    %v3890 = vsel %vm3466, %v3889, -1e+30
    %3891 = vrot.lane.b32.xlu0 %v3887, 2
    %v3892 = vpop.permute.xlu0 %3891
    %v3893 = vsel %vm3465, %v3892, -1e+30
    %v3894 = vmax.f32 %v3887, %v3890
    %v3895 = vmax.f32 %v3894, %v3893
    %v3896 = vsub.f32 %v3887, %v3895
    %v3897 = vmul.f32 %v3896, 1.442695
    %v3898 = vpow.pop %v3897
    %v3899 = vsub.f32 %v3890, %v3895
    %v3900 = vmul.f32 %v3899, 1.442695
    %v3901 = vpow.pop %v3900
    %v3902 = vadd.f32 %v3898, %v3901
    %v3903 = vsub.f32 %v3893, %v3895
    %v3904 = vmul.f32 %v3903, 1.442695
    %v3905 = vpow.pop %v3904
    %v3906 = vadd.f32 %v3902, %v3905
    %s3907 = scalar_lea.vmem [#allocation2], 112
    %v3908 = vld [vmem:[%s3907] sm:$0xff]
    %v3909 = vadd.f32 %v3908, %v3895
    %v3910 = vlog2.pop %v3906
    %v3911 = vmul.f32 %v3910, 0.6931472
    %v3912 = vadd.f32 %v3909, %v3911
    %vm3913 = vcmp.gt.s32.totalorder %v3467, 14
    %v3914 = vsel %vm3913, 1, 0
    %3915 = vset.pattern.permute.xlu0 0
    %3916 = vperm.xlu0 %3915, %v3914
    %v3917 = vpop.permute.xlu0 %3916
    %vm3918 = vcmp.eq.s32.totalorder %v3917, 1
    %v3919 = vsel %vm3918, %v3912, %v3887
    %3920 = vrot.lane.b32.xlu0 %v3919, 1
    %v3921 = vpop.permute.xlu0 %3920
    %v3922 = vsel %vm3466, %v3921, -1e+30
    %3923 = vrot.lane.b32.xlu0 %v3919, 2
    %v3924 = vpop.permute.xlu0 %3923
    %v3925 = vsel %vm3465, %v3924, -1e+30
    %v3926 = vmax.f32 %v3919, %v3922
    %v3927 = vmax.f32 %v3926, %v3925
    %v3928 = vsub.f32 %v3919, %v3927
    %v3929 = vmul.f32 %v3928, 1.442695
    %v3930 = vpow.pop %v3929
    %v3931 = vsub.f32 %v3922, %v3927
    %v3932 = vmul.f32 %v3931, 1.442695
    %v3933 = vpow.pop %v3932
    %v3934 = vadd.f32 %v3930, %v3933
    %v3935 = vsub.f32 %v3925, %v3927
    %v3936 = vmul.f32 %v3935, 1.442695
    %v3937 = vpow.pop %v3936
    %v3938 = vadd.f32 %v3934, %v3937
    %s3939 = scalar_lea.vmem [#allocation2], 120
    %v3940 = vld [vmem:[%s3939] sm:$0xff]
    %v3941 = vadd.f32 %v3940, %v3927
    %v3942 = vlog2.pop %v3938
    %v3943 = vmul.f32 %v3942, 0.6931472
    %v3944 = vadd.f32 %v3941, %v3943
    %vm3945 = vcmp.gt.s32.totalorder %v3467, 15
    %v3946 = vsel %vm3945, 1, 0
    %3947 = vset.pattern.permute.xlu0 0
    %3948 = vperm.xlu0 %3947, %v3946
    %v3949 = vpop.permute.xlu0 %3948
    %vm3950 = vcmp.eq.s32.totalorder %v3949, 1
    %v3951 = vsel %vm3950, %v3944, %v3919
    %v3952 = vmul.u32 %v3468, 2
    %v3953 = vadd.s32 %v3952, 1
    %3954 = vset.pattern.permute.xlu0 0
    %3955 = vperm.xlu0 %3954, %v3952
    %v3956 = vpop.permute.xlu0 %3955
    %vm3957 = vcmp.eq.s32.totalorder %v3458, %v3956
    %v3958 = vsub.s32 %v3953, 2
    %3959 = vset.pattern.permute.xlu0 0
    %3960 = vperm.xlu0 %3959, %v3958
    %v3961 = vpop.permute.xlu0 %3960
    %vm3962 = vcmp.eq.s32.totalorder %v3458, %v3961
    %vm3963 = vmor %vm3957, %vm3962
    %v3964 = vsel %vm3963, %v3951, -1e+30
    %3965 = vmax.xlane.f32.xlu0 %v3964
    %v3966 = vpop.xlane.xlu0 %3965
    %v3967 = vsub.f32 %v3964, %v3966
    %v3968 = vmul.f32 %v3967, 1.442695
    %v3969 = vpow.pop %v3968
    %3970 = vadd.xlane.f32.xlu0 %v3969
    %v3971 = vpop.xlane.xlu0 %3970
    %v3972 = vlog2.pop %v3971
    %v3973 = vmul.f32 %v3972, 0.6931472
    %v3974 = vadd.f32 %v3966, %v3973
    %v3975 = vsub.f32 0.0, %v3974
    %vm3976 = vcmp.gt.s32.totalorder %v3468, 1
    %v3977 = vsel %vm3976, %v3468, 1
    %v3978 = vcvt.s32.f32 %v3977
    %vm3979 = vcmp.gt.f32.partialorder %v3975, 1e+29
    %v3980 = vsel %vm3979, 0.0, %v3975
    %v3981 = vrcp.pop %v3978
    %v3982 = vmul.f32 %v3980, %v3981
    %vm3983 = vcmask 7168
    %3984 = vst.msk [vmem:[%s4] sm:$0xff] %vm3983, %v3982
    // Predicated region
    $region22: #{_ctc_per_sample.1} parent=1 // pred_check
      _
    $region23: #{_ctc_per_sample.1} parent=1 // pred_check_branch
      %3986 = sbr.rel (0) target = $region25
    $region24: #{_ctc_per_sample.1} parent=1 // pred_region
      _
    $region25: #{_ctc_per_sample.1} parent=1 // pred_fallthru
      _
    // Predicated region
    $region26: #{_ctc_per_sample.1} parent=1 // pred_check
      _
    $region27: #{_ctc_per_sample.1} parent=1 // pred_check_branch
      %3988 = sbr.rel (0) target = $region29
    $region28: #{_ctc_per_sample.1} parent=1 // pred_region
      _
    $region29: #{_ctc_per_sample.1} parent=1 // pred_fallthru
      _
    %3989 = vsyncpa [#allocation4], 1

</llo_original>
